<compile_context>
chip_gen: v6e
topology: v6e:2x2x1
jax: 0.10.0
libtpu: 0.0.40
codegen_flags: <defaults>
</compile_context>

<pallas_src>
import inspect
import math
from functools import partial

import jax
import jax.numpy as jnp
from jax.experimental import pallas as pl
from jax.experimental.pallas import tpu as pltpu

EPS = 1e-5          # nn.LayerNorm default eps
NEG = -1.0e30       # finite "-inf" (avoids inf-inf NaNs in the online softmax)

# Single-buffering of resident weight blocks (feature-detected for older JAX).
_HAS_SINGLE_BUFFER = (
    hasattr(pl, "Buffered")
    and "pipeline_mode" in inspect.signature(pl.BlockSpec).parameters
)


def _round_up(x, m):
    return ((x + m - 1) // m) * m


def _erf(x):
    # Abramowitz & Stegun 7.1.26 rational approximation (max abs err ~1.5e-7, i.e. f32
    # precision), built only from exp which Mosaic lowers.
    # TODO(synk): use lax.erf directly if/when Mosaic lowers erf on TPU.
    p = 0.3275911
    a1, a2, a3, a4, a5 = 0.254829592, -0.284496736, 1.421413741, -1.453152027, 1.061405429
    sgn = jnp.where(x >= 0, 1.0, -1.0)
    a = jnp.abs(x)
    t = 1.0 / (1.0 + p * a)
    poly = ((((a5 * t + a4) * t + a3) * t + a2) * t + a1) * t
    return sgn * (1.0 - poly * jnp.exp(-a * a))


def _gelu_exact(x):
    # torch nn.GELU default ("exact" erf-based gelu)
    return 0.5 * x * (1.0 + _erf(x * (1.0 / math.sqrt(2.0))))


def _layernorm(x, w, b):
    mu = jnp.mean(x, axis=-1, keepdims=True)
    xc = x - mu
    var = jnp.mean(xc * xc, axis=-1, keepdims=True)
    return xc * jax.lax.rsqrt(var + EPS) * w + b     # rsqrt -> EUP slot


def _attentive_classifier_kernel(
    x_ref, cls_ref,
    n1w_ref, n1b_ref, ws_ref, bs_ref,
    wvh_ref, bv_ref, wp_ref, bp_ref, q0_ref,
    n2w_ref, n2b_ref, w1_ref, b1_ref, w2_ref, b2_ref,
    wlp_ref, wlc_ref, bl_ref,
    out_ref,
    m_s, l_s, y_s,
    *, num_heads, n_valid, n_padded,
):
    f32, bf16 = jnp.float32, jnp.bfloat16
    TB, TN, D = x_ref.shape
    Hp = ws_ref.shape[1]                      # num_heads padded up to a multiple of 8
    n_i = pl.program_id(1)
    n_last = pl.num_programs(1) - 1

    # ---- online-softmax accumulator init (first N tile of this batch tile) ----
    @pl.when(n_i == 0)
    def _():
        m_s[...] = jnp.full(m_s.shape, NEG, m_s.dtype)
        l_s[...] = jnp.zeros(l_s.shape, l_s.dtype)
        y_s[...] = jnp.zeros(y_s.shape, y_s.dtype)

    # ---- streamed x tile: LayerNorm (f32 stats) + folded per-head scores -------
    xt = x_ref[...].astype(f32)                                        # (TB, TN, D)
    xn = _layernorm(xt, n1w_ref[...], n1b_ref[...]).astype(bf16)
    s = jnp.dot(xn.reshape(TB * TN, D), ws_ref[...],
                preferred_element_type=f32) + bs_ref[...]              # (TB*TN, Hp)
    s = jnp.swapaxes(s.reshape(TB, TN, Hp), 1, 2)                      # (TB, Hp, TN): N on lanes
    if n_valid != n_padded:                                            # static: mask padded tokens
        tok = n_i * TN + jax.lax.broadcasted_iota(jnp.int32, s.shape, 2)
        s = jnp.where(tok < n_valid, s, NEG)

    # ---- online softmax + softmax-weighted token accumulation ------------------
    m_prev = m_s[...]
    m_new = jnp.maximum(m_prev, jnp.max(s, axis=-1))                   # (TB, Hp) lane reduce
    alpha = jnp.exp(m_prev - m_new)
    p = jnp.exp(s - m_new[:, :, None])                                 # (TB, Hp, TN)
    l_s[...] = alpha * l_s[...] + jnp.sum(p, axis=-1)
    y_s[...] = alpha[:, :, None] * y_s[...] + jnp.einsum(
        "bhn,bnd->bhd", p.astype(bf16), xn, preferred_element_type=f32)
    m_s[...] = m_new

    # ---- finalize on the last N tile -------------------------------------------
    @pl.when(n_i == n_last)
    def _():
        hd = D // num_heads
        inv_l = pl.reciprocal(l_s[...], approx=True)                   # EUP
        y = y_s[...] * inv_l[:, :, None]                               # (TB, Hp, D)

        # V projection on the already-softmax-pooled tokens: H small dots (hd=128 at real dims).
        parts = [
            jnp.dot(y[:, h, :].astype(bf16), wvh_ref[h], preferred_element_type=f32)
            for h in range(num_heads)
        ]
        o = jnp.concatenate(parts, axis=-1) + bv_ref[...]              # + b_v since sum_n p == 1
        o = jnp.dot(o.astype(bf16), wp_ref[...], preferred_element_type=f32) + bp_ref[...]
        q1 = q0_ref[...] + o                                           # residual 1

        # MLP residual: q2 = q1 + fc2(gelu(fc1(LN(q1))))
        qn = _layernorm(q1, n2w_ref[...], n2b_ref[...])
        h1 = jnp.dot(qn.astype(bf16), w1_ref[...], preferred_element_type=f32) + b1_ref[...]
        h2 = jnp.dot(_gelu_exact(h1).astype(bf16), w2_ref[...],
                     preferred_element_type=f32) + b2_ref[...]
        pooled = q1 + h2                                               # (TB, D)

        # Classifier head on [pooled ; class_token] (split weight; lane-dense padded C).
        out_ref[...] = (
            jnp.dot(pooled.astype(bf16), wlp_ref[...], preferred_element_type=f32)
            + jnp.dot(cls_ref[...].astype(bf16), wlc_ref[...], preferred_element_type=f32)
            + bl_ref[...])


def prepare_params(params, num_heads):
    """One-time kernel-ready weight prep, hoisted OUT of the per-call hot path:
    query/scale/head-selector folded into the K weight, per-head V regroup, bf16 casts,
    class-dim padding to a lane-dense multiple of 128."""
    f32, bf16 = jnp.float32, jnp.bfloat16
    D = params["w_q"].shape[0]
    assert D % num_heads == 0
    hd = D // num_heads
    Hp = _round_up(num_heads, 8)
    C = params["w_lin"].shape[1]
    C_pad = _round_up(C, 128)

    # Batch-invariant query projection, pre-scaled by 1/sqrt(head_dim).
    qp = (params["query"] @ params["w_q"] + params["b_q"]) * (1.0 / math.sqrt(hd))  # (1, D)
    head_id = jnp.arange(D, dtype=jnp.int32) // hd
    hsum = (head_id[:, None] == jnp.arange(Hp, dtype=jnp.int32)[None, :]).astype(f32)  # (D, Hp)
    w_s = params["w_k"] @ (qp[0][:, None] * hsum)          # (D, Hp): folded K/query/scale
    b_s = (params["b_k"] * qp) @ hsum                      # (1, Hp)

    # V weight regrouped per head: wvh[h, i, j] = w_v[i, h*hd + j]
    w_v_heads = jnp.transpose(params["w_v"].reshape(D, num_heads, hd), (1, 0, 2))

    w_lin = jnp.pad(params["w_lin"], ((0, 0), (0, C_pad - C)))
    b_lin = jnp.pad(params["b_lin"], ((0, 0), (0, C_pad - C)))

    return {
        "n1_w": params["n1_w"], "n1_b": params["n1_b"],
        "w_s": w_s.astype(bf16), "b_s": b_s,
        "w_v_heads": w_v_heads.astype(bf16), "b_v": params["b_v"],
        "w_proj": params["w_proj"].astype(bf16), "b_proj": params["b_proj"],
        "query": params["query"],
        "n2_w": params["n2_w"], "n2_b": params["n2_b"],
        "w_fc1": params["w_fc1"].astype(bf16), "b_fc1": params["b_fc1"],
        "w_fc2": params["w_fc2"].astype(bf16), "b_fc2": params["b_fc2"],
        "w_lin_p": w_lin[:D].astype(bf16), "w_lin_c": w_lin[D:].astype(bf16),
        "b_lin": b_lin,
    }


@partial(jax.jit, static_argnames=("num_heads", "num_classes", "batch_tile", "n_tile"))
def attentive_classifier(patch_tokens, class_token, prep, *, num_heads, num_classes,
                         batch_tile=128, n_tile=512):
    B, N, D = patch_tokens.shape
    Hp = prep["w_s"].shape[1]
    C_pad = prep["b_lin"].shape[1]

    # --- batch tiling: always >= 2 grid steps so v7x's second TensorCore gets work ---
    if B > batch_tile:
        TB = batch_tile
        nb = -(-B // TB)
    else:
        TB = max(8, _round_up(-(-B // 2), 8))
        nb = 2
    B_pad = nb * TB
    # TODO(synk): on v6e, raise batch_tile to 256 once profiles confirm VMEM headroom.

    # --- N tiling: online softmax inside the kernel bounds the per-step live set ---
    if N <= n_tile:
        TN, N_pad = N, N
    else:
        assert n_tile % 16 == 0, "n_tile must be a multiple of 16 (bf16 sublane tile)"
        TN, N_pad = n_tile, _round_up(N, n_tile)
    nn = N_pad // TN

    # --- stream patch tokens in bf16 (halves HBM traffic + halves the x VMEM block) ---
    x = patch_tokens.astype(jnp.bfloat16)
    x = jnp.pad(x, ((0, B_pad - B), (0, N_pad - N), (0, 0)))
    cls = jnp.pad(class_token, ((0, B_pad - B), (0, 0)))

    weight_args = (
        prep["n1_w"], prep["n1_b"], prep["w_s"], prep["b_s"],
        prep["w_v_heads"], prep["b_v"], prep["w_proj"], prep["b_proj"], prep["query"],
        prep["n2_w"], prep["n2_b"],
        prep["w_fc1"], prep["b_fc1"], prep["w_fc2"], prep["b_fc2"],
        prep["w_lin_p"], prep["w_lin_c"], prep["b_lin"],
    )

    def weight_spec(arr):
        nd = arr.ndim
        idx = lambda b, n, _nd=nd: (0,) * _nd
        if _HAS_SINGLE_BUFFER:
            # Constant block index -> never re-fetched; single-buffer to save VMEM.
            return pl.BlockSpec(arr.shape, idx, pipeline_mode=pl.Buffered(1))
        return pl.BlockSpec(arr.shape, idx)

    in_specs = [
        pl.BlockSpec((TB, TN, D), lambda b, n: (b, n, 0)),
        pl.BlockSpec((TB, D), lambda b, n: (b, 0)),
    ] + [weight_spec(a) for a in weight_args]

    # Scoped VMEM limit ~ half the detected physical VMEM (<= 64 MiB): ~32 MiB on v7x.
    try:
        vmem_phys = pltpu.get_tpu_info().vmem_capacity_bytes
    except Exception:
        vmem_phys = 64 * 1024 * 1024
    vmem_limit = int(min(vmem_phys // 2, 64 * 1024 * 1024))

    kernel = partial(_attentive_classifier_kernel,
                     num_heads=num_heads, n_valid=N, n_padded=N_pad)

    out = pl.pallas_call(
        kernel,
        out_shape=jax.ShapeDtypeStruct((B_pad, C_pad), jnp.float32),
        grid=(nb, nn),
        in_specs=in_specs,
        out_specs=pl.BlockSpec((TB, C_pad), lambda b, n: (b, 0)),
        scratch_shapes=[
            pltpu.VMEM((TB, Hp), jnp.float32),      # running softmax max m
            pltpu.VMEM((TB, Hp), jnp.float32),      # running softmax denom l
            pltpu.VMEM((TB, Hp, D), jnp.float32),   # running sum_n p * xn
        ],
        compiler_params=pltpu.CompilerParams(
            dimension_semantics=("parallel", "arbitrary"),
            vmem_limit_bytes=vmem_limit,
        ),
    )(x, cls, *weight_args)
    return out[:B, :num_classes]


def init_params(key, embed_dim, mlp_ratio, num_classes, init_std=0.02):
    D = embed_dim
    H = int(D * mlp_ratio)
    ks = jax.random.split(key, 8)

    def tn(k, shape, std=init_std):
        return (std * jax.random.truncated_normal(k, -2.0, 2.0, shape)).astype(jnp.float32)

    def z(*s):
        return jnp.zeros(s, jnp.float32)

    return {
        "query": tn(ks[0], (1, D)),                                   # query_tokens
        "n1_w": jnp.ones((1, D), jnp.float32), "n1_b": z(1, D),       # norm1
        "w_q": tn(ks[1], (D, D)), "b_q": z(1, D),
        "w_k": tn(ks[2], (D, D)), "b_k": z(1, D),
        "w_v": tn(ks[3], (D, D)), "b_v": z(1, D),
        # proj & fc2 weights rescaled by 1/sqrt(2*1) (AttentivePooler._rescale_blocks)
        "w_proj": tn(ks[4], (D, D)) / math.sqrt(2.0), "b_proj": z(1, D),
        "n2_w": jnp.ones((1, D), jnp.float32), "n2_b": z(1, D),       # norm2
        "w_fc1": tn(ks[5], (D, H)), "b_fc1": z(1, H),
        "w_fc2": tn(ks[6], (H, D)) / math.sqrt(2.0), "b_fc2": z(1, D),
        "w_lin": tn(ks[7], (2 * D, num_classes)), "b_lin": z(1, num_classes),
    }


def reference(patch_tokens, class_token, params, num_heads):
    """Pure-JAX f32 reference of the PyTorch forward."""
    B, N, D = patch_tokens.shape
    hd = D // num_heads

    def ln(x, w, b):
        mu = jnp.mean(x, -1, keepdims=True)
        var = jnp.mean((x - mu) ** 2, -1, keepdims=True)
        return (x - mu) / jnp.sqrt(var + EPS) * w[0] + b[0]

    q0 = jnp.broadcast_to(params["query"][None], (B, 1, D))
    xn = ln(patch_tokens, params["n1_w"], params["n1_b"])
    q = q0 @ params["w_q"] + params["b_q"][0]
    k = xn @ params["w_k"] + params["b_k"][0]
    v = xn @ params["w_v"] + params["b_v"][0]
    qh = q.reshape(B, 1, num_heads, hd).transpose(0, 2, 1, 3)
    kh = k.reshape(B, N, num_heads, hd).transpose(0, 2, 1, 3)
    vh = v.reshape(B, N, num_heads, hd).transpose(0, 2, 1, 3)
    s = jnp.einsum("bhqd,bhkd->bhqk", qh, kh) / math.sqrt(hd)
    p = jax.nn.softmax(s, axis=-1)
    o = jnp.einsum("bhqk,bhkd->bhqd", p, vh).transpose(0, 2, 1, 3).reshape(B, 1, D)
    o = o @ params["w_proj"] + params["b_proj"][0]
    q1 = q0 + o
    qn = ln(q1, params["n2_w"], params["n2_b"])
    h1 = qn @ params["w_fc1"] + params["b_fc1"][0]
    g = 0.5 * h1 * (1.0 + jax.scipy.special.erf(h1 / math.sqrt(2.0)))
    h2 = g @ params["w_fc2"] + params["b_fc2"][0]
    pooled = (q1 + h2)[:, 0, :]
    feat = jnp.concatenate([pooled, class_token], axis=-1)
    return feat @ params["w_lin"] + params["b_lin"][0]


if __name__ == "__main__":
    B, N, D = 2, 32, 32          # batch, seq (num patch tokens), embed_dim
    NUM_HEADS = 4                # head_dim = 8
    MLP_RATIO = 4.0              # mlp hidden = 128
    NUM_CLASSES = 16

    key = jax.random.PRNGKey(0)
    k_patch, k_cls, k_params = jax.random.split(key, 3)
    patch_tokens = jax.random.normal(k_patch, (B, N, D), jnp.float32)
    class_token = jax.random.normal(k_cls, (B, D), jnp.float32)
    params = init_params(k_params, D, MLP_RATIO, NUM_CLASSES)

    prep = prepare_params(params, NUM_HEADS)   # one-time weight prep (off the hot path)

    # n_tile=16 -> two online-softmax N steps exercise the accumulator path.
    logits = attentive_classifier(
        patch_tokens, class_token, prep,
        num_heads=NUM_HEADS, num_classes=NUM_CLASSES, n_tile=16)
    jax.block_until_ready(logits)

    ref = reference(patch_tokens, class_token, params, NUM_HEADS)
    assert logits.shape == (B, NUM_CLASSES)
    err = float(jnp.max(jnp.abs(logits - ref)))
    assert err < 5e-2, f"max abs err {err}"

    print("KERNEL_OK")
</pallas_src>

<mosaic_0001>
module attributes {stable_mosaic.version = 11 : i64} {
  func.func @_attentive_classifier_kernel(%arg0: i32, %arg1: i32, %arg2: memref<8x16x32xbf16, #tpu.memory_space<vmem>>, %arg3: memref<8x32xf32, #tpu.memory_space<vmem>>, %arg4: memref<1x32xf32, #tpu.memory_space<vmem>>, %arg5: memref<1x32xf32, #tpu.memory_space<vmem>>, %arg6: memref<32x8xbf16, #tpu.memory_space<vmem>>, %arg7: memref<1x8xf32, #tpu.memory_space<vmem>>, %arg8: memref<4x32x8xbf16, #tpu.memory_space<vmem>>, %arg9: memref<1x32xf32, #tpu.memory_space<vmem>>, %arg10: memref<32x32xbf16, #tpu.memory_space<vmem>>, %arg11: memref<1x32xf32, #tpu.memory_space<vmem>>, %arg12: memref<1x32xf32, #tpu.memory_space<vmem>>, %arg13: memref<1x32xf32, #tpu.memory_space<vmem>>, %arg14: memref<1x32xf32, #tpu.memory_space<vmem>>, %arg15: memref<32x128xbf16, #tpu.memory_space<vmem>>, %arg16: memref<1x128xf32, #tpu.memory_space<vmem>>, %arg17: memref<128x32xbf16, #tpu.memory_space<vmem>>, %arg18: memref<1x32xf32, #tpu.memory_space<vmem>>, %arg19: memref<32x128xbf16, #tpu.memory_space<vmem>>, %arg20: memref<32x128xbf16, #tpu.memory_space<vmem>>, %arg21: memref<1x128xf32, #tpu.memory_space<vmem>>, %arg22: memref<8x128xf32, #tpu.memory_space<vmem>>, %arg23: memref<8x8xf32, #tpu.memory_space<vmem>>, %arg24: memref<8x8xf32, #tpu.memory_space<vmem>>, %arg25: memref<8x8x32xf32, #tpu.memory_space<vmem>>) attributes {dimension_semantics = [#tpu.dimension_semantics<parallel>, #tpu.dimension_semantics<arbitrary>], iteration_bounds = array<i64: 2, 2>, scalar_prefetch = 0 : i64, scratch_operands = 3 : i64, tpu.core_type = #tpu.core_type<tc>, window_params = [{transform_indices = @transform_0, window_bounds = array<i64: 8, 16, 32>}, {transform_indices = @transform_1, window_bounds = array<i64: 8, 32>}, {pipeline_mode = #tpu.pipeline_mode<synchronous>, transform_indices = @transform_2, window_bounds = array<i64: 1, 32>}, {pipeline_mode = #tpu.pipeline_mode<synchronous>, transform_indices = @transform_3, window_bounds = array<i64: 1, 32>}, {pipeline_mode = #tpu.pipeline_mode<synchronous>, transform_indices = @transform_4, window_bounds = array<i64: 32, 8>}, {pipeline_mode = #tpu.pipeline_mode<synchronous>, transform_indices = @transform_5, window_bounds = array<i64: 1, 8>}, {pipeline_mode = #tpu.pipeline_mode<synchronous>, transform_indices = @transform_6, window_bounds = array<i64: 4, 32, 8>}, {pipeline_mode = #tpu.pipeline_mode<synchronous>, transform_indices = @transform_7, window_bounds = array<i64: 1, 32>}, {pipeline_mode = #tpu.pipeline_mode<synchronous>, transform_indices = @transform_8, window_bounds = array<i64: 32, 32>}, {pipeline_mode = #tpu.pipeline_mode<synchronous>, transform_indices = @transform_9, window_bounds = array<i64: 1, 32>}, {pipeline_mode = #tpu.pipeline_mode<synchronous>, transform_indices = @transform_10, window_bounds = array<i64: 1, 32>}, {pipeline_mode = #tpu.pipeline_mode<synchronous>, transform_indices = @transform_11, window_bounds = array<i64: 1, 32>}, {pipeline_mode = #tpu.pipeline_mode<synchronous>, transform_indices = @transform_12, window_bounds = array<i64: 1, 32>}, {pipeline_mode = #tpu.pipeline_mode<synchronous>, transform_indices = @transform_13, window_bounds = array<i64: 32, 128>}, {pipeline_mode = #tpu.pipeline_mode<synchronous>, transform_indices = @transform_14, window_bounds = array<i64: 1, 128>}, {pipeline_mode = #tpu.pipeline_mode<synchronous>, transform_indices = @transform_15, window_bounds = array<i64: 128, 32>}, {pipeline_mode = #tpu.pipeline_mode<synchronous>, transform_indices = @transform_16, window_bounds = array<i64: 1, 32>}, {pipeline_mode = #tpu.pipeline_mode<synchronous>, transform_indices = @transform_17, window_bounds = array<i64: 32, 128>}, {pipeline_mode = #tpu.pipeline_mode<synchronous>, transform_indices = @transform_18, window_bounds = array<i64: 32, 128>}, {pipeline_mode = #tpu.pipeline_mode<synchronous>, transform_indices = @transform_19, window_bounds = array<i64: 1, 128>}, {transform_indices = @transform_20, window_bounds = array<i64: 8, 128>}]} {
    %c0_i32 = arith.constant 0 : i32
    %0 = arith.cmpi eq, %arg1, %c0_i32 : i32
    %1 = arith.extui %0 : i1 to i32
    %c0_i32_0 = arith.constant 0 : i32
    %2 = arith.cmpi ne, %1, %c0_i32_0 : i32
    scf.if %2 {
      %cst_34 = arith.constant -1.000000e+30 : f32
      %64 = vector.broadcast %cst_34 : f32 to vector<8x8xf32>
      %c0_35 = arith.constant 0 : index
      %c0_36 = arith.constant 0 : index
      %65 = vector.load %arg23[%c0_35, %c0_36] : memref<8x8xf32, #tpu.memory_space<vmem>>, vector<8x8xf32>
      tpu.vector_store %arg23[%c0_35, %c0_36], %64 {strides = array<i32>} : memref<8x8xf32, #tpu.memory_space<vmem>>, vector<8x8xf32>,
      %cst_37 = arith.constant 0.000000e+00 : f32
      %66 = vector.broadcast %cst_37 : f32 to vector<8x8xf32>
      %c0_38 = arith.constant 0 : index
      %c0_39 = arith.constant 0 : index
      %67 = vector.load %arg24[%c0_38, %c0_39] : memref<8x8xf32, #tpu.memory_space<vmem>>, vector<8x8xf32>
      tpu.vector_store %arg24[%c0_38, %c0_39], %66 {strides = array<i32>} : memref<8x8xf32, #tpu.memory_space<vmem>>, vector<8x8xf32>,
      %cst_40 = arith.constant 0.000000e+00 : f32
      %68 = vector.broadcast %cst_40 : f32 to vector<8x8x32xf32>
      %c0_41 = arith.constant 0 : index
      %c0_42 = arith.constant 0 : index
      %c0_43 = arith.constant 0 : index
      %69 = vector.load %arg25[%c0_41, %c0_42, %c0_43] : memref<8x8x32xf32, #tpu.memory_space<vmem>>, vector<8x8x32xf32>
      tpu.vector_store %arg25[%c0_41, %c0_42, %c0_43], %68 {strides = array<i32>} : memref<8x8x32xf32, #tpu.memory_space<vmem>>, vector<8x8x32xf32>,
    } else {
    }
    %c0 = arith.constant 0 : index
    %c0_1 = arith.constant 0 : index
    %c0_2 = arith.constant 0 : index
    %3 = vector.load %arg2[%c0, %c0_1, %c0_2] : memref<8x16x32xbf16, #tpu.memory_space<vmem>>, vector<8x16x32xbf16>
    %4 = arith.extf %3 : vector<8x16x32xbf16> to vector<8x16x32xf32>
    %c0_3 = arith.constant 0 : index
    %c0_4 = arith.constant 0 : index
    %5 = vector.load %arg4[%c0_3, %c0_4] : memref<1x32xf32, #tpu.memory_space<vmem>>, vector<1x32xf32>
    %c0_5 = arith.constant 0 : index
    %c0_6 = arith.constant 0 : index
    %6 = vector.load %arg5[%c0_5, %c0_6] : memref<1x32xf32, #tpu.memory_space<vmem>>, vector<1x32xf32>
    %cst = arith.constant dense<0.000000e+00> : vector<8x16xf32>
    %7 = vector.multi_reduction <add>, %4, %cst [2] : vector<8x16x32xf32> to vector<8x16xf32>
    %8 = vector.shape_cast %7 : vector<8x16xf32> to vector<8x16x1xf32>
    %cst_7 = arith.constant 3.200000e+01 : f32
    %9 = vector.broadcast %cst_7 : f32 to vector<8x16x1xf32>
    %10 = arith.divf %8, %9 : vector<8x16x1xf32>
    %11 = vector.broadcast %10 : vector<8x16x1xf32> to vector<8x16x32xf32>
    %12 = arith.subf %4, %11 : vector<8x16x32xf32>
    %13 = arith.mulf %12, %12 : vector<8x16x32xf32>
    %cst_8 = arith.constant dense<0.000000e+00> : vector<8x16xf32>
    %14 = vector.multi_reduction <add>, %13, %cst_8 [2] : vector<8x16x32xf32> to vector<8x16xf32>
    %15 = vector.shape_cast %14 : vector<8x16xf32> to vector<8x16x1xf32>
    %cst_9 = arith.constant 3.200000e+01 : f32
    %16 = vector.broadcast %cst_9 : f32 to vector<8x16x1xf32>
    %17 = arith.divf %15, %16 : vector<8x16x1xf32>
    %cst_10 = arith.constant 9.99999974E-6 : f32
    %18 = vector.broadcast %cst_10 : f32 to vector<8x16x1xf32>
    %19 = arith.addf %17, %18 : vector<8x16x1xf32>
    %20 = math.rsqrt %19 : vector<8x16x1xf32>
    %21 = vector.broadcast %20 : vector<8x16x1xf32> to vector<8x16x32xf32>
    %22 = arith.mulf %12, %21 : vector<8x16x32xf32>
    %23 = vector.shape_cast %5 : vector<1x32xf32> to vector<1x1x32xf32>
    %24 = vector.broadcast %23 : vector<1x1x32xf32> to vector<8x16x32xf32>
    %25 = arith.mulf %22, %24 : vector<8x16x32xf32>
    %26 = vector.shape_cast %6 : vector<1x32xf32> to vector<1x1x32xf32>
    %27 = vector.broadcast %26 : vector<1x1x32xf32> to vector<8x16x32xf32>
    %28 = arith.addf %25, %27 : vector<8x16x32xf32>
    %29 = arith.truncf %28 : vector<8x16x32xf32> to vector<8x16x32xbf16>
    %30 = vector.shape_cast %29 : vector<8x16x32xbf16> to vector<128x32xbf16>
    %c0_11 = arith.constant 0 : index
    %c0_12 = arith.constant 0 : index
    %31 = vector.load %arg6[%c0_11, %c0_12] : memref<32x8xbf16, #tpu.memory_space<vmem>>, vector<32x8xbf16>
    %cst_13 = arith.constant dense<0.000000e+00> : vector<128x8xf32>
    %32 = tpu.matmul %30, %31, %cst_13 {dimension_numbers = #tpu.dot_dimension_numbers<[1], [0], [0], [1], [0, 0, 1, 1], [], []>} : vector<128x32xbf16>, vector<32x8xbf16>, vector<128x8xf32> -> vector<128x8xf32>
    %c0_14 = arith.constant 0 : index
    %c0_15 = arith.constant 0 : index
    %33 = vector.load %arg7[%c0_14, %c0_15] : memref<1x8xf32, #tpu.memory_space<vmem>>, vector<1x8xf32>
    %34 = vector.broadcast %33 : vector<1x8xf32> to vector<128x8xf32>
    %35 = arith.addf %32, %34 : vector<128x8xf32>
    %36 = vector.shape_cast %35 : vector<128x8xf32> to vector<8x16x8xf32>
    %37 = tpu.transpose %36, [0, 2, 1] : vector<8x16x8xf32> -> vector<8x8x16xf32>
    %c0_16 = arith.constant 0 : index
    %c0_17 = arith.constant 0 : index
    %38 = vector.load %arg23[%c0_16, %c0_17] : memref<8x8xf32, #tpu.memory_space<vmem>>, vector<8x8xf32>
    %cst_18 = arith.constant dense<0xFF800000> : vector<8x8xf32>
    %39 = vector.multi_reduction <maximumf>, %37, %cst_18 [2] : vector<8x8x16xf32> to vector<8x8xf32>
    %40 = arith.maximumf %38, %39 : vector<8x8xf32>
    %41 = arith.subf %38, %40 : vector<8x8xf32>
    %42 = math.exp %41 : vector<8x8xf32>
    %43 = vector.shape_cast %40 : vector<8x8xf32> to vector<8x8x1xf32>
    %44 = vector.broadcast %43 : vector<8x8x1xf32> to vector<8x8x16xf32>
    %45 = arith.subf %37, %44 : vector<8x8x16xf32>
    %46 = math.exp %45 : vector<8x8x16xf32>
    %c0_19 = arith.constant 0 : index
    %c0_20 = arith.constant 0 : index
    %47 = vector.load %arg24[%c0_19, %c0_20] : memref<8x8xf32, #tpu.memory_space<vmem>>, vector<8x8xf32>
    %48 = arith.mulf %42, %47 : vector<8x8xf32>
    %cst_21 = arith.constant dense<0.000000e+00> : vector<8x8xf32>
    %49 = vector.multi_reduction <add>, %46, %cst_21 [2] : vector<8x8x16xf32> to vector<8x8xf32>
    %50 = arith.addf %48, %49 : vector<8x8xf32>
    %c0_22 = arith.constant 0 : index
    %c0_23 = arith.constant 0 : index
    %51 = vector.load %arg24[%c0_22, %c0_23] : memref<8x8xf32, #tpu.memory_space<vmem>>, vector<8x8xf32>
    tpu.vector_store %arg24[%c0_22, %c0_23], %50 {strides = array<i32>} : memref<8x8xf32, #tpu.memory_space<vmem>>, vector<8x8xf32>,
    %52 = vector.shape_cast %42 : vector<8x8xf32> to vector<8x8x1xf32>
    %c0_24 = arith.constant 0 : index
    %c0_25 = arith.constant 0 : index
    %c0_26 = arith.constant 0 : index
    %53 = vector.load %arg25[%c0_24, %c0_25, %c0_26] : memref<8x8x32xf32, #tpu.memory_space<vmem>>, vector<8x8x32xf32>
    %54 = vector.broadcast %52 : vector<8x8x1xf32> to vector<8x8x32xf32>
    %55 = arith.mulf %54, %53 : vector<8x8x32xf32>
    %56 = arith.truncf %46 : vector<8x8x16xf32> to vector<8x8x16xbf16>
    "tpu.trace_start"() <{level = 10 : i32, message = "bhn,bnd->bhd"}> : () -> ()
    %cst_27 = arith.constant dense<0.000000e+00> : vector<8x8x32xf32>
    %57 = tpu.matmul %56, %29, %cst_27 {dimension_numbers = #tpu.dot_dimension_numbers<[2], [1], [1], [2], [0, 0, 0, 1, 1, 2], [0], [0]>} : vector<8x8x16xbf16>, vector<8x16x32xbf16>, vector<8x8x32xf32> -> vector<8x8x32xf32>
    "tpu.trace_stop"() : () -> ()
    %58 = arith.addf %55, %57 : vector<8x8x32xf32>
    %c0_28 = arith.constant 0 : index
    %c0_29 = arith.constant 0 : index
    %c0_30 = arith.constant 0 : index
    %59 = vector.load %arg25[%c0_28, %c0_29, %c0_30] : memref<8x8x32xf32, #tpu.memory_space<vmem>>, vector<8x8x32xf32>
    tpu.vector_store %arg25[%c0_28, %c0_29, %c0_30], %58 {strides = array<i32>} : memref<8x8x32xf32, #tpu.memory_space<vmem>>, vector<8x8x32xf32>,
    %c0_31 = arith.constant 0 : index
    %c0_32 = arith.constant 0 : index
    %60 = vector.load %arg23[%c0_31, %c0_32] : memref<8x8xf32, #tpu.memory_space<vmem>>, vector<8x8xf32>
    tpu.vector_store %arg23[%c0_31, %c0_32], %40 {strides = array<i32>} : memref<8x8xf32, #tpu.memory_space<vmem>>, vector<8x8xf32>,
    %c1_i32 = arith.constant 1 : i32
    %61 = arith.cmpi eq, %arg1, %c1_i32 : i32
    %62 = arith.extui %61 : i1 to i32
    %c0_i32_33 = arith.constant 0 : i32
    %63 = arith.cmpi ne, %62, %c0_i32_33 : i32
    scf.if %63 {
      %c0_34 = arith.constant 0 : index
      %c0_35 = arith.constant 0 : index
      %64 = vector.load %arg24[%c0_34, %c0_35] : memref<8x8xf32, #tpu.memory_space<vmem>>, vector<8x8xf32>
      %65 = tpu.reciprocal %64 {approx = true} : vector<8x8xf32> -> vector<8x8xf32>
      %c0_36 = arith.constant 0 : index
      %c0_37 = arith.constant 0 : index
      %c0_38 = arith.constant 0 : index
      %66 = vector.load %arg25[%c0_36, %c0_37, %c0_38] : memref<8x8x32xf32, #tpu.memory_space<vmem>>, vector<8x8x32xf32>
      %67 = vector.shape_cast %65 : vector<8x8xf32> to vector<8x8x1xf32>
      %68 = vector.broadcast %67 : vector<8x8x1xf32> to vector<8x8x32xf32>
      %69 = arith.mulf %66, %68 : vector<8x8x32xf32>
      %70 = vector.extract_strided_slice %69 {offsets = [0, 0, 0], sizes = [8, 1, 32], strides = [1, 1, 1]} : vector<8x8x32xf32> to vector<8x1x32xf32>
      %71 = vector.shape_cast %70 : vector<8x1x32xf32> to vector<8x32xf32>
      %72 = arith.truncf %71 : vector<8x32xf32> to vector<8x32xbf16>
      %c0_39 = arith.constant 0 : index
      %c0_40 = arith.constant 0 : index
      %c0_41 = arith.constant 0 : index
      %73 = vector.load %arg8[%c0_39, %c0_40, %c0_41] : memref<4x32x8xbf16, #tpu.memory_space<vmem>>, vector<1x32x8xbf16>
      %74 = vector.shape_cast %73 : vector<1x32x8xbf16> to vector<32x8xbf16>
      %cst_42 = arith.constant dense<0.000000e+00> : vector<8x8xf32>
      %75 = tpu.matmul %72, %74, %cst_42 {dimension_numbers = #tpu.dot_dimension_numbers<[1], [0], [0], [1], [0, 0, 1, 1], [], []>} : vector<8x32xbf16>, vector<32x8xbf16>, vector<8x8xf32> -> vector<8x8xf32>
      %76 = vector.extract_strided_slice %69 {offsets = [0, 1, 0], sizes = [8, 1, 32], strides = [1, 1, 1]} : vector<8x8x32xf32> to vector<8x1x32xf32>
      %77 = vector.shape_cast %76 : vector<8x1x32xf32> to vector<8x32xf32>
      %78 = arith.truncf %77 : vector<8x32xf32> to vector<8x32xbf16>
      %c1 = arith.constant 1 : index
      %c0_43 = arith.constant 0 : index
      %c0_44 = arith.constant 0 : index
      %79 = vector.load %arg8[%c1, %c0_43, %c0_44] : memref<4x32x8xbf16, #tpu.memory_space<vmem>>, vector<1x32x8xbf16>
      %80 = vector.shape_cast %79 : vector<1x32x8xbf16> to vector<32x8xbf16>
      %cst_45 = arith.constant dense<0.000000e+00> : vector<8x8xf32>
      %81 = tpu.matmul %78, %80, %cst_45 {dimension_numbers = #tpu.dot_dimension_numbers<[1], [0], [0], [1], [0, 0, 1, 1], [], []>} : vector<8x32xbf16>, vector<32x8xbf16>, vector<8x8xf32> -> vector<8x8xf32>
      %82 = vector.extract_strided_slice %69 {offsets = [0, 2, 0], sizes = [8, 1, 32], strides = [1, 1, 1]} : vector<8x8x32xf32> to vector<8x1x32xf32>
      %83 = vector.shape_cast %82 : vector<8x1x32xf32> to vector<8x32xf32>
      %84 = arith.truncf %83 : vector<8x32xf32> to vector<8x32xbf16>
      %c2 = arith.constant 2 : index
      %c0_46 = arith.constant 0 : index
      %c0_47 = arith.constant 0 : index
      %85 = vector.load %arg8[%c2, %c0_46, %c0_47] : memref<4x32x8xbf16, #tpu.memory_space<vmem>>, vector<1x32x8xbf16>
      %86 = vector.shape_cast %85 : vector<1x32x8xbf16> to vector<32x8xbf16>
      %cst_48 = arith.constant dense<0.000000e+00> : vector<8x8xf32>
      %87 = tpu.matmul %84, %86, %cst_48 {dimension_numbers = #tpu.dot_dimension_numbers<[1], [0], [0], [1], [0, 0, 1, 1], [], []>} : vector<8x32xbf16>, vector<32x8xbf16>, vector<8x8xf32> -> vector<8x8xf32>
      %88 = vector.extract_strided_slice %69 {offsets = [0, 3, 0], sizes = [8, 1, 32], strides = [1, 1, 1]} : vector<8x8x32xf32> to vector<8x1x32xf32>
      %89 = vector.shape_cast %88 : vector<8x1x32xf32> to vector<8x32xf32>
      %90 = arith.truncf %89 : vector<8x32xf32> to vector<8x32xbf16>
      %c3 = arith.constant 3 : index
      %c0_49 = arith.constant 0 : index
      %c0_50 = arith.constant 0 : index
      %91 = vector.load %arg8[%c3, %c0_49, %c0_50] : memref<4x32x8xbf16, #tpu.memory_space<vmem>>, vector<1x32x8xbf16>
      %92 = vector.shape_cast %91 : vector<1x32x8xbf16> to vector<32x8xbf16>
      %cst_51 = arith.constant dense<0.000000e+00> : vector<8x8xf32>
      %93 = tpu.matmul %90, %92, %cst_51 {dimension_numbers = #tpu.dot_dimension_numbers<[1], [0], [0], [1], [0, 0, 1, 1], [], []>} : vector<8x32xbf16>, vector<32x8xbf16>, vector<8x8xf32> -> vector<8x8xf32>
      %94 = tpu.concatenate %75, %81, %87, %93 in 1 : vector<8x8xf32>, vector<8x8xf32>, vector<8x8xf32>, vector<8x8xf32> -> vector<8x32xf32>
      %c0_52 = arith.constant 0 : index
      %c0_53 = arith.constant 0 : index
      %95 = vector.load %arg9[%c0_52, %c0_53] : memref<1x32xf32, #tpu.memory_space<vmem>>, vector<1x32xf32>
      %96 = vector.broadcast %95 : vector<1x32xf32> to vector<8x32xf32>
      %97 = arith.addf %94, %96 : vector<8x32xf32>
      %98 = arith.truncf %97 : vector<8x32xf32> to vector<8x32xbf16>
      %c0_54 = arith.constant 0 : index
      %c0_55 = arith.constant 0 : index
      %99 = vector.load %arg10[%c0_54, %c0_55] : memref<32x32xbf16, #tpu.memory_space<vmem>>, vector<32x32xbf16>
      %cst_56 = arith.constant dense<0.000000e+00> : vector<8x32xf32>
      %100 = tpu.matmul %98, %99, %cst_56 {dimension_numbers = #tpu.dot_dimension_numbers<[1], [0], [0], [1], [0, 0, 1, 1], [], []>} : vector<8x32xbf16>, vector<32x32xbf16>, vector<8x32xf32> -> vector<8x32xf32>
      %c0_57 = arith.constant 0 : index
      %c0_58 = arith.constant 0 : index
      %101 = vector.load %arg11[%c0_57, %c0_58] : memref<1x32xf32, #tpu.memory_space<vmem>>, vector<1x32xf32>
      %102 = vector.broadcast %101 : vector<1x32xf32> to vector<8x32xf32>
      %103 = arith.addf %100, %102 : vector<8x32xf32>
      %c0_59 = arith.constant 0 : index
      %c0_60 = arith.constant 0 : index
      %104 = vector.load %arg12[%c0_59, %c0_60] : memref<1x32xf32, #tpu.memory_space<vmem>>, vector<1x32xf32>
      %105 = vector.broadcast %104 : vector<1x32xf32> to vector<8x32xf32>
      %106 = arith.addf %105, %103 : vector<8x32xf32>
      %c0_61 = arith.constant 0 : index
      %c0_62 = arith.constant 0 : index
      %107 = vector.load %arg13[%c0_61, %c0_62] : memref<1x32xf32, #tpu.memory_space<vmem>>, vector<1x32xf32>
      %c0_63 = arith.constant 0 : index
      %c0_64 = arith.constant 0 : index
      %108 = vector.load %arg14[%c0_63, %c0_64] : memref<1x32xf32, #tpu.memory_space<vmem>>, vector<1x32xf32>
      %cst_65 = arith.constant dense<0.000000e+00> : vector<8xf32>
      %109 = vector.multi_reduction <add>, %106, %cst_65 [1] : vector<8x32xf32> to vector<8xf32>
      %110 = vector.shape_cast %109 : vector<8xf32> to vector<8x1xf32>
      %cst_66 = arith.constant 3.200000e+01 : f32
      %111 = vector.broadcast %cst_66 : f32 to vector<8x1xf32>
      %112 = arith.divf %110, %111 : vector<8x1xf32>
      %113 = vector.broadcast %112 : vector<8x1xf32> to vector<8x32xf32>
      %114 = arith.subf %106, %113 : vector<8x32xf32>
      %115 = arith.mulf %114, %114 : vector<8x32xf32>
      %cst_67 = arith.constant dense<0.000000e+00> : vector<8xf32>
      %116 = vector.multi_reduction <add>, %115, %cst_67 [1] : vector<8x32xf32> to vector<8xf32>
      %117 = vector.shape_cast %116 : vector<8xf32> to vector<8x1xf32>
      %cst_68 = arith.constant 3.200000e+01 : f32
      %118 = vector.broadcast %cst_68 : f32 to vector<8x1xf32>
      %119 = arith.divf %117, %118 : vector<8x1xf32>
      %cst_69 = arith.constant 9.99999974E-6 : f32
      %120 = vector.broadcast %cst_69 : f32 to vector<8x1xf32>
      %121 = arith.addf %119, %120 : vector<8x1xf32>
      %122 = math.rsqrt %121 : vector<8x1xf32>
      %123 = vector.broadcast %122 : vector<8x1xf32> to vector<8x32xf32>
      %124 = arith.mulf %114, %123 : vector<8x32xf32>
      %125 = vector.broadcast %107 : vector<1x32xf32> to vector<8x32xf32>
      %126 = arith.mulf %124, %125 : vector<8x32xf32>
      %127 = vector.broadcast %108 : vector<1x32xf32> to vector<8x32xf32>
      %128 = arith.addf %126, %127 : vector<8x32xf32>
      %129 = arith.truncf %128 : vector<8x32xf32> to vector<8x32xbf16>
      %c0_70 = arith.constant 0 : index
      %c0_71 = arith.constant 0 : index
      %130 = vector.load %arg15[%c0_70, %c0_71] : memref<32x128xbf16, #tpu.memory_space<vmem>>, vector<32x128xbf16>
      %cst_72 = arith.constant dense<0.000000e+00> : vector<8x128xf32>
      %131 = tpu.matmul %129, %130, %cst_72 {dimension_numbers = #tpu.dot_dimension_numbers<[1], [0], [0], [1], [0, 0, 1, 1], [], []>} : vector<8x32xbf16>, vector<32x128xbf16>, vector<8x128xf32> -> vector<8x128xf32>
      %c0_73 = arith.constant 0 : index
      %c0_74 = arith.constant 0 : index
      %132 = vector.load %arg16[%c0_73, %c0_74] : memref<1x128xf32, #tpu.memory_space<vmem>>, vector<1x128xf32>
      %133 = vector.broadcast %132 : vector<1x128xf32> to vector<8x128xf32>
      %134 = arith.addf %131, %133 : vector<8x128xf32>
      %cst_75 = arith.constant 5.000000e-01 : f32
      %135 = vector.broadcast %cst_75 : f32 to vector<8x128xf32>
      %136 = arith.mulf %135, %134 : vector<8x128xf32>
      %cst_76 = arith.constant 0.707106769 : f32
      %137 = vector.broadcast %cst_76 : f32 to vector<8x128xf32>
      %138 = arith.mulf %134, %137 : vector<8x128xf32>
      %cst_77 = arith.constant 0.000000e+00 : f32
      %139 = vector.broadcast %cst_77 : f32 to vector<8x128xf32>
      %140 = arith.cmpf oge, %138, %139 : vector<8x128xf32>
      %cst_78 = arith.constant 1.000000e+00 : f32
      %cst_79 = arith.constant -1.000000e+00 : f32
      %141 = vector.broadcast %cst_78 : f32 to vector<8x128xf32>
      %142 = vector.broadcast %cst_79 : f32 to vector<8x128xf32>
      %143 = arith.select %140, %141, %142 : vector<8x128xi1>, vector<8x128xf32>
      %144 = math.absf %138 : vector<8x128xf32>
      %cst_80 = arith.constant 0.327591091 : f32
      %145 = vector.broadcast %cst_80 : f32 to vector<8x128xf32>
      %146 = arith.mulf %145, %144 : vector<8x128xf32>
      %cst_81 = arith.constant 1.000000e+00 : f32
      %147 = vector.broadcast %cst_81 : f32 to vector<8x128xf32>
      %148 = arith.addf %147, %146 : vector<8x128xf32>
      %cst_82 = arith.constant 1.000000e+00 : f32
      %149 = vector.broadcast %cst_82 : f32 to vector<8x128xf32>
      %150 = arith.divf %149, %148 : vector<8x128xf32>
      %cst_83 = arith.constant 1.06140542 : f32
      %151 = vector.broadcast %cst_83 : f32 to vector<8x128xf32>
      %152 = arith.mulf %151, %150 : vector<8x128xf32>
      %cst_84 = arith.constant -1.45315206 : f32
      %153 = vector.broadcast %cst_84 : f32 to vector<8x128xf32>
      %154 = arith.addf %152, %153 : vector<8x128xf32>
      %155 = arith.mulf %154, %150 : vector<8x128xf32>
      %cst_85 = arith.constant 1.42141378 : f32
      %156 = vector.broadcast %cst_85 : f32 to vector<8x128xf32>
      %157 = arith.addf %155, %156 : vector<8x128xf32>
      %158 = arith.mulf %157, %150 : vector<8x128xf32>
      %cst_86 = arith.constant -0.284496725 : f32
      %159 = vector.broadcast %cst_86 : f32 to vector<8x128xf32>
      %160 = arith.addf %158, %159 : vector<8x128xf32>
      %161 = arith.mulf %160, %150 : vector<8x128xf32>
      %cst_87 = arith.constant 0.254829586 : f32
      %162 = vector.broadcast %cst_87 : f32 to vector<8x128xf32>
      %163 = arith.addf %161, %162 : vector<8x128xf32>
      %164 = arith.mulf %163, %150 : vector<8x128xf32>
      %cst_88 = arith.constant 0.000000e+00 : f32
      %165 = vector.broadcast %cst_88 : f32 to vector<8x128xf32>
      %166 = arith.subf %165, %144 : vector<8x128xf32>
      %167 = arith.mulf %166, %144 : vector<8x128xf32>
      %168 = math.exp %167 : vector<8x128xf32>
      %169 = arith.mulf %164, %168 : vector<8x128xf32>
      %cst_89 = arith.constant 1.000000e+00 : f32
      %170 = vector.broadcast %cst_89 : f32 to vector<8x128xf32>
      %171 = arith.subf %170, %169 : vector<8x128xf32>
      %172 = arith.mulf %143, %171 : vector<8x128xf32>
      %cst_90 = arith.constant 1.000000e+00 : f32
      %173 = vector.broadcast %cst_90 : f32 to vector<8x128xf32>
      %174 = arith.addf %173, %172 : vector<8x128xf32>
      %175 = arith.mulf %136, %174 : vector<8x128xf32>
      %176 = arith.truncf %175 : vector<8x128xf32> to vector<8x128xbf16>
      %c0_91 = arith.constant 0 : index
      %c0_92 = arith.constant 0 : index
      %177 = vector.load %arg17[%c0_91, %c0_92] : memref<128x32xbf16, #tpu.memory_space<vmem>>, vector<128x32xbf16>
      %cst_93 = arith.constant dense<0.000000e+00> : vector<8x32xf32>
      %178 = tpu.matmul %176, %177, %cst_93 {dimension_numbers = #tpu.dot_dimension_numbers<[1], [0], [0], [1], [0, 0, 1, 1], [], []>} : vector<8x128xbf16>, vector<128x32xbf16>, vector<8x32xf32> -> vector<8x32xf32>
      %c0_94 = arith.constant 0 : index
      %c0_95 = arith.constant 0 : index
      %179 = vector.load %arg18[%c0_94, %c0_95] : memref<1x32xf32, #tpu.memory_space<vmem>>, vector<1x32xf32>
      %180 = vector.broadcast %179 : vector<1x32xf32> to vector<8x32xf32>
      %181 = arith.addf %178, %180 : vector<8x32xf32>
      %182 = arith.addf %106, %181 : vector<8x32xf32>
      %183 = arith.truncf %182 : vector<8x32xf32> to vector<8x32xbf16>
      %c0_96 = arith.constant 0 : index
      %c0_97 = arith.constant 0 : index
      %184 = vector.load %arg19[%c0_96, %c0_97] : memref<32x128xbf16, #tpu.memory_space<vmem>>, vector<32x128xbf16>
      %cst_98 = arith.constant dense<0.000000e+00> : vector<8x128xf32>
      %185 = tpu.matmul %183, %184, %cst_98 {dimension_numbers = #tpu.dot_dimension_numbers<[1], [0], [0], [1], [0, 0, 1, 1], [], []>} : vector<8x32xbf16>, vector<32x128xbf16>, vector<8x128xf32> -> vector<8x128xf32>
      %c0_99 = arith.constant 0 : index
      %c0_100 = arith.constant 0 : index
      %186 = vector.load %arg3[%c0_99, %c0_100] : memref<8x32xf32, #tpu.memory_space<vmem>>, vector<8x32xf32>
      %187 = arith.truncf %186 : vector<8x32xf32> to vector<8x32xbf16>
      %c0_101 = arith.constant 0 : index
      %c0_102 = arith.constant 0 : index
      %188 = vector.load %arg20[%c0_101, %c0_102] : memref<32x128xbf16, #tpu.memory_space<vmem>>, vector<32x128xbf16>
      %cst_103 = arith.constant dense<0.000000e+00> : vector<8x128xf32>
      %189 = tpu.matmul %187, %188, %cst_103 {dimension_numbers = #tpu.dot_dimension_numbers<[1], [0], [0], [1], [0, 0, 1, 1], [], []>} : vector<8x32xbf16>, vector<32x128xbf16>, vector<8x128xf32> -> vector<8x128xf32>
      %190 = arith.addf %185, %189 : vector<8x128xf32>
      %c0_104 = arith.constant 0 : index
      %c0_105 = arith.constant 0 : index
      %191 = vector.load %arg21[%c0_104, %c0_105] : memref<1x128xf32, #tpu.memory_space<vmem>>, vector<1x128xf32>
      %192 = vector.broadcast %191 : vector<1x128xf32> to vector<8x128xf32>
      %193 = arith.addf %190, %192 : vector<8x128xf32>
      %c0_106 = arith.constant 0 : index
      %c0_107 = arith.constant 0 : index
      %194 = vector.load %arg22[%c0_106, %c0_107] : memref<8x128xf32, #tpu.memory_space<vmem>>, vector<8x128xf32>
      tpu.vector_store %arg22[%c0_106, %c0_107], %193 {strides = array<i32>} : memref<8x128xf32, #tpu.memory_space<vmem>>, vector<8x128xf32>,
    } else {
    }
    return
  }
  func.func @transform_0(%arg0: i32, %arg1: i32) -> (i32, i32, i32) {
    %c0_i32 = arith.constant 0 : i32
    %c0_i32_0 = arith.constant 0 : i32
    return %arg0, %arg1, %c0_i32 : i32, i32, i32
  }
  func.func @transform_1(%arg0: i32, %arg1: i32) -> (i32, i32) {
    %c0_i32 = arith.constant 0 : i32
    %c0_i32_0 = arith.constant 0 : i32
    return %arg0, %c0_i32 : i32, i32
  }
  func.func @transform_2(%arg0: i32, %arg1: i32) -> (i32, i32) {
    %c0_i32 = arith.constant 0 : i32
    %c0_i32_0 = arith.constant 0 : i32
    %c0_i32_1 = arith.constant 0 : i32
    return %c0_i32, %c0_i32_0 : i32, i32
  }
  func.func @transform_3(%arg0: i32, %arg1: i32) -> (i32, i32) {
    %c0_i32 = arith.constant 0 : i32
    %c0_i32_0 = arith.constant 0 : i32
    %c0_i32_1 = arith.constant 0 : i32
    return %c0_i32, %c0_i32_0 : i32, i32
  }
  func.func @transform_4(%arg0: i32, %arg1: i32) -> (i32, i32) {
    %c0_i32 = arith.constant 0 : i32
    %c0_i32_0 = arith.constant 0 : i32
    %c0_i32_1 = arith.constant 0 : i32
    return %c0_i32, %c0_i32_0 : i32, i32
  }
  func.func @transform_5(%arg0: i32, %arg1: i32) -> (i32, i32) {
    %c0_i32 = arith.constant 0 : i32
    %c0_i32_0 = arith.constant 0 : i32
    %c0_i32_1 = arith.constant 0 : i32
    return %c0_i32, %c0_i32_0 : i32, i32
  }
  func.func @transform_6(%arg0: i32, %arg1: i32) -> (i32, i32, i32) {
    %c0_i32 = arith.constant 0 : i32
    %c0_i32_0 = arith.constant 0 : i32
    %c0_i32_1 = arith.constant 0 : i32
    %c0_i32_2 = arith.constant 0 : i32
    return %c0_i32, %c0_i32_0, %c0_i32_1 : i32, i32, i32
  }
  func.func @transform_7(%arg0: i32, %arg1: i32) -> (i32, i32) {
    %c0_i32 = arith.constant 0 : i32
    %c0_i32_0 = arith.constant 0 : i32
    %c0_i32_1 = arith.constant 0 : i32
    return %c0_i32, %c0_i32_0 : i32, i32
  }
  func.func @transform_8(%arg0: i32, %arg1: i32) -> (i32, i32) {
    %c0_i32 = arith.constant 0 : i32
    %c0_i32_0 = arith.constant 0 : i32
    %c0_i32_1 = arith.constant 0 : i32
    return %c0_i32, %c0_i32_0 : i32, i32
  }
  func.func @transform_9(%arg0: i32, %arg1: i32) -> (i32, i32) {
    %c0_i32 = arith.constant 0 : i32
    %c0_i32_0 = arith.constant 0 : i32
    %c0_i32_1 = arith.constant 0 : i32
    return %c0_i32, %c0_i32_0 : i32, i32
  }
  func.func @transform_10(%arg0: i32, %arg1: i32) -> (i32, i32) {
    %c0_i32 = arith.constant 0 : i32
    %c0_i32_0 = arith.constant 0 : i32
    %c0_i32_1 = arith.constant 0 : i32
    return %c0_i32, %c0_i32_0 : i32, i32
  }
  func.func @transform_11(%arg0: i32, %arg1: i32) -> (i32, i32) {
    %c0_i32 = arith.constant 0 : i32
    %c0_i32_0 = arith.constant 0 : i32
    %c0_i32_1 = arith.constant 0 : i32
    return %c0_i32, %c0_i32_0 : i32, i32
  }
  func.func @transform_12(%arg0: i32, %arg1: i32) -> (i32, i32) {
    %c0_i32 = arith.constant 0 : i32
    %c0_i32_0 = arith.constant 0 : i32
    %c0_i32_1 = arith.constant 0 : i32
    return %c0_i32, %c0_i32_0 : i32, i32
  }
  func.func @transform_13(%arg0: i32, %arg1: i32) -> (i32, i32) {
    %c0_i32 = arith.constant 0 : i32
    %c0_i32_0 = arith.constant 0 : i32
    %c0_i32_1 = arith.constant 0 : i32
    return %c0_i32, %c0_i32_0 : i32, i32
  }
  func.func @transform_14(%arg0: i32, %arg1: i32) -> (i32, i32) {
    %c0_i32 = arith.constant 0 : i32
    %c0_i32_0 = arith.constant 0 : i32
    %c0_i32_1 = arith.constant 0 : i32
    return %c0_i32, %c0_i32_0 : i32, i32
  }
  func.func @transform_15(%arg0: i32, %arg1: i32) -> (i32, i32) {
    %c0_i32 = arith.constant 0 : i32
    %c0_i32_0 = arith.constant 0 : i32
    %c0_i32_1 = arith.constant 0 : i32
    return %c0_i32, %c0_i32_0 : i32, i32
  }
  func.func @transform_16(%arg0: i32, %arg1: i32) -> (i32, i32) {
    %c0_i32 = arith.constant 0 : i32
    %c0_i32_0 = arith.constant 0 : i32
    %c0_i32_1 = arith.constant 0 : i32
    return %c0_i32, %c0_i32_0 : i32, i32
  }
  func.func @transform_17(%arg0: i32, %arg1: i32) -> (i32, i32) {
    %c0_i32 = arith.constant 0 : i32
    %c0_i32_0 = arith.constant 0 : i32
    %c0_i32_1 = arith.constant 0 : i32
    return %c0_i32, %c0_i32_0 : i32, i32
  }
  func.func @transform_18(%arg0: i32, %arg1: i32) -> (i32, i32) {
    %c0_i32 = arith.constant 0 : i32
    %c0_i32_0 = arith.constant 0 : i32
    %c0_i32_1 = arith.constant 0 : i32
    return %c0_i32, %c0_i32_0 : i32, i32
  }
  func.func @transform_19(%arg0: i32, %arg1: i32) -> (i32, i32) {
    %c0_i32 = arith.constant 0 : i32
    %c0_i32_0 = arith.constant 0 : i32
    %c0_i32_1 = arith.constant 0 : i32
    return %c0_i32, %c0_i32_0 : i32, i32
  }
  func.func @transform_20(%arg0: i32, %arg1: i32) -> (i32, i32) {
    %c0_i32 = arith.constant 0 : i32
    %c0_i32_0 = arith.constant 0 : i32
    return %arg0, %c0_i32 : i32, i32
  }
}

</mosaic_0001>

<llo_original>
// kernel: attentive_classifier.1
$region0: #{attentive_classifier.1}
  #allocation0 [shape = 'u32[]', space=smem, size = 0x4, offset = 0x4, fixed_abs, tag = 'smem constant byte address 0x4 - core index']
  #allocation1 [shape = 'u32[144,128]{1,0:T(1,128)}', space=vmem, size = 0x12000, scoped, tag = 'internal scratch']
  #allocation2 [shape = 'f32[8,8]{1,0:T(8,128)}', space=vmem, size = 0x1000, scoped, tag = 'scratch operand']
  #allocation3 [shape = 'f32[8,8]{1,0:T(8,128)}', space=vmem, size = 0x1000, scoped, tag = 'scratch operand']
  #allocation4 [shape = 'f32[8,8,32]{2,1,0:T(8,128)}', space=vmem, size = 0x8000, scoped, tag = 'scratch operand']
  %s0 = inlined_call_operand.vmem [shape: bf16[16,32,32], index: 0, kind: input, shape index: {}]
  %s1 = inlined_call_operand.vmem [shape: f32[16,32], index: 1, kind: input, shape index: {}]
  %s2 = inlined_call_operand.vmem [shape: f32[1,32], index: 2, kind: input, shape index: {}]
  %s3 = inlined_call_operand.vmem [shape: f32[1,32], index: 3, kind: input, shape index: {}]
  %s4 = inlined_call_operand.vmem [shape: bf16[32,8], index: 4, kind: input, shape index: {}]
  %s5 = inlined_call_operand.vmem [shape: f32[1,8], index: 5, kind: input, shape index: {}]
  %s6 = inlined_call_operand.vmem [shape: bf16[4,32,8], index: 6, kind: input, shape index: {}]
  %s7 = inlined_call_operand.vmem [shape: f32[1,32], index: 7, kind: input, shape index: {}]
  %s8 = inlined_call_operand.vmem [shape: bf16[32,32], index: 8, kind: input, shape index: {}]
  %s9 = inlined_call_operand.vmem [shape: f32[1,32], index: 9, kind: input, shape index: {}]
  %s10 = inlined_call_operand.vmem [shape: f32[1,32], index: 10, kind: input, shape index: {}]
  %s11 = inlined_call_operand.vmem [shape: f32[1,32], index: 11, kind: input, shape index: {}]
  %s12 = inlined_call_operand.vmem [shape: f32[1,32], index: 12, kind: input, shape index: {}]
  %s13 = inlined_call_operand.vmem [shape: bf16[32,128], index: 13, kind: input, shape index: {}]
  %s14 = inlined_call_operand.vmem [shape: f32[1,128], index: 14, kind: input, shape index: {}]
  %s15 = inlined_call_operand.vmem [shape: bf16[128,32], index: 15, kind: input, shape index: {}]
  %s16 = inlined_call_operand.vmem [shape: f32[1,32], index: 16, kind: input, shape index: {}]
  %s17 = inlined_call_operand.vmem [shape: bf16[32,128], index: 17, kind: input, shape index: {}]
  %s18 = inlined_call_operand.vmem [shape: bf16[32,128], index: 18, kind: input, shape index: {}]
  %s19 = inlined_call_operand.vmem [shape: f32[1,128], index: 19, kind: input, shape index: {}]
  %s20 = inlined_call_operand.vmem [shape: f32[16,128], index: 20, kind: output, shape index: {}]
  %s21 = sld [smem:[#allocation0]]
  $region162: #{attentive_classifier.1} parent=0
    _
  %s23 = ssub.s32 1, %s21
  %s24 = scalar_select 0, %s23, %s21
  $region1: #{attentive_classifier.1} parent=0
    #allocation5 [shape = 'u8[65536]{0}', space=vmem, size = 0x10000, scoped, tag = 'input window, operand 0']
    loop: start=0, step=1, limit=6
    $region2: #{attentive_classifier.1} parent=1 // loop_pre_header
      _
    $region3: #{attentive_classifier.1} parent=1 // loop_header
      %s26 = sphi 0, %s30
      %p27 = scmp.ge.s32.totalorder %s26, 6
      %s33 = sphi 0, %s45
      %s34 = sphi 0, %s41
      %s35 = sphi 0, %s33
      %s36 = sphi 0, %s34
      %s37 = sphi 0, %s35
      %s38 = sphi 0, %s36
      %s50 = sphi 0, %s52
      %s53 = sphi 0, %s50
      %s54 = sphi 0, %s53
      %s70 = sphi 0, %s54
      %s76 = sphi 0, %s78
      %s79 = sphi 0, %s76
      %s80 = sphi 0, %s79
      %s96 = sphi 0, %s80
      %s100 = sphi 0, %s100
      %s102 = sphi 0, %s100
      %s103 = sphi 0, %s102
      %s117 = sphi 0, %s103
      %s121 = sphi 0, %s121
      %s123 = sphi 0, %s121
      %s124 = sphi 0, %s123
      %s138 = sphi 0, %s124
      %s142 = sphi 0, %s142
      %s144 = sphi 0, %s142
      %s145 = sphi 0, %s144
      %s159 = sphi 0, %s145
      %s163 = sphi 0, %s163
      %s165 = sphi 0, %s163
      %s166 = sphi 0, %s165
      %s180 = sphi 0, %s166
      %s184 = sphi 0, %s184
      %s186 = sphi 0, %s184
      %s187 = sphi 0, %s186
      %s201 = sphi 0, %s187
      %s205 = sphi 0, %s205
      %s207 = sphi 0, %s205
      %s208 = sphi 0, %s207
      %s222 = sphi 0, %s208
      %s226 = sphi 0, %s226
      %s228 = sphi 0, %s226
      %s229 = sphi 0, %s228
      %s243 = sphi 0, %s229
      %s247 = sphi 0, %s247
      %s249 = sphi 0, %s247
      %s250 = sphi 0, %s249
      %s264 = sphi 0, %s250
      %s268 = sphi 0, %s268
      %s270 = sphi 0, %s268
      %s271 = sphi 0, %s270
      %s285 = sphi 0, %s271
      %s289 = sphi 0, %s289
      %s291 = sphi 0, %s289
      %s292 = sphi 0, %s291
      %s306 = sphi 0, %s292
      %s310 = sphi 0, %s310
      %s312 = sphi 0, %s310
      %s313 = sphi 0, %s312
      %s327 = sphi 0, %s313
      %s331 = sphi 0, %s331
      %s333 = sphi 0, %s331
      %s334 = sphi 0, %s333
      %s348 = sphi 0, %s334
      %s352 = sphi 0, %s352
      %s354 = sphi 0, %s352
      %s355 = sphi 0, %s354
      %s369 = sphi 0, %s355
      %s373 = sphi 0, %s373
      %s375 = sphi 0, %s373
      %s376 = sphi 0, %s375
      %s390 = sphi 0, %s376
      %s394 = sphi 0, %s394
      %s396 = sphi 0, %s394
      %s397 = sphi 0, %s396
      %s411 = sphi 0, %s397
      %s415 = sphi 0, %s415
      %s417 = sphi 0, %s415
      %s418 = sphi 0, %s417
      %s432 = sphi 0, %s418
      %s436 = sphi 0, %s436
      %s438 = sphi 0, %s436
      %s439 = sphi 0, %s438
      %s453 = sphi 0, %s439
      %s457 = sphi 0, %s457
      %s459 = sphi 0, %s457
      %s460 = sphi 0, %s459
      %s474 = sphi 0, %s460
      %s480 = sphi 0, %s482
      %s483 = sphi 0, %s480
      %s484 = sphi 0, %s483
      %s500 = sphi 0, %s484
    $region4: #{attentive_classifier.1} parent=1 // loop_header_branch
      %29 = sbr.rel (%p27) target = $region8
    $region5: #{attentive_classifier.1} parent=1 // loop_body
      %s31 = ssub.s32 %s26, 1
      %s32 = ssub.s32 %s26, 2
      %s39 = sadd.s32 1, %s34
      %p40 = scmp.ge.s32.totalorder %s39, 2
      %s41 = scalar_select %p40, 0, %s39
      %s42 = sadd.s32 1, %s33
      %s43 = scalar_select %p40, %s42, %s33
      %p44 = scmp.ge.s32.totalorder %s43, 2
      %s45 = scalar_select %p44, 0, %s43
      %s46 = ssub.s32 %s33, %s45
      %s47 = ssub.s32 %s34, %s41
      %s48 = sor.u32 %s46, %s47
      %p49 = scmp.eq.s32.totalorder %s48, 0
      %s51 = sadd.s32 %s50, 1
      %s52 = scalar_select %p49, %s50, %s51
      %p55 = pneg %p49
      %p56 = scmp.eq.s32.totalorder %s26, 3
      %p57 = por %p55, %p56
      %p58 = scmp.ne.s32.totalorder %s50, %s53
      %p59 = scmp.eq.s32.totalorder %s26, 0
      %p60 = por %p58, %p59
      %p61 = scmp.ne.s32.totalorder %s50, %s53
      %p62 = scmp.eq.s32.totalorder %s31, 3
      %p63 = por %p61, %p62
      %p64 = scmp.ne.s32.totalorder %s53, %s54
      %p65 = scmp.eq.s32.totalorder %s31, 0
      %p66 = por %p64, %p65
      %p67 = scmp.ne.s32.totalorder %s53, %s54
      %p68 = scmp.eq.s32.totalorder %s32, 3
      %p69 = por %p67, %p68
      %p71 = scmp.ne.s32.totalorder %s54, %s70
      %p72 = scmp.eq.s32.totalorder %s32, 0
      %p73 = por %p71, %p72
      %s74 = ssub.s32 %s33, %s45
      %p75 = scmp.eq.s32.totalorder %s74, 0
      %s77 = sadd.s32 %s76, 1
      %s78 = scalar_select %p75, %s76, %s77
      %p81 = pneg %p75
      %p82 = scmp.eq.s32.totalorder %s26, 3
      %p83 = por %p81, %p82
      %p84 = scmp.ne.s32.totalorder %s76, %s79
      %p85 = scmp.eq.s32.totalorder %s26, 0
      %p86 = por %p84, %p85
      %p87 = scmp.ne.s32.totalorder %s76, %s79
      %p88 = scmp.eq.s32.totalorder %s31, 3
      %p89 = por %p87, %p88
      %p90 = scmp.ne.s32.totalorder %s79, %s80
      %p91 = scmp.eq.s32.totalorder %s31, 0
      %p92 = por %p90, %p91
      %p93 = scmp.ne.s32.totalorder %s79, %s80
      %p94 = scmp.eq.s32.totalorder %s32, 3
      %p95 = por %p93, %p94
      %p97 = scmp.ne.s32.totalorder %s80, %s96
      %p98 = scmp.eq.s32.totalorder %s32, 0
      %p99 = por %p97, %p98
      %s101 = sadd.s32 %s100, 1
      %p104 = scmp.eq.s32.totalorder %s26, 3
      %p105 = scmp.ne.s32.totalorder %s100, %s102
      %p106 = scmp.eq.s32.totalorder %s26, 0
      %p107 = por %p105, %p106
      %p108 = scmp.ne.s32.totalorder %s100, %s102
      %p109 = scmp.eq.s32.totalorder %s31, 3
      %p110 = por %p108, %p109
      %p111 = scmp.ne.s32.totalorder %s102, %s103
      %p112 = scmp.eq.s32.totalorder %s31, 0
      %p113 = por %p111, %p112
      %p114 = scmp.ne.s32.totalorder %s102, %s103
      %p115 = scmp.eq.s32.totalorder %s32, 3
      %p116 = por %p114, %p115
      %p118 = scmp.ne.s32.totalorder %s103, %s117
      %p119 = scmp.eq.s32.totalorder %s32, 0
      %p120 = por %p118, %p119
      %s122 = sadd.s32 %s121, 1
      %p125 = scmp.eq.s32.totalorder %s26, 3
      %p126 = scmp.ne.s32.totalorder %s121, %s123
      %p127 = scmp.eq.s32.totalorder %s26, 0
      %p128 = por %p126, %p127
      %p129 = scmp.ne.s32.totalorder %s121, %s123
      %p130 = scmp.eq.s32.totalorder %s31, 3
      %p131 = por %p129, %p130
      %p132 = scmp.ne.s32.totalorder %s123, %s124
      %p133 = scmp.eq.s32.totalorder %s31, 0
      %p134 = por %p132, %p133
      %p135 = scmp.ne.s32.totalorder %s123, %s124
      %p136 = scmp.eq.s32.totalorder %s32, 3
      %p137 = por %p135, %p136
      %p139 = scmp.ne.s32.totalorder %s124, %s138
      %p140 = scmp.eq.s32.totalorder %s32, 0
      %p141 = por %p139, %p140
      %s143 = sadd.s32 %s142, 1
      %p146 = scmp.eq.s32.totalorder %s26, 3
      %p147 = scmp.ne.s32.totalorder %s142, %s144
      %p148 = scmp.eq.s32.totalorder %s26, 0
      %p149 = por %p147, %p148
      %p150 = scmp.ne.s32.totalorder %s142, %s144
      %p151 = scmp.eq.s32.totalorder %s31, 3
      %p152 = por %p150, %p151
      %p153 = scmp.ne.s32.totalorder %s144, %s145
      %p154 = scmp.eq.s32.totalorder %s31, 0
      %p155 = por %p153, %p154
      %p156 = scmp.ne.s32.totalorder %s144, %s145
      %p157 = scmp.eq.s32.totalorder %s32, 3
      %p158 = por %p156, %p157
      %p160 = scmp.ne.s32.totalorder %s145, %s159
      %p161 = scmp.eq.s32.totalorder %s32, 0
      %p162 = por %p160, %p161
      %s164 = sadd.s32 %s163, 1
      %p167 = scmp.eq.s32.totalorder %s26, 3
      %p168 = scmp.ne.s32.totalorder %s163, %s165
      %p169 = scmp.eq.s32.totalorder %s26, 0
      %p170 = por %p168, %p169
      %p171 = scmp.ne.s32.totalorder %s163, %s165
      %p172 = scmp.eq.s32.totalorder %s31, 3
      %p173 = por %p171, %p172
      %p174 = scmp.ne.s32.totalorder %s165, %s166
      %p175 = scmp.eq.s32.totalorder %s31, 0
      %p176 = por %p174, %p175
      %p177 = scmp.ne.s32.totalorder %s165, %s166
      %p178 = scmp.eq.s32.totalorder %s32, 3
      %p179 = por %p177, %p178
      %p181 = scmp.ne.s32.totalorder %s166, %s180
      %p182 = scmp.eq.s32.totalorder %s32, 0
      %p183 = por %p181, %p182
      %s185 = sadd.s32 %s184, 1
      %p188 = scmp.eq.s32.totalorder %s26, 3
      %p189 = scmp.ne.s32.totalorder %s184, %s186
      %p190 = scmp.eq.s32.totalorder %s26, 0
      %p191 = por %p189, %p190
      %p192 = scmp.ne.s32.totalorder %s184, %s186
      %p193 = scmp.eq.s32.totalorder %s31, 3
      %p194 = por %p192, %p193
      %p195 = scmp.ne.s32.totalorder %s186, %s187
      %p196 = scmp.eq.s32.totalorder %s31, 0
      %p197 = por %p195, %p196
      %p198 = scmp.ne.s32.totalorder %s186, %s187
      %p199 = scmp.eq.s32.totalorder %s32, 3
      %p200 = por %p198, %p199
      %p202 = scmp.ne.s32.totalorder %s187, %s201
      %p203 = scmp.eq.s32.totalorder %s32, 0
      %p204 = por %p202, %p203
      %s206 = sadd.s32 %s205, 1
      %p209 = scmp.eq.s32.totalorder %s26, 3
      %p210 = scmp.ne.s32.totalorder %s205, %s207
      %p211 = scmp.eq.s32.totalorder %s26, 0
      %p212 = por %p210, %p211
      %p213 = scmp.ne.s32.totalorder %s205, %s207
      %p214 = scmp.eq.s32.totalorder %s31, 3
      %p215 = por %p213, %p214
      %p216 = scmp.ne.s32.totalorder %s207, %s208
      %p217 = scmp.eq.s32.totalorder %s31, 0
      %p218 = por %p216, %p217
      %p219 = scmp.ne.s32.totalorder %s207, %s208
      %p220 = scmp.eq.s32.totalorder %s32, 3
      %p221 = por %p219, %p220
      %p223 = scmp.ne.s32.totalorder %s208, %s222
      %p224 = scmp.eq.s32.totalorder %s32, 0
      %p225 = por %p223, %p224
      %s227 = sadd.s32 %s226, 1
      %p230 = scmp.eq.s32.totalorder %s26, 3
      %p231 = scmp.ne.s32.totalorder %s226, %s228
      %p232 = scmp.eq.s32.totalorder %s26, 0
      %p233 = por %p231, %p232
      %p234 = scmp.ne.s32.totalorder %s226, %s228
      %p235 = scmp.eq.s32.totalorder %s31, 3
      %p236 = por %p234, %p235
      %p237 = scmp.ne.s32.totalorder %s228, %s229
      %p238 = scmp.eq.s32.totalorder %s31, 0
      %p239 = por %p237, %p238
      %p240 = scmp.ne.s32.totalorder %s228, %s229
      %p241 = scmp.eq.s32.totalorder %s32, 3
      %p242 = por %p240, %p241
      %p244 = scmp.ne.s32.totalorder %s229, %s243
      %p245 = scmp.eq.s32.totalorder %s32, 0
      %p246 = por %p244, %p245
      %s248 = sadd.s32 %s247, 1
      %p251 = scmp.eq.s32.totalorder %s26, 3
      %p252 = scmp.ne.s32.totalorder %s247, %s249
      %p253 = scmp.eq.s32.totalorder %s26, 0
      %p254 = por %p252, %p253
      %p255 = scmp.ne.s32.totalorder %s247, %s249
      %p256 = scmp.eq.s32.totalorder %s31, 3
      %p257 = por %p255, %p256
      %p258 = scmp.ne.s32.totalorder %s249, %s250
      %p259 = scmp.eq.s32.totalorder %s31, 0
      %p260 = por %p258, %p259
      %p261 = scmp.ne.s32.totalorder %s249, %s250
      %p262 = scmp.eq.s32.totalorder %s32, 3
      %p263 = por %p261, %p262
      %p265 = scmp.ne.s32.totalorder %s250, %s264
      %p266 = scmp.eq.s32.totalorder %s32, 0
      %p267 = por %p265, %p266
      %s269 = sadd.s32 %s268, 1
      %p272 = scmp.eq.s32.totalorder %s26, 3
      %p273 = scmp.ne.s32.totalorder %s268, %s270
      %p274 = scmp.eq.s32.totalorder %s26, 0
      %p275 = por %p273, %p274
      %p276 = scmp.ne.s32.totalorder %s268, %s270
      %p277 = scmp.eq.s32.totalorder %s31, 3
      %p278 = por %p276, %p277
      %p279 = scmp.ne.s32.totalorder %s270, %s271
      %p280 = scmp.eq.s32.totalorder %s31, 0
      %p281 = por %p279, %p280
      %p282 = scmp.ne.s32.totalorder %s270, %s271
      %p283 = scmp.eq.s32.totalorder %s32, 3
      %p284 = por %p282, %p283
      %p286 = scmp.ne.s32.totalorder %s271, %s285
      %p287 = scmp.eq.s32.totalorder %s32, 0
      %p288 = por %p286, %p287
      %s290 = sadd.s32 %s289, 1
      %p293 = scmp.eq.s32.totalorder %s26, 3
      %p294 = scmp.ne.s32.totalorder %s289, %s291
      %p295 = scmp.eq.s32.totalorder %s26, 0
      %p296 = por %p294, %p295
      %p297 = scmp.ne.s32.totalorder %s289, %s291
      %p298 = scmp.eq.s32.totalorder %s31, 3
      %p299 = por %p297, %p298
      %p300 = scmp.ne.s32.totalorder %s291, %s292
      %p301 = scmp.eq.s32.totalorder %s31, 0
      %p302 = por %p300, %p301
      %p303 = scmp.ne.s32.totalorder %s291, %s292
      %p304 = scmp.eq.s32.totalorder %s32, 3
      %p305 = por %p303, %p304
      %p307 = scmp.ne.s32.totalorder %s292, %s306
      %p308 = scmp.eq.s32.totalorder %s32, 0
      %p309 = por %p307, %p308
      %s311 = sadd.s32 %s310, 1
      %p314 = scmp.eq.s32.totalorder %s26, 3
      %p315 = scmp.ne.s32.totalorder %s310, %s312
      %p316 = scmp.eq.s32.totalorder %s26, 0
      %p317 = por %p315, %p316
      %p318 = scmp.ne.s32.totalorder %s310, %s312
      %p319 = scmp.eq.s32.totalorder %s31, 3
      %p320 = por %p318, %p319
      %p321 = scmp.ne.s32.totalorder %s312, %s313
      %p322 = scmp.eq.s32.totalorder %s31, 0
      %p323 = por %p321, %p322
      %p324 = scmp.ne.s32.totalorder %s312, %s313
      %p325 = scmp.eq.s32.totalorder %s32, 3
      %p326 = por %p324, %p325
      %p328 = scmp.ne.s32.totalorder %s313, %s327
      %p329 = scmp.eq.s32.totalorder %s32, 0
      %p330 = por %p328, %p329
      %s332 = sadd.s32 %s331, 1
      %p335 = scmp.eq.s32.totalorder %s26, 3
      %p336 = scmp.ne.s32.totalorder %s331, %s333
      %p337 = scmp.eq.s32.totalorder %s26, 0
      %p338 = por %p336, %p337
      %p339 = scmp.ne.s32.totalorder %s331, %s333
      %p340 = scmp.eq.s32.totalorder %s31, 3
      %p341 = por %p339, %p340
      %p342 = scmp.ne.s32.totalorder %s333, %s334
      %p343 = scmp.eq.s32.totalorder %s31, 0
      %p344 = por %p342, %p343
      %p345 = scmp.ne.s32.totalorder %s333, %s334
      %p346 = scmp.eq.s32.totalorder %s32, 3
      %p347 = por %p345, %p346
      %p349 = scmp.ne.s32.totalorder %s334, %s348
      %p350 = scmp.eq.s32.totalorder %s32, 0
      %p351 = por %p349, %p350
      %s353 = sadd.s32 %s352, 1
      %p356 = scmp.eq.s32.totalorder %s26, 3
      %p357 = scmp.ne.s32.totalorder %s352, %s354
      %p358 = scmp.eq.s32.totalorder %s26, 0
      %p359 = por %p357, %p358
      %p360 = scmp.ne.s32.totalorder %s352, %s354
      %p361 = scmp.eq.s32.totalorder %s31, 3
      %p362 = por %p360, %p361
      %p363 = scmp.ne.s32.totalorder %s354, %s355
      %p364 = scmp.eq.s32.totalorder %s31, 0
      %p365 = por %p363, %p364
      %p366 = scmp.ne.s32.totalorder %s354, %s355
      %p367 = scmp.eq.s32.totalorder %s32, 3
      %p368 = por %p366, %p367
      %p370 = scmp.ne.s32.totalorder %s355, %s369
      %p371 = scmp.eq.s32.totalorder %s32, 0
      %p372 = por %p370, %p371
      %s374 = sadd.s32 %s373, 1
      %p377 = scmp.eq.s32.totalorder %s26, 3
      %p378 = scmp.ne.s32.totalorder %s373, %s375
      %p379 = scmp.eq.s32.totalorder %s26, 0
      %p380 = por %p378, %p379
      %p381 = scmp.ne.s32.totalorder %s373, %s375
      %p382 = scmp.eq.s32.totalorder %s31, 3
      %p383 = por %p381, %p382
      %p384 = scmp.ne.s32.totalorder %s375, %s376
      %p385 = scmp.eq.s32.totalorder %s31, 0
      %p386 = por %p384, %p385
      %p387 = scmp.ne.s32.totalorder %s375, %s376
      %p388 = scmp.eq.s32.totalorder %s32, 3
      %p389 = por %p387, %p388
      %p391 = scmp.ne.s32.totalorder %s376, %s390
      %p392 = scmp.eq.s32.totalorder %s32, 0
      %p393 = por %p391, %p392
      %s395 = sadd.s32 %s394, 1
      %p398 = scmp.eq.s32.totalorder %s26, 3
      %p399 = scmp.ne.s32.totalorder %s394, %s396
      %p400 = scmp.eq.s32.totalorder %s26, 0
      %p401 = por %p399, %p400
      %p402 = scmp.ne.s32.totalorder %s394, %s396
      %p403 = scmp.eq.s32.totalorder %s31, 3
      %p404 = por %p402, %p403
      %p405 = scmp.ne.s32.totalorder %s396, %s397
      %p406 = scmp.eq.s32.totalorder %s31, 0
      %p407 = por %p405, %p406
      %p408 = scmp.ne.s32.totalorder %s396, %s397
      %p409 = scmp.eq.s32.totalorder %s32, 3
      %p410 = por %p408, %p409
      %p412 = scmp.ne.s32.totalorder %s397, %s411
      %p413 = scmp.eq.s32.totalorder %s32, 0
      %p414 = por %p412, %p413
      %s416 = sadd.s32 %s415, 1
      %p419 = scmp.eq.s32.totalorder %s26, 3
      %p420 = scmp.ne.s32.totalorder %s415, %s417
      %p421 = scmp.eq.s32.totalorder %s26, 0
      %p422 = por %p420, %p421
      %p423 = scmp.ne.s32.totalorder %s415, %s417
      %p424 = scmp.eq.s32.totalorder %s31, 3
      %p425 = por %p423, %p424
      %p426 = scmp.ne.s32.totalorder %s417, %s418
      %p427 = scmp.eq.s32.totalorder %s31, 0
      %p428 = por %p426, %p427
      %p429 = scmp.ne.s32.totalorder %s417, %s418
      %p430 = scmp.eq.s32.totalorder %s32, 3
      %p431 = por %p429, %p430
      %p433 = scmp.ne.s32.totalorder %s418, %s432
      %p434 = scmp.eq.s32.totalorder %s32, 0
      %p435 = por %p433, %p434
      %s437 = sadd.s32 %s436, 1
      %p440 = scmp.eq.s32.totalorder %s26, 3
      %p441 = scmp.ne.s32.totalorder %s436, %s438
      %p442 = scmp.eq.s32.totalorder %s26, 0
      %p443 = por %p441, %p442
      %p444 = scmp.ne.s32.totalorder %s436, %s438
      %p445 = scmp.eq.s32.totalorder %s31, 3
      %p446 = por %p444, %p445
      %p447 = scmp.ne.s32.totalorder %s438, %s439
      %p448 = scmp.eq.s32.totalorder %s31, 0
      %p449 = por %p447, %p448
      %p450 = scmp.ne.s32.totalorder %s438, %s439
      %p451 = scmp.eq.s32.totalorder %s32, 3
      %p452 = por %p450, %p451
      %p454 = scmp.ne.s32.totalorder %s439, %s453
      %p455 = scmp.eq.s32.totalorder %s32, 0
      %p456 = por %p454, %p455
      %s458 = sadd.s32 %s457, 1
      %p461 = scmp.eq.s32.totalorder %s26, 3
      %p462 = scmp.ne.s32.totalorder %s457, %s459
      %p463 = scmp.eq.s32.totalorder %s26, 0
      %p464 = por %p462, %p463
      %p465 = scmp.ne.s32.totalorder %s457, %s459
      %p466 = scmp.eq.s32.totalorder %s31, 3
      %p467 = por %p465, %p466
      %p468 = scmp.ne.s32.totalorder %s459, %s460
      %p469 = scmp.eq.s32.totalorder %s31, 0
      %p470 = por %p468, %p469
      %p471 = scmp.ne.s32.totalorder %s459, %s460
      %p472 = scmp.eq.s32.totalorder %s32, 3
      %p473 = por %p471, %p472
      %p475 = scmp.ne.s32.totalorder %s460, %s474
      %p476 = scmp.eq.s32.totalorder %s32, 0
      %p477 = por %p475, %p476
      %s478 = ssub.s32 %s33, %s45
      %p479 = scmp.eq.s32.totalorder %s478, 0
      %s481 = sadd.s32 %s480, 1
      %s482 = scalar_select %p479, %s480, %s481
      %p485 = pneg %p479
      %p486 = scmp.eq.s32.totalorder %s26, 3
      %p487 = por %p485, %p486
      %p488 = scmp.ne.s32.totalorder %s480, %s483
      %p489 = scmp.eq.s32.totalorder %s26, 0
      %p490 = por %p488, %p489
      %p491 = scmp.ne.s32.totalorder %s480, %s483
      %p492 = scmp.eq.s32.totalorder %s31, 3
      %p493 = por %p491, %p492
      %p494 = scmp.ne.s32.totalorder %s483, %s484
      %p495 = scmp.eq.s32.totalorder %s31, 0
      %p496 = por %p494, %p495
      %p497 = scmp.ne.s32.totalorder %s483, %s484
      %p498 = scmp.eq.s32.totalorder %s32, 3
      %p499 = por %p497, %p498
      %p501 = scmp.ne.s32.totalorder %s484, %s500
      %p502 = scmp.eq.s32.totalorder %s32, 0
      %p503 = por %p501, %p502
      %p504 = scmp.le.s32.totalorder 1, %s26
      %p505 = scmp.lt.s32.totalorder %s26, 5
      %p506 = pnand %p504, %p505
      %p507 = pneg %p506
      // Predicated region
      $region9: #{attentive_classifier.1} parent=5 // pred_check
        _
      $region10: #{attentive_classifier.1} parent=5 // pred_check_branch
        %509 = sbr.rel (%p506) target = $region12
      $region11: #{attentive_classifier.1} parent=5 // pred_region
        %s510 = ssub.s32 %s26, 1
        // Predicated region
        $region13: #{attentive_classifier.1} parent=11 // pred_check
          %p511 = pneg %p113
        $region14: #{attentive_classifier.1} parent=11 // pred_check_branch
          %513 = sbr.rel (%p511) target = $region16
        $region15: #{attentive_classifier.1} parent=11 // pred_region
          _
        $region16: #{attentive_classifier.1} parent=11 // pred_fallthru
          _
        // Predicated region
        $region17: #{attentive_classifier.1} parent=11 // pred_check
          %p514 = pneg %p134
        $region18: #{attentive_classifier.1} parent=11 // pred_check_branch
          %516 = sbr.rel (%p514) target = $region20
        $region19: #{attentive_classifier.1} parent=11 // pred_region
          _
        $region20: #{attentive_classifier.1} parent=11 // pred_fallthru
          _
        // Predicated region
        $region21: #{attentive_classifier.1} parent=11 // pred_check
          %p517 = pneg %p155
        $region22: #{attentive_classifier.1} parent=11 // pred_check_branch
          %519 = sbr.rel (%p517) target = $region24
        $region23: #{attentive_classifier.1} parent=11 // pred_region
          _
        $region24: #{attentive_classifier.1} parent=11 // pred_fallthru
          _
        // Predicated region
        $region25: #{attentive_classifier.1} parent=11 // pred_check
          %p520 = pneg %p176
        $region26: #{attentive_classifier.1} parent=11 // pred_check_branch
          %522 = sbr.rel (%p520) target = $region28
        $region27: #{attentive_classifier.1} parent=11 // pred_region
          _
        $region28: #{attentive_classifier.1} parent=11 // pred_fallthru
          _
        // Predicated region
        $region29: #{attentive_classifier.1} parent=11 // pred_check
          %p523 = pneg %p197
        $region30: #{attentive_classifier.1} parent=11 // pred_check_branch
          %525 = sbr.rel (%p523) target = $region32
        $region31: #{attentive_classifier.1} parent=11 // pred_region
          _
        $region32: #{attentive_classifier.1} parent=11 // pred_fallthru
          _
        // Predicated region
        $region33: #{attentive_classifier.1} parent=11 // pred_check
          %p526 = pneg %p218
        $region34: #{attentive_classifier.1} parent=11 // pred_check_branch
          %528 = sbr.rel (%p526) target = $region36
        $region35: #{attentive_classifier.1} parent=11 // pred_region
          _
        $region36: #{attentive_classifier.1} parent=11 // pred_fallthru
          _
        // Predicated region
        $region37: #{attentive_classifier.1} parent=11 // pred_check
          %p529 = pneg %p239
        $region38: #{attentive_classifier.1} parent=11 // pred_check_branch
          %531 = sbr.rel (%p529) target = $region40
        $region39: #{attentive_classifier.1} parent=11 // pred_region
          _
        $region40: #{attentive_classifier.1} parent=11 // pred_fallthru
          _
        // Predicated region
        $region41: #{attentive_classifier.1} parent=11 // pred_check
          %p532 = pneg %p260
        $region42: #{attentive_classifier.1} parent=11 // pred_check_branch
          %534 = sbr.rel (%p532) target = $region44
        $region43: #{attentive_classifier.1} parent=11 // pred_region
          _
        $region44: #{attentive_classifier.1} parent=11 // pred_fallthru
          _
        // Predicated region
        $region45: #{attentive_classifier.1} parent=11 // pred_check
          %p535 = pneg %p281
        $region46: #{attentive_classifier.1} parent=11 // pred_check_branch
          %537 = sbr.rel (%p535) target = $region48
        $region47: #{attentive_classifier.1} parent=11 // pred_region
          _
        $region48: #{attentive_classifier.1} parent=11 // pred_fallthru
          _
        // Predicated region
        $region49: #{attentive_classifier.1} parent=11 // pred_check
          %p538 = pneg %p302
        $region50: #{attentive_classifier.1} parent=11 // pred_check_branch
          %540 = sbr.rel (%p538) target = $region52
        $region51: #{attentive_classifier.1} parent=11 // pred_region
          _
        $region52: #{attentive_classifier.1} parent=11 // pred_fallthru
          _
        // Predicated region
        $region53: #{attentive_classifier.1} parent=11 // pred_check
          %p541 = pneg %p323
        $region54: #{attentive_classifier.1} parent=11 // pred_check_branch
          %543 = sbr.rel (%p541) target = $region56
        $region55: #{attentive_classifier.1} parent=11 // pred_region
          _
        $region56: #{attentive_classifier.1} parent=11 // pred_fallthru
          _
        // Predicated region
        $region57: #{attentive_classifier.1} parent=11 // pred_check
          %p544 = pneg %p344
        $region58: #{attentive_classifier.1} parent=11 // pred_check_branch
          %546 = sbr.rel (%p544) target = $region60
        $region59: #{attentive_classifier.1} parent=11 // pred_region
          _
        $region60: #{attentive_classifier.1} parent=11 // pred_fallthru
          _
        // Predicated region
        $region61: #{attentive_classifier.1} parent=11 // pred_check
          %p547 = pneg %p365
        $region62: #{attentive_classifier.1} parent=11 // pred_check_branch
          %549 = sbr.rel (%p547) target = $region64
        $region63: #{attentive_classifier.1} parent=11 // pred_region
          _
        $region64: #{attentive_classifier.1} parent=11 // pred_fallthru
          _
        // Predicated region
        $region65: #{attentive_classifier.1} parent=11 // pred_check
          %p550 = pneg %p386
        $region66: #{attentive_classifier.1} parent=11 // pred_check_branch
          %552 = sbr.rel (%p550) target = $region68
        $region67: #{attentive_classifier.1} parent=11 // pred_region
          _
        $region68: #{attentive_classifier.1} parent=11 // pred_fallthru
          _
        // Predicated region
        $region69: #{attentive_classifier.1} parent=11 // pred_check
          %p553 = pneg %p407
        $region70: #{attentive_classifier.1} parent=11 // pred_check_branch
          %555 = sbr.rel (%p553) target = $region72
        $region71: #{attentive_classifier.1} parent=11 // pred_region
          _
        $region72: #{attentive_classifier.1} parent=11 // pred_fallthru
          _
        // Predicated region
        $region73: #{attentive_classifier.1} parent=11 // pred_check
          %p556 = pneg %p428
        $region74: #{attentive_classifier.1} parent=11 // pred_check_branch
          %558 = sbr.rel (%p556) target = $region76
        $region75: #{attentive_classifier.1} parent=11 // pred_region
          _
        $region76: #{attentive_classifier.1} parent=11 // pred_fallthru
          _
        // Predicated region
        $region77: #{attentive_classifier.1} parent=11 // pred_check
          %p559 = pneg %p449
        $region78: #{attentive_classifier.1} parent=11 // pred_check_branch
          %561 = sbr.rel (%p559) target = $region80
        $region79: #{attentive_classifier.1} parent=11 // pred_region
          _
        $region80: #{attentive_classifier.1} parent=11 // pred_fallthru
          _
        // Predicated region
        $region81: #{attentive_classifier.1} parent=11 // pred_check
          %p562 = pneg %p470
        $region82: #{attentive_classifier.1} parent=11 // pred_check_branch
          %564 = sbr.rel (%p562) target = $region84
        $region83: #{attentive_classifier.1} parent=11 // pred_region
          _
        $region84: #{attentive_classifier.1} parent=11 // pred_fallthru
          _
      $region12: #{attentive_classifier.1} parent=5 // pred_fallthru
        _
      %p565 = scmp.lt.s32.totalorder %s26, 4
      // Predicated region
      $region85: #{attentive_classifier.1} parent=5 // pred_check
        %p566 = pneg %p565
      $region86: #{attentive_classifier.1} parent=5 // pred_check_branch
        %568 = sbr.rel (%p566) target = $region88
      $region87: #{attentive_classifier.1} parent=5 // pred_region
        // Predicated region
        $region89: #{attentive_classifier.1} parent=87 // pred_check
          %p569 = pneg %p60
        $region90: #{attentive_classifier.1} parent=87 // pred_check_branch
          %571 = sbr.rel (%p569) target = $region92
        $region91: #{attentive_classifier.1} parent=87 // pred_region
          %s572 = sand.u32 %s50, 1
          %s573 = sand.u32 %s50, 1
          %s574 = smul.addr %s573, 64
          %s575 = scalar_lea.vmem [#allocation5], %s574
          %s576 = smul.u32 8, %s33
          %s577 = smul.u32 2, %s34
          %s578 = smul.addr %s576, 4
          %s579 = sadd.s32 %s577, %s578
          %s580 = smul.addr %s579, 4
          %s581 = scalar_lea.vmem %s0, %s580
          // Predicated region
          $region93: #{attentive_classifier.1} parent=91 // pred_check
            _
          $region94: #{attentive_classifier.1} parent=91 // pred_check_branch
            %583 = sbr.rel (0) target = $region96
          $region95: #{attentive_classifier.1} parent=91 // pred_region
            // Predicated region
            $region97: #{attentive_classifier.1} parent=95 // pred_check
              _
            $region98: #{attentive_classifier.1} parent=95 // pred_check_branch
              %585 = sbr.rel target = $region100
            $region99: #{attentive_classifier.1} parent=95 // pred_region
              // Predicated region
              $region112: #{attentive_classifier.1} parent=99 // pred_check
                _
              $region113: #{attentive_classifier.1} parent=99 // pred_check_branch
                %631 = sbr.rel (0) target = $region115
              $region114: #{attentive_classifier.1} parent=99 // pred_region
                loop: start=0, step=1, limit=1
                $region116: #{attentive_classifier.1} parent=114 // loop_pre_header
                  _
                $region117: #{attentive_classifier.1} parent=114 // loop_header
                  %s633 = sphi 0, %s637
                  %p634 = scmp.ge.s32.totalorder %s633, 1
                  %s638 = sphi %s581, %s581
                  %s639 = sphi %s575, %s575
                $region118: #{attentive_classifier.1} parent=114 // loop_header_branch
                  %636 = sbr.rel (%p634) target = $region122
                $region119: #{attentive_classifier.1} parent=114 // loop_body
                  _
                $region120: #{attentive_classifier.1} parent=114 // loop_footer
                  %s637 = sadd.s32 1, %s633
                $region121: #{attentive_classifier.1} parent=114 // loop_footer_branch
                  %632 = sbr.rel target = $region117
                $region122: #{attentive_classifier.1} parent=114 // loop_exit
                  _
                %s641 = ssub.s32 16, 1
                loop: start=0, step=1, limit=1
                $region123: #{attentive_classifier.1} parent=114 // loop_pre_header
                  _
                $region124: #{attentive_classifier.1} parent=114 // loop_header
                  %s643 = sphi 0, %s647
                  %p644 = scmp.ge.s32.totalorder %s643, 1
                  %s648 = sphi %s581, %s581
                  %s649 = sphi %s575, %s575
                $region125: #{attentive_classifier.1} parent=114 // loop_header_branch
                  %646 = sbr.rel (%p644) target = $region129
                $region126: #{attentive_classifier.1} parent=114 // loop_body
                  %v650 = vld [vmem:[%s648] sm:%s641]
                  %651 = vst [vmem:[%s649] sm:%s641] %v650
                  %v652 = vld [vmem:[%s648 + $0x4] sm:%s641]
                  %653 = vst [vmem:[%s649 + $0x4] sm:%s641] %v652
                  %v654 = vld [vmem:[%s648 + $0x10] sm:%s641]
                  %655 = vst [vmem:[%s649 + $0x8] sm:%s641] %v654
                  %v656 = vld [vmem:[%s648 + $0x14] sm:%s641]
                  %657 = vst [vmem:[%s649 + $0xc] sm:%s641] %v656
                  %v658 = vld [vmem:[%s648 + $0x20] sm:%s641]
                  %659 = vst [vmem:[%s649 + $0x10] sm:%s641] %v658
                  %v660 = vld [vmem:[%s648 + $0x24] sm:%s641]
                  %661 = vst [vmem:[%s649 + $0x14] sm:%s641] %v660
                  %v662 = vld [vmem:[%s648 + $0x30] sm:%s641]
                  %663 = vst [vmem:[%s649 + $0x18] sm:%s641] %v662
                  %v664 = vld [vmem:[%s648 + $0x34] sm:%s641]
                  %665 = vst [vmem:[%s649 + $0x1c] sm:%s641] %v664
                  %v666 = vld [vmem:[%s648 + $0x40] sm:%s641]
                  %667 = vst [vmem:[%s649 + $0x20] sm:%s641] %v666
                  %v668 = vld [vmem:[%s648 + $0x44] sm:%s641]
                  %669 = vst [vmem:[%s649 + $0x24] sm:%s641] %v668
                  %v670 = vld [vmem:[%s648 + $0x50] sm:%s641]
                  %671 = vst [vmem:[%s649 + $0x28] sm:%s641] %v670
                  %v672 = vld [vmem:[%s648 + $0x54] sm:%s641]
                  %673 = vst [vmem:[%s649 + $0x2c] sm:%s641] %v672
                  %v674 = vld [vmem:[%s648 + $0x60] sm:%s641]
                  %675 = vst [vmem:[%s649 + $0x30] sm:%s641] %v674
                  %v676 = vld [vmem:[%s648 + $0x64] sm:%s641]
                  %677 = vst [vmem:[%s649 + $0x34] sm:%s641] %v676
                  %v678 = vld [vmem:[%s648 + $0x70] sm:%s641]
                  %679 = vst [vmem:[%s649 + $0x38] sm:%s641] %v678
                  %v680 = vld [vmem:[%s648 + $0x74] sm:%s641]
                  %681 = vst [vmem:[%s649 + $0x3c] sm:%s641] %v680
                $region127: #{attentive_classifier.1} parent=114 // loop_footer
                  %s647 = sadd.s32 1, %s643
                $region128: #{attentive_classifier.1} parent=114 // loop_footer_branch
                  %642 = sbr.rel target = $region124
                $region129: #{attentive_classifier.1} parent=114 // loop_exit
                  _
              $region115: #{attentive_classifier.1} parent=99 // pred_fallthru
                _
            $region100: #{attentive_classifier.1} parent=95 // pred_fallthru
              _
            // Predicated region
            $region101: #{attentive_classifier.1} parent=95 // pred_check
              _
            $region102: #{attentive_classifier.1} parent=95 // pred_check_branch
              %587 = sbr.rel (0) target = $region104
            $region103: #{attentive_classifier.1} parent=95 // pred_region
              %s589 = ssub.s32 16, 1
              loop: start=0, step=1, limit=1
              $region105: #{attentive_classifier.1} parent=103 // loop_pre_header
                _
              $region106: #{attentive_classifier.1} parent=103 // loop_header
                %s591 = sphi 0, %s595
                %p592 = scmp.ge.s32.totalorder %s591, 1
                %s596 = sphi %s581, %s581
                %s597 = sphi %s575, %s575
              $region107: #{attentive_classifier.1} parent=103 // loop_header_branch
                %594 = sbr.rel (%p592) target = $region111
              $region108: #{attentive_classifier.1} parent=103 // loop_body
                %v598 = vld [vmem:[%s596] sm:%s589]
                %599 = vst [vmem:[%s597] sm:%s589] %v598
                %v600 = vld [vmem:[%s596 + $0x4] sm:%s589]
                %601 = vst [vmem:[%s597 + $0x4] sm:%s589] %v600
                %v602 = vld [vmem:[%s596 + $0x10] sm:%s589]
                %603 = vst [vmem:[%s597 + $0x8] sm:%s589] %v602
                %v604 = vld [vmem:[%s596 + $0x14] sm:%s589]
                %605 = vst [vmem:[%s597 + $0xc] sm:%s589] %v604
                %v606 = vld [vmem:[%s596 + $0x20] sm:%s589]
                %607 = vst [vmem:[%s597 + $0x10] sm:%s589] %v606
                %v608 = vld [vmem:[%s596 + $0x24] sm:%s589]
                %609 = vst [vmem:[%s597 + $0x14] sm:%s589] %v608
                %v610 = vld [vmem:[%s596 + $0x30] sm:%s589]
                %611 = vst [vmem:[%s597 + $0x18] sm:%s589] %v610
                %v612 = vld [vmem:[%s596 + $0x34] sm:%s589]
                %613 = vst [vmem:[%s597 + $0x1c] sm:%s589] %v612
                %v614 = vld [vmem:[%s596 + $0x40] sm:%s589]
                %615 = vst [vmem:[%s597 + $0x20] sm:%s589] %v614
                %v616 = vld [vmem:[%s596 + $0x44] sm:%s589]
                %617 = vst [vmem:[%s597 + $0x24] sm:%s589] %v616
                %v618 = vld [vmem:[%s596 + $0x50] sm:%s589]
                %619 = vst [vmem:[%s597 + $0x28] sm:%s589] %v618
                %v620 = vld [vmem:[%s596 + $0x54] sm:%s589]
                %621 = vst [vmem:[%s597 + $0x2c] sm:%s589] %v620
                %v622 = vld [vmem:[%s596 + $0x60] sm:%s589]
                %623 = vst [vmem:[%s597 + $0x30] sm:%s589] %v622
                %v624 = vld [vmem:[%s596 + $0x64] sm:%s589]
                %625 = vst [vmem:[%s597 + $0x34] sm:%s589] %v624
                %v626 = vld [vmem:[%s596 + $0x70] sm:%s589]
                %627 = vst [vmem:[%s597 + $0x38] sm:%s589] %v626
                %v628 = vld [vmem:[%s596 + $0x74] sm:%s589]
                %629 = vst [vmem:[%s597 + $0x3c] sm:%s589] %v628
              $region109: #{attentive_classifier.1} parent=103 // loop_footer
                %s595 = sadd.s32 1, %s591
              $region110: #{attentive_classifier.1} parent=103 // loop_footer_branch
                %590 = sbr.rel target = $region106
              $region111: #{attentive_classifier.1} parent=103 // loop_exit
                _
            $region104: #{attentive_classifier.1} parent=95 // pred_fallthru
              _
          $region96: #{attentive_classifier.1} parent=91 // pred_fallthru
            _
          %682 = vnop
        $region92: #{attentive_classifier.1} parent=87 // pred_fallthru
          _
        // Predicated region
        $region130: #{attentive_classifier.1} parent=87 // pred_check
          %p683 = pneg %p86
        $region131: #{attentive_classifier.1} parent=87 // pred_check_branch
          %685 = sbr.rel (%p683) target = $region133
        $region132: #{attentive_classifier.1} parent=87 // pred_region
          %p686 = scmp.lt.s32.totalorder %s33, 1
          %s687 = scalar_select %p686, %s33, 1
          %s688 = smul.addr %s687, 8
          %s689 = scalar_lea.vmem %s1, %s688
        $region133: #{attentive_classifier.1} parent=87 // pred_fallthru
          _
      $region88: #{attentive_classifier.1} parent=5 // pred_fallthru
        _
      %p690 = scmp.le.s32.totalorder 1, %s26
      %p691 = scmp.lt.s32.totalorder %s26, 5
      %p692 = pnand %p690, %p691
      %p693 = pneg %p692
      // Predicated region
      $region134: #{attentive_classifier.1} parent=5 // pred_check
        _
      $region135: #{attentive_classifier.1} parent=5 // pred_check_branch
        %695 = sbr.rel (%p692) target = $region137
      $region136: #{attentive_classifier.1} parent=5 // pred_region
        %s696 = ssub.s32 %s26, 1
        %s697 = sand.u32 %s53, 1
        %s698 = sand.u32 %s53, 1
        %s699 = smul.addr %s698, 64
        %s700 = scalar_lea.vmem [#allocation5], %s699
        // Predicated region
        $region138: #{attentive_classifier.1} parent=136 // pred_check
          %p701 = pneg %p66
        $region139: #{attentive_classifier.1} parent=136 // pred_check_branch
          %703 = sbr.rel (%p701) target = $region141
        $region140: #{attentive_classifier.1} parent=136 // pred_region
          _
        $region141: #{attentive_classifier.1} parent=136 // pred_fallthru
          _
        %s704 = sand.u32 %s53, 1
        %s705 = sand.u32 %s53, 1
        %s706 = smul.addr %s705, 64
        %s707 = scalar_lea.vmem [#allocation5], %s706
        %p708 = pneg %p66
        %p709 = pneg %p63
        %p710 = scmp.lt.s32.totalorder %s35, 1
        %s711 = scalar_select %p710, %s35, 1
        %s712 = smul.addr %s711, 8
        %s713 = scalar_lea.vmem %s1, %s712
        %p714 = pneg %p92
        %p715 = pneg %p89
        %p716 = pneg %p113
        %p717 = pneg %p110
        %p718 = pneg %p134
        %p719 = pneg %p131
        %p720 = pneg %p155
        %p721 = pneg %p152
        %p722 = pneg %p176
        %p723 = pneg %p173
        %p724 = pneg %p197
        %p725 = pneg %p194
        %p726 = pneg %p218
        %p727 = pneg %p215
        %p728 = pneg %p239
        %p729 = pneg %p236
        %p730 = pneg %p260
        %p731 = pneg %p257
        %p732 = pneg %p281
        %p733 = pneg %p278
        %p734 = pneg %p302
        %p735 = pneg %p299
        %p736 = pneg %p323
        %p737 = pneg %p320
        %p738 = pneg %p344
        %p739 = pneg %p341
        %p740 = pneg %p365
        %p741 = pneg %p362
        %p742 = pneg %p386
        %p743 = pneg %p383
        %p744 = pneg %p407
        %p745 = pneg %p404
        %p746 = pneg %p428
        %p747 = pneg %p425
        %p748 = pneg %p449
        %p749 = pneg %p446
        %p750 = pneg %p470
        %p751 = pneg %p467
        %p752 = pneg %p496
        %p753 = pneg %p493
        %p754 = scmp.lt.s32.totalorder %s35, 1
        %s755 = scalar_select %p754, %s35, 1
        %s756 = smul.addr %s755, 8
        %s757 = scalar_lea.vmem %s20, %s756
        %s758 = smul.u32 8, %s35
        %s759 = smul.u32 2, %s36
        %p760 = scmp.lt.s32.totalorder %s35, 1
        %s761 = scalar_select %p760, %s35, 1
        %s762 = smul.addr %s761, 8
        %s763 = scalar_lea.vmem %s1, %s762
        %p764 = scmp.lt.s32.totalorder %s35, 1
        %s765 = scalar_select %p764, %s35, 1
        %s766 = smul.addr %s765, 8
        %s767 = scalar_lea.vmem %s20, %s766
        %p769 = scmp.eq.s32.totalorder %s36, 0
        // Predicated region
        $region142: #{attentive_classifier.1} parent=136 // pred_check
          %p770 = pneg %p769
        $region143: #{attentive_classifier.1} parent=136 // pred_check_branch
          %772 = sbr.rel (%p770) target = $region145
        $region144: #{attentive_classifier.1} parent=136 // pred_region
          %vm773 = vcmask 64512
          %774 = vst.msk [vmem:[#allocation2] sm:$0xff] %vm773, -1e+30
          %775 = vst.msk [vmem:[#allocation3] sm:$0xff] %vm773, 0.0
          %vm776 = vcmask 261120
          %777 = vst.msk [vmem:[#allocation4] sm:$0xff] %vm776, 0.0
          %778 = vst.msk [vmem:[#allocation4 + $0x8] sm:$0xff] %vm776, 0.0
          %779 = vst.msk [vmem:[#allocation4 + $0x10] sm:$0xff] %vm776, 0.0
          %780 = vst.msk [vmem:[#allocation4 + $0x18] sm:$0xff] %vm776, 0.0
          %781 = vst.msk [vmem:[#allocation4 + $0x20] sm:$0xff] %vm776, 0.0
          %782 = vst.msk [vmem:[#allocation4 + $0x28] sm:$0xff] %vm776, 0.0
          %783 = vst.msk [vmem:[#allocation4 + $0x30] sm:$0xff] %vm776, 0.0
          %784 = vst.msk [vmem:[#allocation4 + $0x38] sm:$0xff] %vm776, 0.0
        $region145: #{attentive_classifier.1} parent=136 // pred_fallthru
          _
        %v785 = vld [vmem:[%s700] sm:$0xf]
        %v786 = vld [vmem:[%s700 + $0x4] sm:$0xf]
        %v787 = vld [vmem:[%s700 + $0x8] sm:$0xf]
        %v788 = vld [vmem:[%s700 + $0xc] sm:$0xf]
        %v789 = vld [vmem:[%s700 + $0x10] sm:$0xf]
        %v790 = vld [vmem:[%s700 + $0x14] sm:$0xf]
        %v791 = vld [vmem:[%s700 + $0x18] sm:$0xf]
        %v792 = vld [vmem:[%s700 + $0x1c] sm:$0xf]
        %v793 = vld [vmem:[%s700 + $0x20] sm:$0xf]
        %v794 = vld [vmem:[%s700 + $0x24] sm:$0xf]
        %v795 = vld [vmem:[%s700 + $0x28] sm:$0xf]
        %v796 = vld [vmem:[%s700 + $0x2c] sm:$0xf]
        %v797 = vld [vmem:[%s700 + $0x30] sm:$0xf]
        %v798 = vld [vmem:[%s700 + $0x34] sm:$0xf]
        %v799 = vld [vmem:[%s700 + $0x38] sm:$0xf]
        %v800 = vld [vmem:[%s700 + $0x3c] sm:$0xf]
        %v801 = vunpack.c.l.bf16 %v785
        %v802 = vunpack.c.l.bf16 %v786
        %v803 = vunpack.c.l.bf16 %v787
        %v804 = vunpack.c.l.bf16 %v788
        %v805 = vunpack.c.l.bf16 %v789
        %v806 = vunpack.c.l.bf16 %v790
        %v807 = vunpack.c.l.bf16 %v791
        %v808 = vunpack.c.l.bf16 %v792
        %v809 = vunpack.c.l.bf16 %v793
        %v810 = vunpack.c.l.bf16 %v794
        %v811 = vunpack.c.l.bf16 %v795
        %v812 = vunpack.c.l.bf16 %v796
        %v813 = vunpack.c.l.bf16 %v797
        %v814 = vunpack.c.l.bf16 %v798
        %v815 = vunpack.c.l.bf16 %v799
        %v816 = vunpack.c.l.bf16 %v800
        %v817 = vld [vmem:[%s2] sm:$0x1]
        %v818 = vld [vmem:[%s3] sm:$0x1]
        %vm819 = vcmask 261120
        %v820 = vsel %vm819, %v801, 0.0
        %821 = vadd.xlane.f32.xlu0 %v820
        %v822 = vpop.xlane.xlu0 %821
        %v823 = vsel %vm819, %v802, 0.0
        %824 = vadd.xlane.f32.xlu0 %v823
        %v825 = vpop.xlane.xlu0 %824
        %v826 = vsel %vm819, %v803, 0.0
        %827 = vadd.xlane.f32.xlu0 %v826
        %v828 = vpop.xlane.xlu0 %827
        %v829 = vsel %vm819, %v804, 0.0
        %830 = vadd.xlane.f32.xlu0 %v829
        %v831 = vpop.xlane.xlu0 %830
        %v832 = vsel %vm819, %v805, 0.0
        %833 = vadd.xlane.f32.xlu0 %v832
        %v834 = vpop.xlane.xlu0 %833
        %v835 = vsel %vm819, %v806, 0.0
        %836 = vadd.xlane.f32.xlu0 %v835
        %v837 = vpop.xlane.xlu0 %836
        %v838 = vsel %vm819, %v807, 0.0
        %839 = vadd.xlane.f32.xlu0 %v838
        %v840 = vpop.xlane.xlu0 %839
        %v841 = vsel %vm819, %v808, 0.0
        %842 = vadd.xlane.f32.xlu0 %v841
        %v843 = vpop.xlane.xlu0 %842
        %v844 = vsel %vm819, %v809, 0.0
        %845 = vadd.xlane.f32.xlu0 %v844
        %v846 = vpop.xlane.xlu0 %845
        %v847 = vsel %vm819, %v810, 0.0
        %848 = vadd.xlane.f32.xlu0 %v847
        %v849 = vpop.xlane.xlu0 %848
        %v850 = vsel %vm819, %v811, 0.0
        %851 = vadd.xlane.f32.xlu0 %v850
        %v852 = vpop.xlane.xlu0 %851
        %v853 = vsel %vm819, %v812, 0.0
        %854 = vadd.xlane.f32.xlu0 %v853
        %v855 = vpop.xlane.xlu0 %854
        %v856 = vsel %vm819, %v813, 0.0
        %857 = vadd.xlane.f32.xlu0 %v856
        %v858 = vpop.xlane.xlu0 %857
        %v859 = vsel %vm819, %v814, 0.0
        %860 = vadd.xlane.f32.xlu0 %v859
        %v861 = vpop.xlane.xlu0 %860
        %v862 = vsel %vm819, %v815, 0.0
        %863 = vadd.xlane.f32.xlu0 %v862
        %v864 = vpop.xlane.xlu0 %863
        %v865 = vsel %vm819, %v816, 0.0
        %866 = vadd.xlane.f32.xlu0 %v865
        %v867 = vpop.xlane.xlu0 %866
        %v868 = vrcp.pop 32.0
        %v869 = vmul.f32 %v822, %v868
        %v870 = vmul.f32 %v825, %v868
        %v871 = vmul.f32 %v828, %v868
        %v872 = vmul.f32 %v831, %v868
        %v873 = vmul.f32 %v834, %v868
        %v874 = vmul.f32 %v837, %v868
        %v875 = vmul.f32 %v840, %v868
        %v876 = vmul.f32 %v843, %v868
        %v877 = vmul.f32 %v846, %v868
        %v878 = vmul.f32 %v849, %v868
        %v879 = vmul.f32 %v852, %v868
        %v880 = vmul.f32 %v855, %v868
        %v881 = vmul.f32 %v858, %v868
        %v882 = vmul.f32 %v861, %v868
        %v883 = vmul.f32 %v864, %v868
        %v884 = vmul.f32 %v867, %v868
        %v885 = vsub.f32 %v801, %v869
        %v886 = vsub.f32 %v802, %v870
        %v887 = vsub.f32 %v803, %v871
        %v888 = vsub.f32 %v804, %v872
        %v889 = vsub.f32 %v805, %v873
        %v890 = vsub.f32 %v806, %v874
        %v891 = vsub.f32 %v807, %v875
        %v892 = vsub.f32 %v808, %v876
        %v893 = vsub.f32 %v809, %v877
        %v894 = vsub.f32 %v810, %v878
        %v895 = vsub.f32 %v811, %v879
        %v896 = vsub.f32 %v812, %v880
        %v897 = vsub.f32 %v813, %v881
        %v898 = vsub.f32 %v814, %v882
        %v899 = vsub.f32 %v815, %v883
        %v900 = vsub.f32 %v816, %v884
        %v901 = vmul.f32 %v885, %v885
        %v902 = vmul.f32 %v886, %v886
        %v903 = vmul.f32 %v887, %v887
        %v904 = vmul.f32 %v888, %v888
        %v905 = vmul.f32 %v889, %v889
        %v906 = vmul.f32 %v890, %v890
        %v907 = vmul.f32 %v891, %v891
        %v908 = vmul.f32 %v892, %v892
        %v909 = vmul.f32 %v893, %v893
        %v910 = vmul.f32 %v894, %v894
        %v911 = vmul.f32 %v895, %v895
        %v912 = vmul.f32 %v896, %v896
        %v913 = vmul.f32 %v897, %v897
        %v914 = vmul.f32 %v898, %v898
        %v915 = vmul.f32 %v899, %v899
        %v916 = vmul.f32 %v900, %v900
        %v917 = vsel %vm819, %v901, 0.0
        %918 = vadd.xlane.f32.xlu0 %v917
        %v919 = vpop.xlane.xlu0 %918
        %v920 = vsel %vm819, %v902, 0.0
        %921 = vadd.xlane.f32.xlu0 %v920
        %v922 = vpop.xlane.xlu0 %921
        %v923 = vsel %vm819, %v903, 0.0
        %924 = vadd.xlane.f32.xlu0 %v923
        %v925 = vpop.xlane.xlu0 %924
        %v926 = vsel %vm819, %v904, 0.0
        %927 = vadd.xlane.f32.xlu0 %v926
        %v928 = vpop.xlane.xlu0 %927
        %v929 = vsel %vm819, %v905, 0.0
        %930 = vadd.xlane.f32.xlu0 %v929
        %v931 = vpop.xlane.xlu0 %930
        %v932 = vsel %vm819, %v906, 0.0
        %933 = vadd.xlane.f32.xlu0 %v932
        %v934 = vpop.xlane.xlu0 %933
        %v935 = vsel %vm819, %v907, 0.0
        %936 = vadd.xlane.f32.xlu0 %v935
        %v937 = vpop.xlane.xlu0 %936
        %v938 = vsel %vm819, %v908, 0.0
        %939 = vadd.xlane.f32.xlu0 %v938
        %v940 = vpop.xlane.xlu0 %939
        %v941 = vsel %vm819, %v909, 0.0
        %942 = vadd.xlane.f32.xlu0 %v941
        %v943 = vpop.xlane.xlu0 %942
        %v944 = vsel %vm819, %v910, 0.0
        %945 = vadd.xlane.f32.xlu0 %v944
        %v946 = vpop.xlane.xlu0 %945
        %v947 = vsel %vm819, %v911, 0.0
        %948 = vadd.xlane.f32.xlu0 %v947
        %v949 = vpop.xlane.xlu0 %948
        %v950 = vsel %vm819, %v912, 0.0
        %951 = vadd.xlane.f32.xlu0 %v950
        %v952 = vpop.xlane.xlu0 %951
        %v953 = vsel %vm819, %v913, 0.0
        %954 = vadd.xlane.f32.xlu0 %v953
        %v955 = vpop.xlane.xlu0 %954
        %v956 = vsel %vm819, %v914, 0.0
        %957 = vadd.xlane.f32.xlu0 %v956
        %v958 = vpop.xlane.xlu0 %957
        %v959 = vsel %vm819, %v915, 0.0
        %960 = vadd.xlane.f32.xlu0 %v959
        %v961 = vpop.xlane.xlu0 %960
        %v962 = vsel %vm819, %v916, 0.0
        %963 = vadd.xlane.f32.xlu0 %v962
        %v964 = vpop.xlane.xlu0 %963
        %v965 = vmul.f32 %v919, %v868
        %v966 = vmul.f32 %v922, %v868
        %v967 = vmul.f32 %v925, %v868
        %v968 = vmul.f32 %v928, %v868
        %v969 = vmul.f32 %v931, %v868
        %v970 = vmul.f32 %v934, %v868
        %v971 = vmul.f32 %v937, %v868
        %v972 = vmul.f32 %v940, %v868
        %v973 = vmul.f32 %v943, %v868
        %v974 = vmul.f32 %v946, %v868
        %v975 = vmul.f32 %v949, %v868
        %v976 = vmul.f32 %v952, %v868
        %v977 = vmul.f32 %v955, %v868
        %v978 = vmul.f32 %v958, %v868
        %v979 = vmul.f32 %v961, %v868
        %v980 = vmul.f32 %v964, %v868
        %v981 = vadd.f32 %v965, 1e-05
        %v982 = vadd.f32 %v966, 1e-05
        %v983 = vadd.f32 %v967, 1e-05
        %v984 = vadd.f32 %v968, 1e-05
        %v985 = vadd.f32 %v969, 1e-05
        %v986 = vadd.f32 %v970, 1e-05
        %v987 = vadd.f32 %v971, 1e-05
        %v988 = vadd.f32 %v972, 1e-05
        %v989 = vadd.f32 %v973, 1e-05
        %v990 = vadd.f32 %v974, 1e-05
        %v991 = vadd.f32 %v975, 1e-05
        %v992 = vadd.f32 %v976, 1e-05
        %v993 = vadd.f32 %v977, 1e-05
        %v994 = vadd.f32 %v978, 1e-05
        %v995 = vadd.f32 %v979, 1e-05
        %v996 = vadd.f32 %v980, 1e-05
        %v997 = vrsqrt.pop %v981
        %v998 = vrsqrt.pop %v982
        %v999 = vrsqrt.pop %v983
        %v1000 = vrsqrt.pop %v984
        %v1001 = vrsqrt.pop %v985
        %v1002 = vrsqrt.pop %v986
        %v1003 = vrsqrt.pop %v987
        %v1004 = vrsqrt.pop %v988
        %v1005 = vrsqrt.pop %v989
        %v1006 = vrsqrt.pop %v990
        %v1007 = vrsqrt.pop %v991
        %v1008 = vrsqrt.pop %v992
        %v1009 = vrsqrt.pop %v993
        %v1010 = vrsqrt.pop %v994
        %v1011 = vrsqrt.pop %v995
        %v1012 = vrsqrt.pop %v996
        %v1013 = vmul.f32 %v885, %v997
        %v1014 = vmul.f32 %v886, %v998
        %v1015 = vmul.f32 %v887, %v999
        %v1016 = vmul.f32 %v888, %v1000
        %v1017 = vmul.f32 %v889, %v1001
        %v1018 = vmul.f32 %v890, %v1002
        %v1019 = vmul.f32 %v891, %v1003
        %v1020 = vmul.f32 %v892, %v1004
        %v1021 = vmul.f32 %v893, %v1005
        %v1022 = vmul.f32 %v894, %v1006
        %v1023 = vmul.f32 %v895, %v1007
        %v1024 = vmul.f32 %v896, %v1008
        %v1025 = vmul.f32 %v897, %v1009
        %v1026 = vmul.f32 %v898, %v1010
        %v1027 = vmul.f32 %v899, %v1011
        %v1028 = vmul.f32 %v900, %v1012
        %v1030 = vlaneseq
        %v1031 = vshrl.u32 %v1030, 7
        %v1032 = vsub.s32 0, %v1031
        %v1033 = vrot.slane %v817, %v1032
        %v1035 = vmul.f32 %v1013, %v1033
        %v1036 = vmul.f32 %v1014, %v1033
        %v1037 = vmul.f32 %v1015, %v1033
        %v1038 = vmul.f32 %v1016, %v1033
        %v1039 = vmul.f32 %v1017, %v1033
        %v1040 = vmul.f32 %v1018, %v1033
        %v1041 = vmul.f32 %v1019, %v1033
        %v1042 = vmul.f32 %v1020, %v1033
        %v1043 = vmul.f32 %v1021, %v1033
        %v1044 = vmul.f32 %v1022, %v1033
        %v1045 = vmul.f32 %v1023, %v1033
        %v1046 = vmul.f32 %v1024, %v1033
        %v1047 = vmul.f32 %v1025, %v1033
        %v1048 = vmul.f32 %v1026, %v1033
        %v1049 = vmul.f32 %v1027, %v1033
        %v1050 = vmul.f32 %v1028, %v1033
        %v1052 = vlaneseq
        %v1053 = vshrl.u32 %v1052, 7
        %v1054 = vsub.s32 0, %v1053
        %v1055 = vrot.slane %v818, %v1054
        %v1057 = vadd.f32 %v1035, %v1055
        %v1058 = vadd.f32 %v1036, %v1055
        %v1059 = vadd.f32 %v1037, %v1055
        %v1060 = vadd.f32 %v1038, %v1055
        %v1061 = vadd.f32 %v1039, %v1055
        %v1062 = vadd.f32 %v1040, %v1055
        %v1063 = vadd.f32 %v1041, %v1055
        %v1064 = vadd.f32 %v1042, %v1055
        %v1065 = vadd.f32 %v1043, %v1055
        %v1066 = vadd.f32 %v1044, %v1055
        %v1067 = vadd.f32 %v1045, %v1055
        %v1068 = vadd.f32 %v1046, %v1055
        %v1069 = vadd.f32 %v1047, %v1055
        %v1070 = vadd.f32 %v1048, %v1055
        %v1071 = vadd.f32 %v1049, %v1055
        %v1072 = vadd.f32 %v1050, %v1055
        %v1073 = vpack.c.bf16 %v1058, %v1057
        %v1074 = vpack.c.bf16 %v1060, %v1059
        %v1075 = vpack.c.bf16 %v1062, %v1061
        %v1076 = vpack.c.bf16 %v1064, %v1063
        %v1077 = vpack.c.bf16 %v1066, %v1065
        %v1078 = vpack.c.bf16 %v1068, %v1067
        %v1079 = vpack.c.bf16 %v1070, %v1069
        %v1080 = vpack.c.bf16 %v1072, %v1071
        %v1081 = vld [vmem:[%s4] sm:$0xf]
        %v1082 = vld [vmem:[%s4 + $0x4] sm:$0xf]
        %v1083 = vld [vmem:[%s4 + $0x8] sm:$0xf]
        %v1084 = vld [vmem:[%s4 + $0xc] sm:$0xf]
        %v1085 = vld [vmem:[%s5] sm:$0x1]
        %v1087 = vlaneseq
        %v1088 = vshrl.u32 %v1087, 7
        %v1089 = vsub.s32 0, %v1088
        %v1090 = vrot.slane %v1085, %v1089
        %v1096 = vunpack.c.l.b16 %v1081
        %v1097 = vunpack.c.l.b16 %v1082
        %v1098 = vunpack.c.l.b16 %v1083
        %v1099 = vunpack.c.l.b16 %v1084
        %v1100 = vpack.c.b16 %v1097, %v1096
        %v1101 = vpack.c.b16 %v1099, %v1098
        %v1105 = vsel %vm819, %v1073, 0
        %v1108 = vsel %vm819, %v1074, 0
        %v1111 = vsel %vm819, %v1075, 0
        %v1114 = vsel %vm819, %v1076, 0
        %v1117 = vsel %vm819, %v1077, 0
        %v1120 = vsel %vm819, %v1078, 0
        %v1123 = vsel %vm819, %v1079, 0
        %v1126 = vsel %vm819, %v1080, 0
        %1128 = vmatprep.subr.bf16.mxu0 0
        %1129 = vmatpush1.bf16.msra.mxu0 0
        %1130 = vmatprep.subr.bf16.mxu0 0
        %1131 = vmatpush1.bf16.msra.mxu0 0
        %1132 = vmatprep.subr.bf16.mxu0 0
        %1133 = vmatpush1.bf16.msra.mxu0 0
        %1134 = vmatprep.subr.bf16.mxu0 0
        %1135 = vmatpush1.bf16.msra.mxu0 0
        %1136 = vmatprep.subr.bf16.mxu0 0
        %1137 = vmatpush1.bf16.msra.mxu0 0
        %1138 = vmatprep.subr.bf16.mxu0 0
        %1139 = vmatpush1.bf16.msra.mxu0 0
        %1140 = vmatprep.subr.bf16.mxu0 0
        %1141 = vmatpush1.bf16.msra.mxu0 %v1101
        %1142 = vmatprep.subr.bf16.mxu0 0
        %1143 = vmatpush1.bf16.msra.mxu0 %v1100
        %1144 = vmatprep.subr.bf16.mxu0 0
        %1145 = vmatpush2.bf16.msra.mxu0 0
        %1146 = vmatprep.subr.bf16.mxu0 0
        %1147 = vmatpush2.bf16.msra.mxu0 0
        %1148 = vmatprep.subr.bf16.mxu0 0
        %1149 = vmatpush2.bf16.msra.mxu0 0
        %1150 = vmatprep.subr.bf16.mxu0 0
        %1151 = vmatpush2.bf16.msra.mxu0 0
        %1152 = vmatprep.subr.bf16.mxu0 0
        %1153 = vmatpush2.bf16.msra.mxu0 0
        %1154 = vmatprep.subr.bf16.mxu0 0
        %1155 = vmatpush2.bf16.msra.mxu0 0
        %1156 = vmatprep.subr.bf16.mxu0 0
        %1157 = vmatpush2.bf16.msra.mxu0 0
        %1158 = vmatprep.subr.bf16.mxu0 0
        %1159 = vmatpush2.bf16.msra.mxu0 0
        %1160 = vmatprep.mubr.bf16.mxu0 0
        %1161 = vmatmul.mubr.bf16.gmra.mxu0 %v1105
        %v1162 = vpop.f32.mrf.mxu0
        %v1163 = vadd.f32 %v1090, %v1162
        %v1164 = vpop.f32.mrf.mxu0
        %v1165 = vpop.f32.mrf.mxu0
        %v1166 = vadd.f32 %v1090, %v1165
        %v1167 = vpop.f32.mrf.mxu0
        %1168 = vmatprep.mubr.bf16.mxu0 0
        %1169 = vmatmul.mubr.bf16.gmra.mxu0 %v1108
        %v1170 = vpop.f32.mrf.mxu0
        %v1171 = vadd.f32 %v1090, %v1170
        %v1172 = vpop.f32.mrf.mxu0
        %v1173 = vpop.f32.mrf.mxu0
        %v1174 = vadd.f32 %v1090, %v1173
        %v1175 = vpop.f32.mrf.mxu0
        %1176 = vmatprep.mubr.bf16.mxu0 0
        %1177 = vmatmul.mubr.bf16.gmra.mxu0 %v1111
        %v1178 = vpop.f32.mrf.mxu0
        %v1179 = vadd.f32 %v1090, %v1178
        %v1180 = vpop.f32.mrf.mxu0
        %v1181 = vpop.f32.mrf.mxu0
        %v1182 = vadd.f32 %v1090, %v1181
        %v1183 = vpop.f32.mrf.mxu0
        %1184 = vmatprep.mubr.bf16.mxu0 0
        %1185 = vmatmul.mubr.bf16.gmra.mxu0 %v1114
        %v1186 = vpop.f32.mrf.mxu0
        %v1187 = vadd.f32 %v1090, %v1186
        %v1188 = vpop.f32.mrf.mxu0
        %v1189 = vpop.f32.mrf.mxu0
        %v1190 = vadd.f32 %v1090, %v1189
        %v1191 = vpop.f32.mrf.mxu0
        %1192 = vmatprep.mubr.bf16.mxu0 0
        %1193 = vmatmul.mubr.bf16.gmra.mxu0 %v1117
        %v1194 = vpop.f32.mrf.mxu0
        %v1195 = vadd.f32 %v1090, %v1194
        %v1196 = vpop.f32.mrf.mxu0
        %v1197 = vpop.f32.mrf.mxu0
        %v1198 = vadd.f32 %v1090, %v1197
        %v1199 = vpop.f32.mrf.mxu0
        %1200 = vmatprep.mubr.bf16.mxu0 0
        %1201 = vmatmul.mubr.bf16.gmra.mxu0 %v1120
        %v1202 = vpop.f32.mrf.mxu0
        %v1203 = vadd.f32 %v1090, %v1202
        %v1204 = vpop.f32.mrf.mxu0
        %v1205 = vpop.f32.mrf.mxu0
        %v1206 = vadd.f32 %v1090, %v1205
        %v1207 = vpop.f32.mrf.mxu0
        %1208 = vmatprep.mubr.bf16.mxu0 0
        %1209 = vmatmul.mubr.bf16.gmra.mxu0 %v1123
        %v1210 = vpop.f32.mrf.mxu0
        %v1211 = vadd.f32 %v1090, %v1210
        %v1212 = vpop.f32.mrf.mxu0
        %v1213 = vpop.f32.mrf.mxu0
        %v1214 = vadd.f32 %v1090, %v1213
        %v1215 = vpop.f32.mrf.mxu0
        %1216 = vmatprep.mubr.bf16.mxu0 0
        %1217 = vmatmul.mubr.bf16.gmra.mxu0 %v1126
        %v1218 = vpop.f32.mrf.mxu0
        %v1219 = vadd.f32 %v1090, %v1218
        %v1220 = vpop.f32.mrf.mxu0
        %v1221 = vpop.f32.mrf.mxu0
        %v1222 = vadd.f32 %v1090, %v1221
        %v1223 = vpop.f32.mrf.mxu0
        %1224 = vdwg.mxu0
        %1225 = vxpose.xlu0.b32.start [1/16] %v1163, 128
        %1226 = vxpose.xlu0.b32.cont [2/16] %v1166, 128
        %1227 = vxpose.xlu0.b32.cont [3/16] 0.0, 128
        %1228 = vxpose.xlu0.b32.cont [4/16] 0.0, 128
        %1229 = vxpose.xlu0.b32.cont [5/16] 0.0, 128
        %1230 = vxpose.xlu0.b32.cont [6/16] 0.0, 128
        %1231 = vxpose.xlu0.b32.cont [7/16] 0.0, 128
        %1232 = vxpose.xlu0.b32.cont [8/16] 0.0, 128
        %1233 = vxpose.xlu0.b32.cont [9/16] 0.0, 128
        %1234 = vxpose.xlu0.b32.cont [10/16] 0.0, 128
        %1235 = vxpose.xlu0.b32.cont [11/16] 0.0, 128
        %1236 = vxpose.xlu0.b32.cont [12/16] 0.0, 128
        %1237 = vxpose.xlu0.b32.cont [13/16] 0.0, 128
        %1238 = vxpose.xlu0.b32.cont [14/16] 0.0, 128
        %1239 = vxpose.xlu0.b32.cont [15/16] 0.0, 128
        %1240 = vxpose.xlu0.b32.end [16/16] 0.0, 128
        %v1241 = vpop.trf.xlu0
        %v1242 = vpop.trf.xlu0
        %v1243 = vpop.trf.xlu0
        %v1244 = vpop.trf.xlu0
        %v1245 = vpop.trf.xlu0
        %v1246 = vpop.trf.xlu0
        %v1247 = vpop.trf.xlu0
        %v1248 = vpop.trf.xlu0
        %v1249 = vpop.trf.xlu0
        %v1250 = vpop.trf.xlu0
        %v1251 = vpop.trf.xlu0
        %v1252 = vpop.trf.xlu0
        %v1253 = vpop.trf.xlu0
        %v1254 = vpop.trf.xlu0
        %v1255 = vpop.trf.xlu0
        %v1256 = vpop.trf.xlu0
        %1257 = vxpose.xlu0.b32.start [1/16] %v1171, 128
        %1258 = vxpose.xlu0.b32.cont [2/16] %v1174, 128
        %1259 = vxpose.xlu0.b32.cont [3/16] 0.0, 128
        %1260 = vxpose.xlu0.b32.cont [4/16] 0.0, 128
        %1261 = vxpose.xlu0.b32.cont [5/16] 0.0, 128
        %1262 = vxpose.xlu0.b32.cont [6/16] 0.0, 128
        %1263 = vxpose.xlu0.b32.cont [7/16] 0.0, 128
        %1264 = vxpose.xlu0.b32.cont [8/16] 0.0, 128
        %1265 = vxpose.xlu0.b32.cont [9/16] 0.0, 128
        %1266 = vxpose.xlu0.b32.cont [10/16] 0.0, 128
        %1267 = vxpose.xlu0.b32.cont [11/16] 0.0, 128
        %1268 = vxpose.xlu0.b32.cont [12/16] 0.0, 128
        %1269 = vxpose.xlu0.b32.cont [13/16] 0.0, 128
        %1270 = vxpose.xlu0.b32.cont [14/16] 0.0, 128
        %1271 = vxpose.xlu0.b32.cont [15/16] 0.0, 128
        %1272 = vxpose.xlu0.b32.end [16/16] 0.0, 128
        %v1273 = vpop.trf.xlu0
        %v1274 = vpop.trf.xlu0
        %v1275 = vpop.trf.xlu0
        %v1276 = vpop.trf.xlu0
        %v1277 = vpop.trf.xlu0
        %v1278 = vpop.trf.xlu0
        %v1279 = vpop.trf.xlu0
        %v1280 = vpop.trf.xlu0
        %v1281 = vpop.trf.xlu0
        %v1282 = vpop.trf.xlu0
        %v1283 = vpop.trf.xlu0
        %v1284 = vpop.trf.xlu0
        %v1285 = vpop.trf.xlu0
        %v1286 = vpop.trf.xlu0
        %v1287 = vpop.trf.xlu0
        %v1288 = vpop.trf.xlu0
        %1289 = vxpose.xlu0.b32.start [1/16] %v1179, 128
        %1290 = vxpose.xlu0.b32.cont [2/16] %v1182, 128
        %1291 = vxpose.xlu0.b32.cont [3/16] 0.0, 128
        %1292 = vxpose.xlu0.b32.cont [4/16] 0.0, 128
        %1293 = vxpose.xlu0.b32.cont [5/16] 0.0, 128
        %1294 = vxpose.xlu0.b32.cont [6/16] 0.0, 128
        %1295 = vxpose.xlu0.b32.cont [7/16] 0.0, 128
        %1296 = vxpose.xlu0.b32.cont [8/16] 0.0, 128
        %1297 = vxpose.xlu0.b32.cont [9/16] 0.0, 128
        %1298 = vxpose.xlu0.b32.cont [10/16] 0.0, 128
        %1299 = vxpose.xlu0.b32.cont [11/16] 0.0, 128
        %1300 = vxpose.xlu0.b32.cont [12/16] 0.0, 128
        %1301 = vxpose.xlu0.b32.cont [13/16] 0.0, 128
        %1302 = vxpose.xlu0.b32.cont [14/16] 0.0, 128
        %1303 = vxpose.xlu0.b32.cont [15/16] 0.0, 128
        %1304 = vxpose.xlu0.b32.end [16/16] 0.0, 128
        %v1305 = vpop.trf.xlu0
        %v1306 = vpop.trf.xlu0
        %v1307 = vpop.trf.xlu0
        %v1308 = vpop.trf.xlu0
        %v1309 = vpop.trf.xlu0
        %v1310 = vpop.trf.xlu0
        %v1311 = vpop.trf.xlu0
        %v1312 = vpop.trf.xlu0
        %v1313 = vpop.trf.xlu0
        %v1314 = vpop.trf.xlu0
        %v1315 = vpop.trf.xlu0
        %v1316 = vpop.trf.xlu0
        %v1317 = vpop.trf.xlu0
        %v1318 = vpop.trf.xlu0
        %v1319 = vpop.trf.xlu0
        %v1320 = vpop.trf.xlu0
        %1321 = vxpose.xlu0.b32.start [1/16] %v1187, 128
        %1322 = vxpose.xlu0.b32.cont [2/16] %v1190, 128
        %1323 = vxpose.xlu0.b32.cont [3/16] 0.0, 128
        %1324 = vxpose.xlu0.b32.cont [4/16] 0.0, 128
        %1325 = vxpose.xlu0.b32.cont [5/16] 0.0, 128
        %1326 = vxpose.xlu0.b32.cont [6/16] 0.0, 128
        %1327 = vxpose.xlu0.b32.cont [7/16] 0.0, 128
        %1328 = vxpose.xlu0.b32.cont [8/16] 0.0, 128
        %1329 = vxpose.xlu0.b32.cont [9/16] 0.0, 128
        %1330 = vxpose.xlu0.b32.cont [10/16] 0.0, 128
        %1331 = vxpose.xlu0.b32.cont [11/16] 0.0, 128
        %1332 = vxpose.xlu0.b32.cont [12/16] 0.0, 128
        %1333 = vxpose.xlu0.b32.cont [13/16] 0.0, 128
        %1334 = vxpose.xlu0.b32.cont [14/16] 0.0, 128
        %1335 = vxpose.xlu0.b32.cont [15/16] 0.0, 128
        %1336 = vxpose.xlu0.b32.end [16/16] 0.0, 128
        %v1337 = vpop.trf.xlu0
        %v1338 = vpop.trf.xlu0
        %v1339 = vpop.trf.xlu0
        %v1340 = vpop.trf.xlu0
        %v1341 = vpop.trf.xlu0
        %v1342 = vpop.trf.xlu0
        %v1343 = vpop.trf.xlu0
        %v1344 = vpop.trf.xlu0
        %v1345 = vpop.trf.xlu0
        %v1346 = vpop.trf.xlu0
        %v1347 = vpop.trf.xlu0
        %v1348 = vpop.trf.xlu0
        %v1349 = vpop.trf.xlu0
        %v1350 = vpop.trf.xlu0
        %v1351 = vpop.trf.xlu0
        %v1352 = vpop.trf.xlu0
        %1353 = vxpose.xlu0.b32.start [1/16] %v1195, 128
        %1354 = vxpose.xlu0.b32.cont [2/16] %v1198, 128
        %1355 = vxpose.xlu0.b32.cont [3/16] 0.0, 128
        %1356 = vxpose.xlu0.b32.cont [4/16] 0.0, 128
        %1357 = vxpose.xlu0.b32.cont [5/16] 0.0, 128
        %1358 = vxpose.xlu0.b32.cont [6/16] 0.0, 128
        %1359 = vxpose.xlu0.b32.cont [7/16] 0.0, 128
        %1360 = vxpose.xlu0.b32.cont [8/16] 0.0, 128
        %1361 = vxpose.xlu0.b32.cont [9/16] 0.0, 128
        %1362 = vxpose.xlu0.b32.cont [10/16] 0.0, 128
        %1363 = vxpose.xlu0.b32.cont [11/16] 0.0, 128
        %1364 = vxpose.xlu0.b32.cont [12/16] 0.0, 128
        %1365 = vxpose.xlu0.b32.cont [13/16] 0.0, 128
        %1366 = vxpose.xlu0.b32.cont [14/16] 0.0, 128
        %1367 = vxpose.xlu0.b32.cont [15/16] 0.0, 128
        %1368 = vxpose.xlu0.b32.end [16/16] 0.0, 128
        %v1369 = vpop.trf.xlu0
        %v1370 = vpop.trf.xlu0
        %v1371 = vpop.trf.xlu0
        %v1372 = vpop.trf.xlu0
        %v1373 = vpop.trf.xlu0
        %v1374 = vpop.trf.xlu0
        %v1375 = vpop.trf.xlu0
        %v1376 = vpop.trf.xlu0
        %v1377 = vpop.trf.xlu0
        %v1378 = vpop.trf.xlu0
        %v1379 = vpop.trf.xlu0
        %v1380 = vpop.trf.xlu0
        %v1381 = vpop.trf.xlu0
        %v1382 = vpop.trf.xlu0
        %v1383 = vpop.trf.xlu0
        %v1384 = vpop.trf.xlu0
        %1385 = vxpose.xlu0.b32.start [1/16] %v1203, 128
        %1386 = vxpose.xlu0.b32.cont [2/16] %v1206, 128
        %1387 = vxpose.xlu0.b32.cont [3/16] 0.0, 128
        %1388 = vxpose.xlu0.b32.cont [4/16] 0.0, 128
        %1389 = vxpose.xlu0.b32.cont [5/16] 0.0, 128
        %1390 = vxpose.xlu0.b32.cont [6/16] 0.0, 128
        %1391 = vxpose.xlu0.b32.cont [7/16] 0.0, 128
        %1392 = vxpose.xlu0.b32.cont [8/16] 0.0, 128
        %1393 = vxpose.xlu0.b32.cont [9/16] 0.0, 128
        %1394 = vxpose.xlu0.b32.cont [10/16] 0.0, 128
        %1395 = vxpose.xlu0.b32.cont [11/16] 0.0, 128
        %1396 = vxpose.xlu0.b32.cont [12/16] 0.0, 128
        %1397 = vxpose.xlu0.b32.cont [13/16] 0.0, 128
        %1398 = vxpose.xlu0.b32.cont [14/16] 0.0, 128
        %1399 = vxpose.xlu0.b32.cont [15/16] 0.0, 128
        %1400 = vxpose.xlu0.b32.end [16/16] 0.0, 128
        %v1401 = vpop.trf.xlu0
        %v1402 = vpop.trf.xlu0
        %v1403 = vpop.trf.xlu0
        %v1404 = vpop.trf.xlu0
        %v1405 = vpop.trf.xlu0
        %v1406 = vpop.trf.xlu0
        %v1407 = vpop.trf.xlu0
        %v1408 = vpop.trf.xlu0
        %v1409 = vpop.trf.xlu0
        %v1410 = vpop.trf.xlu0
        %v1411 = vpop.trf.xlu0
        %v1412 = vpop.trf.xlu0
        %v1413 = vpop.trf.xlu0
        %v1414 = vpop.trf.xlu0
        %v1415 = vpop.trf.xlu0
        %v1416 = vpop.trf.xlu0
        %1417 = vxpose.xlu0.b32.start [1/16] %v1211, 128
        %1418 = vxpose.xlu0.b32.cont [2/16] %v1214, 128
        %1419 = vxpose.xlu0.b32.cont [3/16] 0.0, 128
        %1420 = vxpose.xlu0.b32.cont [4/16] 0.0, 128
        %1421 = vxpose.xlu0.b32.cont [5/16] 0.0, 128
        %1422 = vxpose.xlu0.b32.cont [6/16] 0.0, 128
        %1423 = vxpose.xlu0.b32.cont [7/16] 0.0, 128
        %1424 = vxpose.xlu0.b32.cont [8/16] 0.0, 128
        %1425 = vxpose.xlu0.b32.cont [9/16] 0.0, 128
        %1426 = vxpose.xlu0.b32.cont [10/16] 0.0, 128
        %1427 = vxpose.xlu0.b32.cont [11/16] 0.0, 128
        %1428 = vxpose.xlu0.b32.cont [12/16] 0.0, 128
        %1429 = vxpose.xlu0.b32.cont [13/16] 0.0, 128
        %1430 = vxpose.xlu0.b32.cont [14/16] 0.0, 128
        %1431 = vxpose.xlu0.b32.cont [15/16] 0.0, 128
        %1432 = vxpose.xlu0.b32.end [16/16] 0.0, 128
        %v1433 = vpop.trf.xlu0
        %v1434 = vpop.trf.xlu0
        %v1435 = vpop.trf.xlu0
        %v1436 = vpop.trf.xlu0
        %v1437 = vpop.trf.xlu0
        %v1438 = vpop.trf.xlu0
        %v1439 = vpop.trf.xlu0
        %v1440 = vpop.trf.xlu0
        %v1441 = vpop.trf.xlu0
        %v1442 = vpop.trf.xlu0
        %v1443 = vpop.trf.xlu0
        %v1444 = vpop.trf.xlu0
        %v1445 = vpop.trf.xlu0
        %v1446 = vpop.trf.xlu0
        %v1447 = vpop.trf.xlu0
        %v1448 = vpop.trf.xlu0
        %1449 = vxpose.xlu0.b32.start [1/16] %v1219, 128
        %1450 = vxpose.xlu0.b32.cont [2/16] %v1222, 128
        %1451 = vxpose.xlu0.b32.cont [3/16] 0.0, 128
        %1452 = vxpose.xlu0.b32.cont [4/16] 0.0, 128
        %1453 = vxpose.xlu0.b32.cont [5/16] 0.0, 128
        %1454 = vxpose.xlu0.b32.cont [6/16] 0.0, 128
        %1455 = vxpose.xlu0.b32.cont [7/16] 0.0, 128
        %1456 = vxpose.xlu0.b32.cont [8/16] 0.0, 128
        %1457 = vxpose.xlu0.b32.cont [9/16] 0.0, 128
        %1458 = vxpose.xlu0.b32.cont [10/16] 0.0, 128
        %1459 = vxpose.xlu0.b32.cont [11/16] 0.0, 128
        %1460 = vxpose.xlu0.b32.cont [12/16] 0.0, 128
        %1461 = vxpose.xlu0.b32.cont [13/16] 0.0, 128
        %1462 = vxpose.xlu0.b32.cont [14/16] 0.0, 128
        %1463 = vxpose.xlu0.b32.cont [15/16] 0.0, 128
        %1464 = vxpose.xlu0.b32.end [16/16] 0.0, 128
        %v1465 = vpop.trf.xlu0
        %v1466 = vpop.trf.xlu0
        %v1467 = vpop.trf.xlu0
        %v1468 = vpop.trf.xlu0
        %v1469 = vpop.trf.xlu0
        %v1470 = vpop.trf.xlu0
        %v1471 = vpop.trf.xlu0
        %v1472 = vpop.trf.xlu0
        %v1473 = vpop.trf.xlu0
        %v1474 = vpop.trf.xlu0
        %v1475 = vpop.trf.xlu0
        %v1476 = vpop.trf.xlu0
        %v1477 = vpop.trf.xlu0
        %v1478 = vpop.trf.xlu0
        %v1479 = vpop.trf.xlu0
        %v1480 = vpop.trf.xlu0
        %v1481 = vld [vmem:[#allocation2] sm:$0xff]
        %vm1482 = vcmask 130048
        %v1483 = vsel %vm1482, %v1241, -inf
        %1484 = vmax.xlane.f32.xlu0 %v1483
        %v1485 = vpop.xlane.xlu0 %1484
        %v1486 = vsel %vm1482, %v1273, -inf
        %1487 = vmax.xlane.f32.xlu0 %v1486
        %v1488 = vpop.xlane.xlu0 %1487
        %v1489 = vsel %vm1482, %v1305, -inf
        %1490 = vmax.xlane.f32.xlu0 %v1489
        %v1491 = vpop.xlane.xlu0 %1490
        %v1492 = vsel %vm1482, %v1337, -inf
        %1493 = vmax.xlane.f32.xlu0 %v1492
        %v1494 = vpop.xlane.xlu0 %1493
        %v1495 = vsel %vm1482, %v1369, -inf
        %1496 = vmax.xlane.f32.xlu0 %v1495
        %v1497 = vpop.xlane.xlu0 %1496
        %v1498 = vsel %vm1482, %v1401, -inf
        %1499 = vmax.xlane.f32.xlu0 %v1498
        %v1500 = vpop.xlane.xlu0 %1499
        %v1501 = vsel %vm1482, %v1433, -inf
        %1502 = vmax.xlane.f32.xlu0 %v1501
        %v1503 = vpop.xlane.xlu0 %1502
        %v1504 = vsel %vm1482, %v1465, -inf
        %1505 = vmax.xlane.f32.xlu0 %v1504
        %v1506 = vpop.xlane.xlu0 %1505
        %v1515 = vlaneseq
        %v1516 = vand.u32 %v1515, 127
        %v1517 = vlaneseq
        %v1518 = vshrl.u32 %v1517, 7
        %v1519 = vsub.s32 %v1516, %v1518
        %v1520 = vrot.slane %v1485, %v1519
        %v1521 = vlaneseq
        %v1522 = vshrl.u32 %v1521, 7
        %v1523 = vsub.s32 %v1516, %v1522
        %v1524 = vrot.slane %v1488, %v1523
        %v1525 = vlaneseq
        %v1526 = vshrl.u32 %v1525, 7
        %v1527 = vsub.s32 %v1516, %v1526
        %v1528 = vrot.slane %v1491, %v1527
        %v1529 = vlaneseq
        %v1530 = vshrl.u32 %v1529, 7
        %v1531 = vsub.s32 %v1516, %v1530
        %v1532 = vrot.slane %v1494, %v1531
        %v1533 = vlaneseq
        %v1534 = vshrl.u32 %v1533, 7
        %v1535 = vsub.s32 %v1516, %v1534
        %v1536 = vrot.slane %v1497, %v1535
        %v1537 = vlaneseq
        %v1538 = vshrl.u32 %v1537, 7
        %v1539 = vsub.s32 %v1516, %v1538
        %v1540 = vrot.slane %v1500, %v1539
        %v1541 = vlaneseq
        %v1542 = vshrl.u32 %v1541, 7
        %v1543 = vsub.s32 %v1516, %v1542
        %v1544 = vrot.slane %v1503, %v1543
        %v1545 = vlaneseq
        %v1546 = vshrl.u32 %v1545, 7
        %v1547 = vsub.s32 %v1516, %v1546
        %v1548 = vrot.slane %v1506, %v1547
        %vm1549 = vcmask 1041409
        %v1550 = vsel %vm1549, %v1524, %v1520
        %vm1551 = vcmask 1042434
        %v1552 = vsel %vm1551, %v1528, %v1550
        %vm1553 = vcmask 1043459
        %v1554 = vsel %vm1553, %v1532, %v1552
        %vm1555 = vcmask 1044484
        %v1556 = vsel %vm1555, %v1536, %v1554
        %vm1557 = vcmask 1045509
        %v1558 = vsel %vm1557, %v1540, %v1556
        %vm1559 = vcmask 1046534
        %v1560 = vsel %vm1559, %v1544, %v1558
        %vm1561 = vcmask 1047559
        %v1562 = vsel %vm1561, %v1548, %v1560
        %v1564 = vmax.f32 %v1481, %v1562
        %v1565 = vsub.f32 %v1481, %v1564
        %v1566 = vmul.f32 %v1565, 1.442695
        %v1567 = vpow.pop %v1566
        %v1568 = vlaneseq
        %v1569 = vshrl.u32 %v1568, 7
        %v1570 = vsub.s32 0, %v1569
        %v1571 = vrot.slane %v1564, %v1570
        %1573 = vbcast.lane.b32.xlu0 %v1571, 256
        %v1574 = vpop.permute.xlu0 %1573
        %v1575 = vlaneseq
        %v1576 = vshrl.u32 %v1575, 7
        %v1577 = vsub.s32 1, %v1576
        %v1578 = vrot.slane %v1564, %v1577
        %1580 = vbcast.lane.b32.xlu0 %v1578, 256
        %v1581 = vpop.permute.xlu0 %1580
        %v1582 = vlaneseq
        %v1583 = vshrl.u32 %v1582, 7
        %v1584 = vsub.s32 2, %v1583
        %v1585 = vrot.slane %v1564, %v1584
        %1587 = vbcast.lane.b32.xlu0 %v1585, 256
        %v1588 = vpop.permute.xlu0 %1587
        %v1589 = vlaneseq
        %v1590 = vshrl.u32 %v1589, 7
        %v1591 = vsub.s32 3, %v1590
        %v1592 = vrot.slane %v1564, %v1591
        %1594 = vbcast.lane.b32.xlu0 %v1592, 256
        %v1595 = vpop.permute.xlu0 %1594
        %v1596 = vlaneseq
        %v1597 = vshrl.u32 %v1596, 7
        %v1598 = vsub.s32 4, %v1597
        %v1599 = vrot.slane %v1564, %v1598
        %1601 = vbcast.lane.b32.xlu0 %v1599, 256
        %v1602 = vpop.permute.xlu0 %1601
        %v1603 = vlaneseq
        %v1604 = vshrl.u32 %v1603, 7
        %v1605 = vsub.s32 5, %v1604
        %v1606 = vrot.slane %v1564, %v1605
        %1608 = vbcast.lane.b32.xlu0 %v1606, 256
        %v1609 = vpop.permute.xlu0 %1608
        %v1610 = vlaneseq
        %v1611 = vshrl.u32 %v1610, 7
        %v1612 = vsub.s32 6, %v1611
        %v1613 = vrot.slane %v1564, %v1612
        %1615 = vbcast.lane.b32.xlu0 %v1613, 256
        %v1616 = vpop.permute.xlu0 %1615
        %v1617 = vlaneseq
        %v1618 = vshrl.u32 %v1617, 7
        %v1619 = vsub.s32 7, %v1618
        %v1620 = vrot.slane %v1564, %v1619
        %1622 = vbcast.lane.b32.xlu0 %v1620, 256
        %v1623 = vpop.permute.xlu0 %1622
        %v1624 = vsub.f32 %v1241, %v1574
        %v1625 = vsub.f32 %v1273, %v1581
        %v1626 = vsub.f32 %v1305, %v1588
        %v1627 = vsub.f32 %v1337, %v1595
        %v1628 = vsub.f32 %v1369, %v1602
        %v1629 = vsub.f32 %v1401, %v1609
        %v1630 = vsub.f32 %v1433, %v1616
        %v1631 = vsub.f32 %v1465, %v1623
        %v1632 = vmul.f32 %v1624, 1.442695
        %v1633 = vpow.pop %v1632
        %v1634 = vmul.f32 %v1625, 1.442695
        %v1635 = vpow.pop %v1634
        %v1636 = vmul.f32 %v1626, 1.442695
        %v1637 = vpow.pop %v1636
        %v1638 = vmul.f32 %v1627, 1.442695
        %v1639 = vpow.pop %v1638
        %v1640 = vmul.f32 %v1628, 1.442695
        %v1641 = vpow.pop %v1640
        %v1642 = vmul.f32 %v1629, 1.442695
        %v1643 = vpow.pop %v1642
        %v1644 = vmul.f32 %v1630, 1.442695
        %v1645 = vpow.pop %v1644
        %v1646 = vmul.f32 %v1631, 1.442695
        %v1647 = vpow.pop %v1646
        %v1648 = vld [vmem:[#allocation3] sm:$0xff]
        %v1649 = vmul.f32 %v1567, %v1648
        %v1650 = vsel %vm1482, %v1633, 0.0
        %1651 = vadd.xlane.f32.xlu0 %v1650
        %v1652 = vpop.xlane.xlu0 %1651
        %v1653 = vsel %vm1482, %v1635, 0.0
        %1654 = vadd.xlane.f32.xlu0 %v1653
        %v1655 = vpop.xlane.xlu0 %1654
        %v1656 = vsel %vm1482, %v1637, 0.0
        %1657 = vadd.xlane.f32.xlu0 %v1656
        %v1658 = vpop.xlane.xlu0 %1657
        %v1659 = vsel %vm1482, %v1639, 0.0
        %1660 = vadd.xlane.f32.xlu0 %v1659
        %v1661 = vpop.xlane.xlu0 %1660
        %v1662 = vsel %vm1482, %v1641, 0.0
        %1663 = vadd.xlane.f32.xlu0 %v1662
        %v1664 = vpop.xlane.xlu0 %1663
        %v1665 = vsel %vm1482, %v1643, 0.0
        %1666 = vadd.xlane.f32.xlu0 %v1665
        %v1667 = vpop.xlane.xlu0 %1666
        %v1668 = vsel %vm1482, %v1645, 0.0
        %1669 = vadd.xlane.f32.xlu0 %v1668
        %v1670 = vpop.xlane.xlu0 %1669
        %v1671 = vsel %vm1482, %v1647, 0.0
        %1672 = vadd.xlane.f32.xlu0 %v1671
        %v1673 = vpop.xlane.xlu0 %1672
        %v1682 = vlaneseq
        %v1683 = vshrl.u32 %v1682, 7
        %v1684 = vsub.s32 %v1516, %v1683
        %v1685 = vrot.slane %v1652, %v1684
        %v1686 = vlaneseq
        %v1687 = vshrl.u32 %v1686, 7
        %v1688 = vsub.s32 %v1516, %v1687
        %v1689 = vrot.slane %v1655, %v1688
        %v1690 = vlaneseq
        %v1691 = vshrl.u32 %v1690, 7
        %v1692 = vsub.s32 %v1516, %v1691
        %v1693 = vrot.slane %v1658, %v1692
        %v1694 = vlaneseq
        %v1695 = vshrl.u32 %v1694, 7
        %v1696 = vsub.s32 %v1516, %v1695
        %v1697 = vrot.slane %v1661, %v1696
        %v1698 = vlaneseq
        %v1699 = vshrl.u32 %v1698, 7
        %v1700 = vsub.s32 %v1516, %v1699
        %v1701 = vrot.slane %v1664, %v1700
        %v1702 = vlaneseq
        %v1703 = vshrl.u32 %v1702, 7
        %v1704 = vsub.s32 %v1516, %v1703
        %v1705 = vrot.slane %v1667, %v1704
        %v1706 = vlaneseq
        %v1707 = vshrl.u32 %v1706, 7
        %v1708 = vsub.s32 %v1516, %v1707
        %v1709 = vrot.slane %v1670, %v1708
        %v1710 = vlaneseq
        %v1711 = vshrl.u32 %v1710, 7
        %v1712 = vsub.s32 %v1516, %v1711
        %v1713 = vrot.slane %v1673, %v1712
        %v1714 = vsel %vm1549, %v1689, %v1685
        %v1715 = vsel %vm1551, %v1693, %v1714
        %v1716 = vsel %vm1553, %v1697, %v1715
        %v1717 = vsel %vm1555, %v1701, %v1716
        %v1718 = vsel %vm1557, %v1705, %v1717
        %v1719 = vsel %vm1559, %v1709, %v1718
        %v1720 = vsel %vm1561, %v1713, %v1719
        %v1722 = vadd.f32 %v1649, %v1720
        %vm1723 = vcmask 64512
        %1724 = vst.msk [vmem:[#allocation3] sm:$0xff] %vm1723, %v1722
        %v1725 = vlaneseq
        %v1726 = vshrl.u32 %v1725, 7
        %v1727 = vsub.s32 0, %v1726
        %v1728 = vrot.slane %v1567, %v1727
        %1730 = vbcast.lane.b32.xlu0 %v1728, 256
        %v1731 = vpop.permute.xlu0 %1730
        %v1732 = vlaneseq
        %v1733 = vshrl.u32 %v1732, 7
        %v1734 = vsub.s32 1, %v1733
        %v1735 = vrot.slane %v1567, %v1734
        %1737 = vbcast.lane.b32.xlu0 %v1735, 256
        %v1738 = vpop.permute.xlu0 %1737
        %v1739 = vlaneseq
        %v1740 = vshrl.u32 %v1739, 7
        %v1741 = vsub.s32 2, %v1740
        %v1742 = vrot.slane %v1567, %v1741
        %1744 = vbcast.lane.b32.xlu0 %v1742, 256
        %v1745 = vpop.permute.xlu0 %1744
        %v1746 = vlaneseq
        %v1747 = vshrl.u32 %v1746, 7
        %v1748 = vsub.s32 3, %v1747
        %v1749 = vrot.slane %v1567, %v1748
        %1751 = vbcast.lane.b32.xlu0 %v1749, 256
        %v1752 = vpop.permute.xlu0 %1751
        %v1753 = vlaneseq
        %v1754 = vshrl.u32 %v1753, 7
        %v1755 = vsub.s32 4, %v1754
        %v1756 = vrot.slane %v1567, %v1755
        %1758 = vbcast.lane.b32.xlu0 %v1756, 256
        %v1759 = vpop.permute.xlu0 %1758
        %v1760 = vlaneseq
        %v1761 = vshrl.u32 %v1760, 7
        %v1762 = vsub.s32 5, %v1761
        %v1763 = vrot.slane %v1567, %v1762
        %1765 = vbcast.lane.b32.xlu0 %v1763, 256
        %v1766 = vpop.permute.xlu0 %1765
        %v1767 = vlaneseq
        %v1768 = vshrl.u32 %v1767, 7
        %v1769 = vsub.s32 6, %v1768
        %v1770 = vrot.slane %v1567, %v1769
        %1772 = vbcast.lane.b32.xlu0 %v1770, 256
        %v1773 = vpop.permute.xlu0 %1772
        %v1774 = vlaneseq
        %v1775 = vshrl.u32 %v1774, 7
        %v1776 = vsub.s32 7, %v1775
        %v1777 = vrot.slane %v1567, %v1776
        %1779 = vbcast.lane.b32.xlu0 %v1777, 256
        %v1780 = vpop.permute.xlu0 %1779
        %v1781 = vld [vmem:[#allocation4] sm:$0xff]
        %v1782 = vld [vmem:[#allocation4 + $0x8] sm:$0xff]
        %v1783 = vld [vmem:[#allocation4 + $0x10] sm:$0xff]
        %v1784 = vld [vmem:[#allocation4 + $0x18] sm:$0xff]
        %v1785 = vld [vmem:[#allocation4 + $0x20] sm:$0xff]
        %v1786 = vld [vmem:[#allocation4 + $0x28] sm:$0xff]
        %v1787 = vld [vmem:[#allocation4 + $0x30] sm:$0xff]
        %v1788 = vld [vmem:[#allocation4 + $0x38] sm:$0xff]
        %v1789 = vmul.f32 %v1731, %v1781
        %v1790 = vmul.f32 %v1738, %v1782
        %v1791 = vmul.f32 %v1745, %v1783
        %v1792 = vmul.f32 %v1752, %v1784
        %v1793 = vmul.f32 %v1759, %v1785
        %v1794 = vmul.f32 %v1766, %v1786
        %v1795 = vmul.f32 %v1773, %v1787
        %v1796 = vmul.f32 %v1780, %v1788
        %v1797 = vpack.c.bf16 %v1633, %v1633
        %v1798 = vpack.c.bf16 %v1635, %v1635
        %v1799 = vpack.c.bf16 %v1637, %v1637
        %v1800 = vpack.c.bf16 %v1639, %v1639
        %v1801 = vpack.c.bf16 %v1641, %v1641
        %v1802 = vpack.c.bf16 %v1643, %v1643
        %v1803 = vpack.c.bf16 %v1645, %v1645
        %v1804 = vpack.c.bf16 %v1647, %v1647
        %v1806 = vsel %vm1482, %v1797, 0
        %1808 = vmatprep.subr.bf16.mxu0 0
        %1809 = vmatpush1.bf16.msra.mxu0 0
        %1810 = vmatprep.subr.bf16.mxu0 0
        %1811 = vmatpush1.bf16.msra.mxu0 0
        %1812 = vmatprep.subr.bf16.mxu0 0
        %1813 = vmatpush1.bf16.msra.mxu0 0
        %1814 = vmatprep.subr.bf16.mxu0 0
        %1815 = vmatpush1.bf16.msra.mxu0 0
        %1816 = vmatprep.subr.bf16.mxu0 0
        %1817 = vmatpush1.bf16.msra.mxu0 0
        %1818 = vmatprep.subr.bf16.mxu0 0
        %1819 = vmatpush1.bf16.msra.mxu0 0
        %1820 = vmatprep.subr.bf16.mxu0 0
        %1821 = vmatpush1.bf16.msra.mxu0 0
        %1822 = vmatprep.subr.bf16.mxu0 0
        %1823 = vmatpush1.bf16.msra.mxu0 %v1073
        %1824 = vmatprep.subr.bf16.mxu0 0
        %1825 = vmatpush2.bf16.msra.mxu0 0
        %1826 = vmatprep.subr.bf16.mxu0 0
        %1827 = vmatpush2.bf16.msra.mxu0 0
        %1828 = vmatprep.subr.bf16.mxu0 0
        %1829 = vmatpush2.bf16.msra.mxu0 0
        %1830 = vmatprep.subr.bf16.mxu0 0
        %1831 = vmatpush2.bf16.msra.mxu0 0
        %1832 = vmatprep.subr.bf16.mxu0 0
        %1833 = vmatpush2.bf16.msra.mxu0 0
        %1834 = vmatprep.subr.bf16.mxu0 0
        %1835 = vmatpush2.bf16.msra.mxu0 0
        %1836 = vmatprep.subr.bf16.mxu0 0
        %1837 = vmatpush2.bf16.msra.mxu0 0
        %1838 = vmatprep.subr.bf16.mxu0 0
        %1839 = vmatpush2.bf16.msra.mxu0 0
        %1840 = vmatprep.mubr.bf16.mxu0 0
        %1841 = vmatmul.mubr.bf16.gmra.mxu0 %v1806
        %v1842 = vpop.f32.mrf.mxu0
        %v1843 = vadd.f32 0.0, %v1842
        %v1844 = vpop.f32.mrf.mxu0
        %v1845 = vpop.f32.mrf.mxu0
        %v1846 = vpop.f32.mrf.mxu0
        %1847 = vdwg.mxu0
        %v1849 = vsel %vm1482, %v1798, 0
        %1851 = vmatprep.subr.bf16.mxu0 0
        %1852 = vmatpush1.bf16.msra.mxu0 0
        %1853 = vmatprep.subr.bf16.mxu0 0
        %1854 = vmatpush1.bf16.msra.mxu0 0
        %1855 = vmatprep.subr.bf16.mxu0 0
        %1856 = vmatpush1.bf16.msra.mxu0 0
        %1857 = vmatprep.subr.bf16.mxu0 0
        %1858 = vmatpush1.bf16.msra.mxu0 0
        %1859 = vmatprep.subr.bf16.mxu0 0
        %1860 = vmatpush1.bf16.msra.mxu0 0
        %1861 = vmatprep.subr.bf16.mxu0 0
        %1862 = vmatpush1.bf16.msra.mxu0 0
        %1863 = vmatprep.subr.bf16.mxu0 0
        %1864 = vmatpush1.bf16.msra.mxu0 0
        %1865 = vmatprep.subr.bf16.mxu0 0
        %1866 = vmatpush1.bf16.msra.mxu0 %v1074
        %1867 = vmatprep.subr.bf16.mxu0 0
        %1868 = vmatpush2.bf16.msra.mxu0 0
        %1869 = vmatprep.subr.bf16.mxu0 0
        %1870 = vmatpush2.bf16.msra.mxu0 0
        %1871 = vmatprep.subr.bf16.mxu0 0
        %1872 = vmatpush2.bf16.msra.mxu0 0
        %1873 = vmatprep.subr.bf16.mxu0 0
        %1874 = vmatpush2.bf16.msra.mxu0 0
        %1875 = vmatprep.subr.bf16.mxu0 0
        %1876 = vmatpush2.bf16.msra.mxu0 0
        %1877 = vmatprep.subr.bf16.mxu0 0
        %1878 = vmatpush2.bf16.msra.mxu0 0
        %1879 = vmatprep.subr.bf16.mxu0 0
        %1880 = vmatpush2.bf16.msra.mxu0 0
        %1881 = vmatprep.subr.bf16.mxu0 0
        %1882 = vmatpush2.bf16.msra.mxu0 0
        %1883 = vmatprep.mubr.bf16.mxu0 0
        %1884 = vmatmul.mubr.bf16.gmra.mxu0 %v1849
        %v1885 = vpop.f32.mrf.mxu0
        %v1886 = vadd.f32 0.0, %v1885
        %v1887 = vpop.f32.mrf.mxu0
        %v1888 = vpop.f32.mrf.mxu0
        %v1889 = vpop.f32.mrf.mxu0
        %1890 = vdwg.mxu0
        %v1892 = vsel %vm1482, %v1799, 0
        %1894 = vmatprep.subr.bf16.mxu0 0
        %1895 = vmatpush1.bf16.msra.mxu0 0
        %1896 = vmatprep.subr.bf16.mxu0 0
        %1897 = vmatpush1.bf16.msra.mxu0 0
        %1898 = vmatprep.subr.bf16.mxu0 0
        %1899 = vmatpush1.bf16.msra.mxu0 0
        %1900 = vmatprep.subr.bf16.mxu0 0
        %1901 = vmatpush1.bf16.msra.mxu0 0
        %1902 = vmatprep.subr.bf16.mxu0 0
        %1903 = vmatpush1.bf16.msra.mxu0 0
        %1904 = vmatprep.subr.bf16.mxu0 0
        %1905 = vmatpush1.bf16.msra.mxu0 0
        %1906 = vmatprep.subr.bf16.mxu0 0
        %1907 = vmatpush1.bf16.msra.mxu0 0
        %1908 = vmatprep.subr.bf16.mxu0 0
        %1909 = vmatpush1.bf16.msra.mxu0 %v1075
        %1910 = vmatprep.subr.bf16.mxu0 0
        %1911 = vmatpush2.bf16.msra.mxu0 0
        %1912 = vmatprep.subr.bf16.mxu0 0
        %1913 = vmatpush2.bf16.msra.mxu0 0
        %1914 = vmatprep.subr.bf16.mxu0 0
        %1915 = vmatpush2.bf16.msra.mxu0 0
        %1916 = vmatprep.subr.bf16.mxu0 0
        %1917 = vmatpush2.bf16.msra.mxu0 0
        %1918 = vmatprep.subr.bf16.mxu0 0
        %1919 = vmatpush2.bf16.msra.mxu0 0
        %1920 = vmatprep.subr.bf16.mxu0 0
        %1921 = vmatpush2.bf16.msra.mxu0 0
        %1922 = vmatprep.subr.bf16.mxu0 0
        %1923 = vmatpush2.bf16.msra.mxu0 0
        %1924 = vmatprep.subr.bf16.mxu0 0
        %1925 = vmatpush2.bf16.msra.mxu0 0
        %1926 = vmatprep.mubr.bf16.mxu0 0
        %1927 = vmatmul.mubr.bf16.gmra.mxu0 %v1892
        %v1928 = vpop.f32.mrf.mxu0
        %v1929 = vadd.f32 0.0, %v1928
        %v1930 = vpop.f32.mrf.mxu0
        %v1931 = vpop.f32.mrf.mxu0
        %v1932 = vpop.f32.mrf.mxu0
        %1933 = vdwg.mxu0
        %v1935 = vsel %vm1482, %v1800, 0
        %1937 = vmatprep.subr.bf16.mxu0 0
        %1938 = vmatpush1.bf16.msra.mxu0 0
        %1939 = vmatprep.subr.bf16.mxu0 0
        %1940 = vmatpush1.bf16.msra.mxu0 0
        %1941 = vmatprep.subr.bf16.mxu0 0
        %1942 = vmatpush1.bf16.msra.mxu0 0
        %1943 = vmatprep.subr.bf16.mxu0 0
        %1944 = vmatpush1.bf16.msra.mxu0 0
        %1945 = vmatprep.subr.bf16.mxu0 0
        %1946 = vmatpush1.bf16.msra.mxu0 0
        %1947 = vmatprep.subr.bf16.mxu0 0
        %1948 = vmatpush1.bf16.msra.mxu0 0
        %1949 = vmatprep.subr.bf16.mxu0 0
        %1950 = vmatpush1.bf16.msra.mxu0 0
        %1951 = vmatprep.subr.bf16.mxu0 0
        %1952 = vmatpush1.bf16.msra.mxu0 %v1076
        %1953 = vmatprep.subr.bf16.mxu0 0
        %1954 = vmatpush2.bf16.msra.mxu0 0
        %1955 = vmatprep.subr.bf16.mxu0 0
        %1956 = vmatpush2.bf16.msra.mxu0 0
        %1957 = vmatprep.subr.bf16.mxu0 0
        %1958 = vmatpush2.bf16.msra.mxu0 0
        %1959 = vmatprep.subr.bf16.mxu0 0
        %1960 = vmatpush2.bf16.msra.mxu0 0
        %1961 = vmatprep.subr.bf16.mxu0 0
        %1962 = vmatpush2.bf16.msra.mxu0 0
        %1963 = vmatprep.subr.bf16.mxu0 0
        %1964 = vmatpush2.bf16.msra.mxu0 0
        %1965 = vmatprep.subr.bf16.mxu0 0
        %1966 = vmatpush2.bf16.msra.mxu0 0
        %1967 = vmatprep.subr.bf16.mxu0 0
        %1968 = vmatpush2.bf16.msra.mxu0 0
        %1969 = vmatprep.mubr.bf16.mxu0 0
        %1970 = vmatmul.mubr.bf16.gmra.mxu0 %v1935
        %v1971 = vpop.f32.mrf.mxu0
        %v1972 = vadd.f32 0.0, %v1971
        %v1973 = vpop.f32.mrf.mxu0
        %v1974 = vpop.f32.mrf.mxu0
        %v1975 = vpop.f32.mrf.mxu0
        %1976 = vdwg.mxu0
        %v1978 = vsel %vm1482, %v1801, 0
        %1980 = vmatprep.subr.bf16.mxu0 0
        %1981 = vmatpush1.bf16.msra.mxu0 0
        %1982 = vmatprep.subr.bf16.mxu0 0
        %1983 = vmatpush1.bf16.msra.mxu0 0
        %1984 = vmatprep.subr.bf16.mxu0 0
        %1985 = vmatpush1.bf16.msra.mxu0 0
        %1986 = vmatprep.subr.bf16.mxu0 0
        %1987 = vmatpush1.bf16.msra.mxu0 0
        %1988 = vmatprep.subr.bf16.mxu0 0
        %1989 = vmatpush1.bf16.msra.mxu0 0
        %1990 = vmatprep.subr.bf16.mxu0 0
        %1991 = vmatpush1.bf16.msra.mxu0 0
        %1992 = vmatprep.subr.bf16.mxu0 0
        %1993 = vmatpush1.bf16.msra.mxu0 0
        %1994 = vmatprep.subr.bf16.mxu0 0
        %1995 = vmatpush1.bf16.msra.mxu0 %v1077
        %1996 = vmatprep.subr.bf16.mxu0 0
        %1997 = vmatpush2.bf16.msra.mxu0 0
        %1998 = vmatprep.subr.bf16.mxu0 0
        %1999 = vmatpush2.bf16.msra.mxu0 0
        %2000 = vmatprep.subr.bf16.mxu0 0
        %2001 = vmatpush2.bf16.msra.mxu0 0
        %2002 = vmatprep.subr.bf16.mxu0 0
        %2003 = vmatpush2.bf16.msra.mxu0 0
        %2004 = vmatprep.subr.bf16.mxu0 0
        %2005 = vmatpush2.bf16.msra.mxu0 0
        %2006 = vmatprep.subr.bf16.mxu0 0
        %2007 = vmatpush2.bf16.msra.mxu0 0
        %2008 = vmatprep.subr.bf16.mxu0 0
        %2009 = vmatpush2.bf16.msra.mxu0 0
        %2010 = vmatprep.subr.bf16.mxu0 0
        %2011 = vmatpush2.bf16.msra.mxu0 0
        %2012 = vmatprep.mubr.bf16.mxu0 0
        %2013 = vmatmul.mubr.bf16.gmra.mxu0 %v1978
        %v2014 = vpop.f32.mrf.mxu0
        %v2015 = vadd.f32 0.0, %v2014
        %v2016 = vpop.f32.mrf.mxu0
        %v2017 = vpop.f32.mrf.mxu0
        %v2018 = vpop.f32.mrf.mxu0
        %2019 = vdwg.mxu0
        %v2021 = vsel %vm1482, %v1802, 0
        %2023 = vmatprep.subr.bf16.mxu0 0
        %2024 = vmatpush1.bf16.msra.mxu0 0
        %2025 = vmatprep.subr.bf16.mxu0 0
        %2026 = vmatpush1.bf16.msra.mxu0 0
        %2027 = vmatprep.subr.bf16.mxu0 0
        %2028 = vmatpush1.bf16.msra.mxu0 0
        %2029 = vmatprep.subr.bf16.mxu0 0
        %2030 = vmatpush1.bf16.msra.mxu0 0
        %2031 = vmatprep.subr.bf16.mxu0 0
        %2032 = vmatpush1.bf16.msra.mxu0 0
        %2033 = vmatprep.subr.bf16.mxu0 0
        %2034 = vmatpush1.bf16.msra.mxu0 0
        %2035 = vmatprep.subr.bf16.mxu0 0
        %2036 = vmatpush1.bf16.msra.mxu0 0
        %2037 = vmatprep.subr.bf16.mxu0 0
        %2038 = vmatpush1.bf16.msra.mxu0 %v1078
        %2039 = vmatprep.subr.bf16.mxu0 0
        %2040 = vmatpush2.bf16.msra.mxu0 0
        %2041 = vmatprep.subr.bf16.mxu0 0
        %2042 = vmatpush2.bf16.msra.mxu0 0
        %2043 = vmatprep.subr.bf16.mxu0 0
        %2044 = vmatpush2.bf16.msra.mxu0 0
        %2045 = vmatprep.subr.bf16.mxu0 0
        %2046 = vmatpush2.bf16.msra.mxu0 0
        %2047 = vmatprep.subr.bf16.mxu0 0
        %2048 = vmatpush2.bf16.msra.mxu0 0
        %2049 = vmatprep.subr.bf16.mxu0 0
        %2050 = vmatpush2.bf16.msra.mxu0 0
        %2051 = vmatprep.subr.bf16.mxu0 0
        %2052 = vmatpush2.bf16.msra.mxu0 0
        %2053 = vmatprep.subr.bf16.mxu0 0
        %2054 = vmatpush2.bf16.msra.mxu0 0
        %2055 = vmatprep.mubr.bf16.mxu0 0
        %2056 = vmatmul.mubr.bf16.gmra.mxu0 %v2021
        %v2057 = vpop.f32.mrf.mxu0
        %v2058 = vadd.f32 0.0, %v2057
        %v2059 = vpop.f32.mrf.mxu0
        %v2060 = vpop.f32.mrf.mxu0
        %v2061 = vpop.f32.mrf.mxu0
        %2062 = vdwg.mxu0
        %v2064 = vsel %vm1482, %v1803, 0
        %2066 = vmatprep.subr.bf16.mxu0 0
        %2067 = vmatpush1.bf16.msra.mxu0 0
        %2068 = vmatprep.subr.bf16.mxu0 0
        %2069 = vmatpush1.bf16.msra.mxu0 0
        %2070 = vmatprep.subr.bf16.mxu0 0
        %2071 = vmatpush1.bf16.msra.mxu0 0
        %2072 = vmatprep.subr.bf16.mxu0 0
        %2073 = vmatpush1.bf16.msra.mxu0 0
        %2074 = vmatprep.subr.bf16.mxu0 0
        %2075 = vmatpush1.bf16.msra.mxu0 0
        %2076 = vmatprep.subr.bf16.mxu0 0
        %2077 = vmatpush1.bf16.msra.mxu0 0
        %2078 = vmatprep.subr.bf16.mxu0 0
        %2079 = vmatpush1.bf16.msra.mxu0 0
        %2080 = vmatprep.subr.bf16.mxu0 0
        %2081 = vmatpush1.bf16.msra.mxu0 %v1079
        %2082 = vmatprep.subr.bf16.mxu0 0
        %2083 = vmatpush2.bf16.msra.mxu0 0
        %2084 = vmatprep.subr.bf16.mxu0 0
        %2085 = vmatpush2.bf16.msra.mxu0 0
        %2086 = vmatprep.subr.bf16.mxu0 0
        %2087 = vmatpush2.bf16.msra.mxu0 0
        %2088 = vmatprep.subr.bf16.mxu0 0
        %2089 = vmatpush2.bf16.msra.mxu0 0
        %2090 = vmatprep.subr.bf16.mxu0 0
        %2091 = vmatpush2.bf16.msra.mxu0 0
        %2092 = vmatprep.subr.bf16.mxu0 0
        %2093 = vmatpush2.bf16.msra.mxu0 0
        %2094 = vmatprep.subr.bf16.mxu0 0
        %2095 = vmatpush2.bf16.msra.mxu0 0
        %2096 = vmatprep.subr.bf16.mxu0 0
        %2097 = vmatpush2.bf16.msra.mxu0 0
        %2098 = vmatprep.mubr.bf16.mxu0 0
        %2099 = vmatmul.mubr.bf16.gmra.mxu0 %v2064
        %v2100 = vpop.f32.mrf.mxu0
        %v2101 = vadd.f32 0.0, %v2100
        %v2102 = vpop.f32.mrf.mxu0
        %v2103 = vpop.f32.mrf.mxu0
        %v2104 = vpop.f32.mrf.mxu0
        %2105 = vdwg.mxu0
        %v2107 = vsel %vm1482, %v1804, 0
        %2109 = vmatprep.subr.bf16.mxu0 0
        %2110 = vmatpush1.bf16.msra.mxu0 0
        %2111 = vmatprep.subr.bf16.mxu0 0
        %2112 = vmatpush1.bf16.msra.mxu0 0
        %2113 = vmatprep.subr.bf16.mxu0 0
        %2114 = vmatpush1.bf16.msra.mxu0 0
        %2115 = vmatprep.subr.bf16.mxu0 0
        %2116 = vmatpush1.bf16.msra.mxu0 0
        %2117 = vmatprep.subr.bf16.mxu0 0
        %2118 = vmatpush1.bf16.msra.mxu0 0
        %2119 = vmatprep.subr.bf16.mxu0 0
        %2120 = vmatpush1.bf16.msra.mxu0 0
        %2121 = vmatprep.subr.bf16.mxu0 0
        %2122 = vmatpush1.bf16.msra.mxu0 0
        %2123 = vmatprep.subr.bf16.mxu0 0
        %2124 = vmatpush1.bf16.msra.mxu0 %v1080
        %2125 = vmatprep.subr.bf16.mxu0 0
        %2126 = vmatpush2.bf16.msra.mxu0 0
        %2127 = vmatprep.subr.bf16.mxu0 0
        %2128 = vmatpush2.bf16.msra.mxu0 0
        %2129 = vmatprep.subr.bf16.mxu0 0
        %2130 = vmatpush2.bf16.msra.mxu0 0
        %2131 = vmatprep.subr.bf16.mxu0 0
        %2132 = vmatpush2.bf16.msra.mxu0 0
        %2133 = vmatprep.subr.bf16.mxu0 0
        %2134 = vmatpush2.bf16.msra.mxu0 0
        %2135 = vmatprep.subr.bf16.mxu0 0
        %2136 = vmatpush2.bf16.msra.mxu0 0
        %2137 = vmatprep.subr.bf16.mxu0 0
        %2138 = vmatpush2.bf16.msra.mxu0 0
        %2139 = vmatprep.subr.bf16.mxu0 0
        %2140 = vmatpush2.bf16.msra.mxu0 0
        %2141 = vmatprep.mubr.bf16.mxu0 0
        %2142 = vmatmul.mubr.bf16.gmra.mxu0 %v2107
        %v2143 = vpop.f32.mrf.mxu0
        %v2144 = vadd.f32 0.0, %v2143
        %v2145 = vpop.f32.mrf.mxu0
        %v2146 = vpop.f32.mrf.mxu0
        %v2147 = vpop.f32.mrf.mxu0
        %2148 = vdwg.mxu0
        %v2149 = vadd.f32 %v1789, %v1843
        %v2150 = vadd.f32 %v1790, %v1886
        %v2151 = vadd.f32 %v1791, %v1929
        %v2152 = vadd.f32 %v1792, %v1972
        %v2153 = vadd.f32 %v1793, %v2015
        %v2154 = vadd.f32 %v1794, %v2058
        %v2155 = vadd.f32 %v1795, %v2101
        %v2156 = vadd.f32 %v1796, %v2144
        %2157 = vst.msk [vmem:[#allocation4] sm:$0xff] %vm819, %v2149
        %2158 = vst.msk [vmem:[#allocation4 + $0x8] sm:$0xff] %vm819, %v2150
        %2159 = vst.msk [vmem:[#allocation4 + $0x10] sm:$0xff] %vm819, %v2151
        %2160 = vst.msk [vmem:[#allocation4 + $0x18] sm:$0xff] %vm819, %v2152
        %2161 = vst.msk [vmem:[#allocation4 + $0x20] sm:$0xff] %vm819, %v2153
        %2162 = vst.msk [vmem:[#allocation4 + $0x28] sm:$0xff] %vm819, %v2154
        %2163 = vst.msk [vmem:[#allocation4 + $0x30] sm:$0xff] %vm819, %v2155
        %2164 = vst.msk [vmem:[#allocation4 + $0x38] sm:$0xff] %vm819, %v2156
        %2165 = vst.msk [vmem:[#allocation2] sm:$0xff] %vm1723, %v1564
        %p2166 = scmp.eq.s32.totalorder %s36, 1
        // Predicated region
        $region146: #{attentive_classifier.1} parent=136 // pred_check
          %p2167 = pneg %p2166
        $region147: #{attentive_classifier.1} parent=136 // pred_check_branch
          %2169 = sbr.rel (%p2167) target = $region149
        $region148: #{attentive_classifier.1} parent=136 // pred_region
          %v2170 = vld [vmem:[#allocation3] sm:$0xff]
          %v2171 = vrcp.pop %v2170
          %v2172 = vld [vmem:[#allocation4] sm:$0xff]
          %v2173 = vld [vmem:[#allocation4 + $0x8] sm:$0xff]
          %v2174 = vld [vmem:[#allocation4 + $0x10] sm:$0xff]
          %v2175 = vld [vmem:[#allocation4 + $0x18] sm:$0xff]
          %v2176 = vld [vmem:[#allocation4 + $0x20] sm:$0xff]
          %v2177 = vld [vmem:[#allocation4 + $0x28] sm:$0xff]
          %v2178 = vld [vmem:[#allocation4 + $0x30] sm:$0xff]
          %v2179 = vld [vmem:[#allocation4 + $0x38] sm:$0xff]
          %v2180 = vlaneseq
          %v2181 = vshrl.u32 %v2180, 7
          %v2182 = vsub.s32 0, %v2181
          %v2183 = vrot.slane %v2171, %v2182
          %2185 = vbcast.lane.b32.xlu0 %v2183, 256
          %v2186 = vpop.permute.xlu0 %2185
          %v2187 = vlaneseq
          %v2188 = vshrl.u32 %v2187, 7
          %v2189 = vsub.s32 1, %v2188
          %v2190 = vrot.slane %v2171, %v2189
          %2192 = vbcast.lane.b32.xlu0 %v2190, 256
          %v2193 = vpop.permute.xlu0 %2192
          %v2194 = vlaneseq
          %v2195 = vshrl.u32 %v2194, 7
          %v2196 = vsub.s32 2, %v2195
          %v2197 = vrot.slane %v2171, %v2196
          %2199 = vbcast.lane.b32.xlu0 %v2197, 256
          %v2200 = vpop.permute.xlu0 %2199
          %v2201 = vlaneseq
          %v2202 = vshrl.u32 %v2201, 7
          %v2203 = vsub.s32 3, %v2202
          %v2204 = vrot.slane %v2171, %v2203
          %2206 = vbcast.lane.b32.xlu0 %v2204, 256
          %v2207 = vpop.permute.xlu0 %2206
          %v2208 = vlaneseq
          %v2209 = vshrl.u32 %v2208, 7
          %v2210 = vsub.s32 4, %v2209
          %v2211 = vrot.slane %v2171, %v2210
          %2213 = vbcast.lane.b32.xlu0 %v2211, 256
          %v2214 = vpop.permute.xlu0 %2213
          %v2215 = vlaneseq
          %v2216 = vshrl.u32 %v2215, 7
          %v2217 = vsub.s32 5, %v2216
          %v2218 = vrot.slane %v2171, %v2217
          %2220 = vbcast.lane.b32.xlu0 %v2218, 256
          %v2221 = vpop.permute.xlu0 %2220
          %v2222 = vlaneseq
          %v2223 = vshrl.u32 %v2222, 7
          %v2224 = vsub.s32 6, %v2223
          %v2225 = vrot.slane %v2171, %v2224
          %2227 = vbcast.lane.b32.xlu0 %v2225, 256
          %v2228 = vpop.permute.xlu0 %2227
          %v2229 = vlaneseq
          %v2230 = vshrl.u32 %v2229, 7
          %v2231 = vsub.s32 7, %v2230
          %v2232 = vrot.slane %v2171, %v2231
          %2234 = vbcast.lane.b32.xlu0 %v2232, 256
          %v2235 = vpop.permute.xlu0 %2234
          %v2236 = vmul.f32 %v2172, %v2186
          %v2237 = vmul.f32 %v2173, %v2193
          %v2238 = vmul.f32 %v2174, %v2200
          %v2239 = vmul.f32 %v2175, %v2207
          %v2240 = vmul.f32 %v2176, %v2214
          %v2241 = vmul.f32 %v2177, %v2221
          %v2242 = vmul.f32 %v2178, %v2228
          %v2243 = vmul.f32 %v2179, %v2235
          %v2244 = vpack.c.bf16 %v2236, %v2236
          %v2245 = vpack.c.bf16 %v2237, %v2237
          %v2246 = vpack.c.bf16 %v2238, %v2238
          %v2247 = vpack.c.bf16 %v2239, %v2239
          %v2248 = vpack.c.bf16 %v2240, %v2240
          %v2249 = vpack.c.bf16 %v2241, %v2241
          %v2250 = vpack.c.bf16 %v2242, %v2242
          %v2251 = vpack.c.bf16 %v2243, %v2243
          %v2252 = vld [vmem:[%s6] sm:$0xf]
          %v2253 = vld [vmem:[%s6 + $0x4] sm:$0xf]
          %v2254 = vld [vmem:[%s6 + $0x8] sm:$0xf]
          %v2255 = vld [vmem:[%s6 + $0xc] sm:$0xf]
          %v2264 = vunpack.c.l.b16 %v2244
          %v2265 = vunpack.c.l.b16 %v2245
          %v2266 = vunpack.c.l.b16 %v2246
          %v2267 = vunpack.c.l.b16 %v2247
          %v2268 = vunpack.c.l.b16 %v2248
          %v2269 = vunpack.c.l.b16 %v2249
          %v2270 = vunpack.c.l.b16 %v2250
          %v2271 = vunpack.c.l.b16 %v2251
          %v2272 = vrot.slane %v2265, 7
          %v2273 = vsel %vm1549, %v2272, %v2264
          %v2274 = vrot.slane %v2266, 6
          %v2275 = vsel %vm1551, %v2274, %v2273
          %v2276 = vrot.slane %v2267, 5
          %v2277 = vsel %vm1553, %v2276, %v2275
          %v2278 = vrot.slane %v2268, 4
          %v2279 = vsel %vm1555, %v2278, %v2277
          %v2280 = vrot.slane %v2269, 3
          %v2281 = vsel %vm1557, %v2280, %v2279
          %v2282 = vrot.slane %v2270, 2
          %v2283 = vsel %vm1559, %v2282, %v2281
          %v2284 = vrot.slane %v2271, 1
          %v2285 = vsel %vm1561, %v2284, %v2283
          %v2286 = vpack.c.b16 %v2285, %v2285
          %v2291 = vunpack.c.l.b16 %v2252
          %v2292 = vunpack.c.l.b16 %v2253
          %v2293 = vunpack.c.l.b16 %v2254
          %v2294 = vunpack.c.l.b16 %v2255
          %v2295 = vpack.c.b16 %v2292, %v2291
          %v2296 = vpack.c.b16 %v2294, %v2293
          %v2300 = vsel %vm819, %v2286, 0
          %2302 = vmatprep.subr.bf16.mxu0 0
          %2303 = vmatpush1.bf16.msra.mxu0 0
          %2304 = vmatprep.subr.bf16.mxu0 0
          %2305 = vmatpush1.bf16.msra.mxu0 0
          %2306 = vmatprep.subr.bf16.mxu0 0
          %2307 = vmatpush1.bf16.msra.mxu0 0
          %2308 = vmatprep.subr.bf16.mxu0 0
          %2309 = vmatpush1.bf16.msra.mxu0 0
          %2310 = vmatprep.subr.bf16.mxu0 0
          %2311 = vmatpush1.bf16.msra.mxu0 0
          %2312 = vmatprep.subr.bf16.mxu0 0
          %2313 = vmatpush1.bf16.msra.mxu0 0
          %2314 = vmatprep.subr.bf16.mxu0 0
          %2315 = vmatpush1.bf16.msra.mxu0 %v2296
          %2316 = vmatprep.subr.bf16.mxu0 0
          %2317 = vmatpush1.bf16.msra.mxu0 %v2295
          %2318 = vmatprep.subr.bf16.mxu0 0
          %2319 = vmatpush2.bf16.msra.mxu0 0
          %2320 = vmatprep.subr.bf16.mxu0 0
          %2321 = vmatpush2.bf16.msra.mxu0 0
          %2322 = vmatprep.subr.bf16.mxu0 0
          %2323 = vmatpush2.bf16.msra.mxu0 0
          %2324 = vmatprep.subr.bf16.mxu0 0
          %2325 = vmatpush2.bf16.msra.mxu0 0
          %2326 = vmatprep.subr.bf16.mxu0 0
          %2327 = vmatpush2.bf16.msra.mxu0 0
          %2328 = vmatprep.subr.bf16.mxu0 0
          %2329 = vmatpush2.bf16.msra.mxu0 0
          %2330 = vmatprep.subr.bf16.mxu0 0
          %2331 = vmatpush2.bf16.msra.mxu0 0
          %2332 = vmatprep.subr.bf16.mxu0 0
          %2333 = vmatpush2.bf16.msra.mxu0 0
          %2334 = vmatprep.mubr.bf16.mxu0 0
          %2335 = vmatmul.mubr.bf16.gmra.mxu0 %v2300
          %v2336 = vpop.f32.mrf.mxu0
          %v2337 = vadd.f32 0.0, %v2336
          %v2338 = vpop.f32.mrf.mxu0
          %v2339 = vpop.f32.mrf.mxu0
          %v2340 = vpop.f32.mrf.mxu0
          %2341 = vdwg.mxu0
          %s2342 = scalar_lea.vmem %s6, 16
          %v2343 = vld [vmem:[%s2342] sm:$0xf]
          %v2344 = vld [vmem:[%s2342 + $0x4] sm:$0xf]
          %v2345 = vld [vmem:[%s2342 + $0x8] sm:$0xf]
          %v2346 = vld [vmem:[%s2342 + $0xc] sm:$0xf]
          %v2347 = vrot.slane %v2264, 1
          %v2348 = vsel %vm1549, %v2265, %v2347
          %v2349 = vrot.slane %v2266, 7
          %v2350 = vsel %vm1551, %v2349, %v2348
          %v2351 = vrot.slane %v2267, 6
          %v2352 = vsel %vm1553, %v2351, %v2350
          %v2353 = vrot.slane %v2268, 5
          %v2354 = vsel %vm1555, %v2353, %v2352
          %v2355 = vrot.slane %v2269, 4
          %v2356 = vsel %vm1557, %v2355, %v2354
          %v2357 = vrot.slane %v2270, 3
          %v2358 = vsel %vm1559, %v2357, %v2356
          %v2359 = vrot.slane %v2271, 2
          %v2360 = vsel %vm1561, %v2359, %v2358
          %v2361 = vpack.c.b16 %v2360, %v2360
          %v2366 = vunpack.c.l.b16 %v2343
          %v2367 = vunpack.c.l.b16 %v2344
          %v2368 = vunpack.c.l.b16 %v2345
          %v2369 = vunpack.c.l.b16 %v2346
          %v2370 = vpack.c.b16 %v2367, %v2366
          %v2371 = vpack.c.b16 %v2369, %v2368
          %v2375 = vsel %vm819, %v2361, 0
          %2377 = vmatprep.subr.bf16.mxu0 0
          %2378 = vmatpush1.bf16.msra.mxu0 0
          %2379 = vmatprep.subr.bf16.mxu0 0
          %2380 = vmatpush1.bf16.msra.mxu0 0
          %2381 = vmatprep.subr.bf16.mxu0 0
          %2382 = vmatpush1.bf16.msra.mxu0 0
          %2383 = vmatprep.subr.bf16.mxu0 0
          %2384 = vmatpush1.bf16.msra.mxu0 0
          %2385 = vmatprep.subr.bf16.mxu0 0
          %2386 = vmatpush1.bf16.msra.mxu0 0
          %2387 = vmatprep.subr.bf16.mxu0 0
          %2388 = vmatpush1.bf16.msra.mxu0 0
          %2389 = vmatprep.subr.bf16.mxu0 0
          %2390 = vmatpush1.bf16.msra.mxu0 %v2371
          %2391 = vmatprep.subr.bf16.mxu0 0
          %2392 = vmatpush1.bf16.msra.mxu0 %v2370
          %2393 = vmatprep.subr.bf16.mxu0 0
          %2394 = vmatpush2.bf16.msra.mxu0 0
          %2395 = vmatprep.subr.bf16.mxu0 0
          %2396 = vmatpush2.bf16.msra.mxu0 0
          %2397 = vmatprep.subr.bf16.mxu0 0
          %2398 = vmatpush2.bf16.msra.mxu0 0
          %2399 = vmatprep.subr.bf16.mxu0 0
          %2400 = vmatpush2.bf16.msra.mxu0 0
          %2401 = vmatprep.subr.bf16.mxu0 0
          %2402 = vmatpush2.bf16.msra.mxu0 0
          %2403 = vmatprep.subr.bf16.mxu0 0
          %2404 = vmatpush2.bf16.msra.mxu0 0
          %2405 = vmatprep.subr.bf16.mxu0 0
          %2406 = vmatpush2.bf16.msra.mxu0 0
          %2407 = vmatprep.subr.bf16.mxu0 0
          %2408 = vmatpush2.bf16.msra.mxu0 0
          %2409 = vmatprep.mubr.bf16.mxu0 0
          %2410 = vmatmul.mubr.bf16.gmra.mxu0 %v2375
          %v2411 = vpop.f32.mrf.mxu0
          %v2412 = vadd.f32 0.0, %v2411
          %v2413 = vpop.f32.mrf.mxu0
          %v2414 = vpop.f32.mrf.mxu0
          %v2415 = vpop.f32.mrf.mxu0
          %2416 = vdwg.mxu0
          %s2417 = scalar_lea.vmem %s6, 32
          %v2418 = vld [vmem:[%s2417] sm:$0xf]
          %v2419 = vld [vmem:[%s2417 + $0x4] sm:$0xf]
          %v2420 = vld [vmem:[%s2417 + $0x8] sm:$0xf]
          %v2421 = vld [vmem:[%s2417 + $0xc] sm:$0xf]
          %v2422 = vrot.slane %v2264, 2
          %v2423 = vrot.slane %v2265, 1
          %v2424 = vsel %vm1549, %v2423, %v2422
          %v2425 = vsel %vm1551, %v2266, %v2424
          %v2426 = vrot.slane %v2267, 7
          %v2427 = vsel %vm1553, %v2426, %v2425
          %v2428 = vrot.slane %v2268, 6
          %v2429 = vsel %vm1555, %v2428, %v2427
          %v2430 = vrot.slane %v2269, 5
          %v2431 = vsel %vm1557, %v2430, %v2429
          %v2432 = vrot.slane %v2270, 4
          %v2433 = vsel %vm1559, %v2432, %v2431
          %v2434 = vrot.slane %v2271, 3
          %v2435 = vsel %vm1561, %v2434, %v2433
          %v2436 = vpack.c.b16 %v2435, %v2435
          %v2441 = vunpack.c.l.b16 %v2418
          %v2442 = vunpack.c.l.b16 %v2419
          %v2443 = vunpack.c.l.b16 %v2420
          %v2444 = vunpack.c.l.b16 %v2421
          %v2445 = vpack.c.b16 %v2442, %v2441
          %v2446 = vpack.c.b16 %v2444, %v2443
          %v2450 = vsel %vm819, %v2436, 0
          %2452 = vmatprep.subr.bf16.mxu0 0
          %2453 = vmatpush1.bf16.msra.mxu0 0
          %2454 = vmatprep.subr.bf16.mxu0 0
          %2455 = vmatpush1.bf16.msra.mxu0 0
          %2456 = vmatprep.subr.bf16.mxu0 0
          %2457 = vmatpush1.bf16.msra.mxu0 0
          %2458 = vmatprep.subr.bf16.mxu0 0
          %2459 = vmatpush1.bf16.msra.mxu0 0
          %2460 = vmatprep.subr.bf16.mxu0 0
          %2461 = vmatpush1.bf16.msra.mxu0 0
          %2462 = vmatprep.subr.bf16.mxu0 0
          %2463 = vmatpush1.bf16.msra.mxu0 0
          %2464 = vmatprep.subr.bf16.mxu0 0
          %2465 = vmatpush1.bf16.msra.mxu0 %v2446
          %2466 = vmatprep.subr.bf16.mxu0 0
          %2467 = vmatpush1.bf16.msra.mxu0 %v2445
          %2468 = vmatprep.subr.bf16.mxu0 0
          %2469 = vmatpush2.bf16.msra.mxu0 0
          %2470 = vmatprep.subr.bf16.mxu0 0
          %2471 = vmatpush2.bf16.msra.mxu0 0
          %2472 = vmatprep.subr.bf16.mxu0 0
          %2473 = vmatpush2.bf16.msra.mxu0 0
          %2474 = vmatprep.subr.bf16.mxu0 0
          %2475 = vmatpush2.bf16.msra.mxu0 0
          %2476 = vmatprep.subr.bf16.mxu0 0
          %2477 = vmatpush2.bf16.msra.mxu0 0
          %2478 = vmatprep.subr.bf16.mxu0 0
          %2479 = vmatpush2.bf16.msra.mxu0 0
          %2480 = vmatprep.subr.bf16.mxu0 0
          %2481 = vmatpush2.bf16.msra.mxu0 0
          %2482 = vmatprep.subr.bf16.mxu0 0
          %2483 = vmatpush2.bf16.msra.mxu0 0
          %2484 = vmatprep.mubr.bf16.mxu0 0
          %2485 = vmatmul.mubr.bf16.gmra.mxu0 %v2450
          %v2486 = vpop.f32.mrf.mxu0
          %v2487 = vadd.f32 0.0, %v2486
          %v2488 = vpop.f32.mrf.mxu0
          %v2489 = vpop.f32.mrf.mxu0
          %v2490 = vpop.f32.mrf.mxu0
          %2491 = vdwg.mxu0
          %s2492 = scalar_lea.vmem %s6, 48
          %v2493 = vld [vmem:[%s2492] sm:$0xf]
          %v2494 = vld [vmem:[%s2492 + $0x4] sm:$0xf]
          %v2495 = vld [vmem:[%s2492 + $0x8] sm:$0xf]
          %v2496 = vld [vmem:[%s2492 + $0xc] sm:$0xf]
          %v2497 = vrot.slane %v2264, 3
          %v2498 = vrot.slane %v2265, 2
          %v2499 = vsel %vm1549, %v2498, %v2497
          %v2500 = vrot.slane %v2266, 1
          %v2501 = vsel %vm1551, %v2500, %v2499
          %v2502 = vsel %vm1553, %v2267, %v2501
          %v2503 = vrot.slane %v2268, 7
          %v2504 = vsel %vm1555, %v2503, %v2502
          %v2505 = vrot.slane %v2269, 6
          %v2506 = vsel %vm1557, %v2505, %v2504
          %v2507 = vrot.slane %v2270, 5
          %v2508 = vsel %vm1559, %v2507, %v2506
          %v2509 = vrot.slane %v2271, 4
          %v2510 = vsel %vm1561, %v2509, %v2508
          %v2511 = vpack.c.b16 %v2510, %v2510
          %v2516 = vunpack.c.l.b16 %v2493
          %v2517 = vunpack.c.l.b16 %v2494
          %v2518 = vunpack.c.l.b16 %v2495
          %v2519 = vunpack.c.l.b16 %v2496
          %v2520 = vpack.c.b16 %v2517, %v2516
          %v2521 = vpack.c.b16 %v2519, %v2518
          %v2525 = vsel %vm819, %v2511, 0
          %2527 = vmatprep.subr.bf16.mxu0 0
          %2528 = vmatpush1.bf16.msra.mxu0 0
          %2529 = vmatprep.subr.bf16.mxu0 0
          %2530 = vmatpush1.bf16.msra.mxu0 0
          %2531 = vmatprep.subr.bf16.mxu0 0
          %2532 = vmatpush1.bf16.msra.mxu0 0
          %2533 = vmatprep.subr.bf16.mxu0 0
          %2534 = vmatpush1.bf16.msra.mxu0 0
          %2535 = vmatprep.subr.bf16.mxu0 0
          %2536 = vmatpush1.bf16.msra.mxu0 0
          %2537 = vmatprep.subr.bf16.mxu0 0
          %2538 = vmatpush1.bf16.msra.mxu0 0
          %2539 = vmatprep.subr.bf16.mxu0 0
          %2540 = vmatpush1.bf16.msra.mxu0 %v2521
          %2541 = vmatprep.subr.bf16.mxu0 0
          %2542 = vmatpush1.bf16.msra.mxu0 %v2520
          %2543 = vmatprep.subr.bf16.mxu0 0
          %2544 = vmatpush2.bf16.msra.mxu0 0
          %2545 = vmatprep.subr.bf16.mxu0 0
          %2546 = vmatpush2.bf16.msra.mxu0 0
          %2547 = vmatprep.subr.bf16.mxu0 0
          %2548 = vmatpush2.bf16.msra.mxu0 0
          %2549 = vmatprep.subr.bf16.mxu0 0
          %2550 = vmatpush2.bf16.msra.mxu0 0
          %2551 = vmatprep.subr.bf16.mxu0 0
          %2552 = vmatpush2.bf16.msra.mxu0 0
          %2553 = vmatprep.subr.bf16.mxu0 0
          %2554 = vmatpush2.bf16.msra.mxu0 0
          %2555 = vmatprep.subr.bf16.mxu0 0
          %2556 = vmatpush2.bf16.msra.mxu0 0
          %2557 = vmatprep.subr.bf16.mxu0 0
          %2558 = vmatpush2.bf16.msra.mxu0 0
          %2559 = vmatprep.mubr.bf16.mxu0 0
          %2560 = vmatmul.mubr.bf16.gmra.mxu0 %v2525
          %v2561 = vpop.f32.mrf.mxu0
          %v2562 = vadd.f32 0.0, %v2561
          %v2563 = vpop.f32.mrf.mxu0
          %v2564 = vpop.f32.mrf.mxu0
          %v2565 = vpop.f32.mrf.mxu0
          %2566 = vdwg.mxu0
          %2568 = vrot.lane.b32.xlu0 %v2412, 8
          %v2569 = vpop.permute.xlu0 %2568
          %2572 = vrot.lane.b32.xlu0 %v2487, 16
          %v2573 = vpop.permute.xlu0 %2572
          %2576 = vrot.lane.b32.xlu0 %v2562, 24
          %v2577 = vpop.permute.xlu0 %2576
          %v2579 = vsel %vm1723, %v2337, %v2569
          %v2580 = vsel %vm1482, %v2579, %v2573
          %vm2581 = vcmask 195584
          %v2582 = vsel %vm2581, %v2580, %v2577
          %v2583 = vld [vmem:[%s7] sm:$0x1]
          %v2585 = vlaneseq
          %v2586 = vshrl.u32 %v2585, 7
          %v2587 = vsub.s32 0, %v2586
          %v2588 = vrot.slane %v2583, %v2587
          %v2590 = vadd.f32 %v2582, %v2588
          %v2591 = vpack.c.bf16 %v2590, %v2590
          %v2592 = vld [vmem:[%s8] sm:$0xf]
          %v2593 = vld [vmem:[%s8 + $0x4] sm:$0xf]
          %v2594 = vld [vmem:[%s8 + $0x8] sm:$0xf]
          %v2595 = vld [vmem:[%s8 + $0xc] sm:$0xf]
          %v2596 = vld [vmem:[%s9] sm:$0x1]
          %v2598 = vlaneseq
          %v2599 = vshrl.u32 %v2598, 7
          %v2600 = vsub.s32 0, %v2599
          %v2601 = vrot.slane %v2596, %v2600
          %v2607 = vunpack.c.l.b16 %v2592
          %v2608 = vunpack.c.l.b16 %v2593
          %v2609 = vunpack.c.l.b16 %v2594
          %v2610 = vunpack.c.l.b16 %v2595
          %v2611 = vpack.c.b16 %v2608, %v2607
          %v2612 = vpack.c.b16 %v2610, %v2609
          %v2616 = vsel %vm819, %v2591, 0
          %2618 = vmatprep.subr.bf16.mxu0 0
          %2619 = vmatpush1.bf16.msra.mxu0 0
          %2620 = vmatprep.subr.bf16.mxu0 0
          %2621 = vmatpush1.bf16.msra.mxu0 0
          %2622 = vmatprep.subr.bf16.mxu0 0
          %2623 = vmatpush1.bf16.msra.mxu0 0
          %2624 = vmatprep.subr.bf16.mxu0 0
          %2625 = vmatpush1.bf16.msra.mxu0 0
          %2626 = vmatprep.subr.bf16.mxu0 0
          %2627 = vmatpush1.bf16.msra.mxu0 0
          %2628 = vmatprep.subr.bf16.mxu0 0
          %2629 = vmatpush1.bf16.msra.mxu0 0
          %2630 = vmatprep.subr.bf16.mxu0 0
          %2631 = vmatpush1.bf16.msra.mxu0 %v2612
          %2632 = vmatprep.subr.bf16.mxu0 0
          %2633 = vmatpush1.bf16.msra.mxu0 %v2611
          %2634 = vmatprep.subr.bf16.mxu0 0
          %2635 = vmatpush2.bf16.msra.mxu0 0
          %2636 = vmatprep.subr.bf16.mxu0 0
          %2637 = vmatpush2.bf16.msra.mxu0 0
          %2638 = vmatprep.subr.bf16.mxu0 0
          %2639 = vmatpush2.bf16.msra.mxu0 0
          %2640 = vmatprep.subr.bf16.mxu0 0
          %2641 = vmatpush2.bf16.msra.mxu0 0
          %2642 = vmatprep.subr.bf16.mxu0 0
          %2643 = vmatpush2.bf16.msra.mxu0 0
          %2644 = vmatprep.subr.bf16.mxu0 0
          %2645 = vmatpush2.bf16.msra.mxu0 0
          %2646 = vmatprep.subr.bf16.mxu0 0
          %2647 = vmatpush2.bf16.msra.mxu0 0
          %2648 = vmatprep.subr.bf16.mxu0 0
          %2649 = vmatpush2.bf16.msra.mxu0 0
          %2650 = vmatprep.mubr.bf16.mxu0 0
          %2651 = vmatmul.mubr.bf16.gmra.mxu0 %v2616
          %v2652 = vpop.f32.mrf.mxu0
          %v2653 = vadd.f32 %v2601, %v2652
          %v2654 = vpop.f32.mrf.mxu0
          %v2655 = vpop.f32.mrf.mxu0
          %v2656 = vpop.f32.mrf.mxu0
          %2657 = vdwg.mxu0
          %v2658 = vld [vmem:[%s10] sm:$0x1]
          %v2660 = vlaneseq
          %v2661 = vshrl.u32 %v2660, 7
          %v2662 = vsub.s32 0, %v2661
          %v2663 = vrot.slane %v2658, %v2662
          %v2665 = vadd.f32 %v2663, %v2653
          %v2666 = vld [vmem:[%s11] sm:$0x1]
          %v2667 = vld [vmem:[%s12] sm:$0x1]
          %v2668 = vsel %vm819, %v2665, 0.0
          %2669 = vadd.xlane.f32.xlu0 %v2668
          %v2670 = vpop.xlane.xlu0 %2669
          %v2671 = vmul.f32 %v2670, %v868
          %v2672 = vsub.f32 %v2665, %v2671
          %v2673 = vmul.f32 %v2672, %v2672
          %v2674 = vsel %vm819, %v2673, 0.0
          %2675 = vadd.xlane.f32.xlu0 %v2674
          %v2676 = vpop.xlane.xlu0 %2675
          %v2677 = vmul.f32 %v2676, %v868
          %v2678 = vadd.f32 %v2677, 1e-05
          %v2679 = vrsqrt.pop %v2678
          %v2680 = vmul.f32 %v2672, %v2679
          %v2682 = vlaneseq
          %v2683 = vshrl.u32 %v2682, 7
          %v2684 = vsub.s32 0, %v2683
          %v2685 = vrot.slane %v2666, %v2684
          %v2687 = vmul.f32 %v2680, %v2685
          %v2689 = vlaneseq
          %v2690 = vshrl.u32 %v2689, 7
          %v2691 = vsub.s32 0, %v2690
          %v2692 = vrot.slane %v2667, %v2691
          %v2694 = vadd.f32 %v2687, %v2692
          %v2695 = vpack.c.bf16 %v2694, %v2694
          %v2696 = vld [vmem:[%s13] sm:$0xf]
          %v2697 = vld [vmem:[%s13 + $0x4] sm:$0xf]
          %v2698 = vld [vmem:[%s13 + $0x8] sm:$0xf]
          %v2699 = vld [vmem:[%s13 + $0xc] sm:$0xf]
          %v2700 = vld [vmem:[%s14] sm:$0x1]
          %v2702 = vlaneseq
          %v2703 = vshrl.u32 %v2702, 7
          %v2704 = vsub.s32 0, %v2703
          %v2705 = vrot.slane %v2700, %v2704
          %v2711 = vunpack.c.l.b16 %v2696
          %v2712 = vunpack.c.l.b16 %v2697
          %v2713 = vunpack.c.l.b16 %v2698
          %v2714 = vunpack.c.l.b16 %v2699
          %v2715 = vpack.c.b16 %v2712, %v2711
          %v2716 = vpack.c.b16 %v2714, %v2713
          %v2720 = vsel %vm819, %v2695, 0
          %2722 = vmatprep.subr.bf16.mxu0 0
          %2723 = vmatpush1.bf16.msra.mxu0 0
          %2724 = vmatprep.subr.bf16.mxu0 0
          %2725 = vmatpush1.bf16.msra.mxu0 0
          %2726 = vmatprep.subr.bf16.mxu0 0
          %2727 = vmatpush1.bf16.msra.mxu0 0
          %2728 = vmatprep.subr.bf16.mxu0 0
          %2729 = vmatpush1.bf16.msra.mxu0 0
          %2730 = vmatprep.subr.bf16.mxu0 0
          %2731 = vmatpush1.bf16.msra.mxu0 0
          %2732 = vmatprep.subr.bf16.mxu0 0
          %2733 = vmatpush1.bf16.msra.mxu0 0
          %2734 = vmatprep.subr.bf16.mxu0 0
          %2735 = vmatpush1.bf16.msra.mxu0 %v2716
          %2736 = vmatprep.subr.bf16.mxu0 0
          %2737 = vmatpush1.bf16.msra.mxu0 %v2715
          %2738 = vmatprep.subr.bf16.mxu0 0
          %2739 = vmatpush2.bf16.msra.mxu0 0
          %2740 = vmatprep.subr.bf16.mxu0 0
          %2741 = vmatpush2.bf16.msra.mxu0 0
          %2742 = vmatprep.subr.bf16.mxu0 0
          %2743 = vmatpush2.bf16.msra.mxu0 0
          %2744 = vmatprep.subr.bf16.mxu0 0
          %2745 = vmatpush2.bf16.msra.mxu0 0
          %2746 = vmatprep.subr.bf16.mxu0 0
          %2747 = vmatpush2.bf16.msra.mxu0 0
          %2748 = vmatprep.subr.bf16.mxu0 0
          %2749 = vmatpush2.bf16.msra.mxu0 0
          %2750 = vmatprep.subr.bf16.mxu0 0
          %2751 = vmatpush2.bf16.msra.mxu0 0
          %2752 = vmatprep.subr.bf16.mxu0 0
          %2753 = vmatpush2.bf16.msra.mxu0 0
          %2754 = vmatprep.mubr.bf16.mxu0 0
          %2755 = vmatmul.mubr.bf16.gmra.mxu0 %v2720
          %v2756 = vpop.f32.mrf.mxu0
          %v2757 = vadd.f32 %v2705, %v2756
          %v2758 = vpop.f32.mrf.mxu0
          %v2759 = vpop.f32.mrf.mxu0
          %v2760 = vpop.f32.mrf.mxu0
          %2761 = vdwg.mxu0
          %v2762 = vmul.f32 %v2757, 0.5
          %v2763 = vmul.f32 %v2757, 0.70710677
          %vm2764 = vcmp.ge.f32.partialorder %v2763, 0.0
          %v2765 = vsel %vm2764, 1.0, -1.0
          %v2766 = vand.u32 2147483647, %v2763
          %v2767 = vmul.f32 %v2766, 0.3275911
          %v2768 = vadd.f32 %v2767, 1.0
          %v2769 = vrcp.pop %v2768
          %v2770 = vmul.f32 1.0, %v2769
          %v2771 = vmul.f32 %v2770, 1.0614054
          %v2772 = vadd.f32 %v2771, -1.4531521
          %v2773 = vmul.f32 %v2772, %v2770
          %v2774 = vadd.f32 %v2773, 1.4214138
          %v2775 = vmul.f32 %v2774, %v2770
          %v2776 = vadd.f32 %v2775, -0.28449672
          %v2777 = vmul.f32 %v2776, %v2770
          %v2778 = vadd.f32 %v2777, 0.2548296
          %v2779 = vmul.f32 %v2778, %v2770
          %v2780 = vsub.f32 0.0, %v2766
          %v2781 = vmul.f32 %v2780, %v2766
          %v2782 = vmul.f32 %v2781, 1.442695
          %v2783 = vpow.pop %v2782
          %v2784 = vmul.f32 %v2779, %v2783
          %v2785 = vsub.f32 1.0, %v2784
          %v2786 = vmul.f32 %v2765, %v2785
          %v2787 = vadd.f32 %v2786, 1.0
          %v2788 = vmul.f32 %v2762, %v2787
          %v2789 = vpack.c.bf16 %v2788, %v2788
          %v2790 = vld [vmem:[%s15] sm:$0xf]
          %v2791 = vld [vmem:[%s15 + $0x4] sm:$0xf]
          %v2792 = vld [vmem:[%s15 + $0x8] sm:$0xf]
          %v2793 = vld [vmem:[%s15 + $0xc] sm:$0xf]
          %v2794 = vld [vmem:[%s15 + $0x10] sm:$0xf]
          %v2795 = vld [vmem:[%s15 + $0x14] sm:$0xf]
          %v2796 = vld [vmem:[%s15 + $0x18] sm:$0xf]
          %v2797 = vld [vmem:[%s15 + $0x1c] sm:$0xf]
          %v2798 = vld [vmem:[%s15 + $0x20] sm:$0xf]
          %v2799 = vld [vmem:[%s15 + $0x24] sm:$0xf]
          %v2800 = vld [vmem:[%s15 + $0x28] sm:$0xf]
          %v2801 = vld [vmem:[%s15 + $0x2c] sm:$0xf]
          %v2802 = vld [vmem:[%s15 + $0x30] sm:$0xf]
          %v2803 = vld [vmem:[%s15 + $0x34] sm:$0xf]
          %v2804 = vld [vmem:[%s15 + $0x38] sm:$0xf]
          %v2805 = vld [vmem:[%s15 + $0x3c] sm:$0xf]
          %v2806 = vld [vmem:[%s16] sm:$0x1]
          %v2808 = vlaneseq
          %v2809 = vshrl.u32 %v2808, 7
          %v2810 = vsub.s32 0, %v2809
          %v2811 = vrot.slane %v2806, %v2810
          %v2829 = vunpack.c.l.b16 %v2790
          %v2830 = vunpack.c.l.b16 %v2791
          %v2831 = vunpack.c.l.b16 %v2792
          %v2832 = vunpack.c.l.b16 %v2793
          %v2833 = vunpack.c.l.b16 %v2794
          %v2834 = vunpack.c.l.b16 %v2795
          %v2835 = vunpack.c.l.b16 %v2796
          %v2836 = vunpack.c.l.b16 %v2797
          %v2837 = vunpack.c.l.b16 %v2798
          %v2838 = vunpack.c.l.b16 %v2799
          %v2839 = vunpack.c.l.b16 %v2800
          %v2840 = vunpack.c.l.b16 %v2801
          %v2841 = vunpack.c.l.b16 %v2802
          %v2842 = vunpack.c.l.b16 %v2803
          %v2843 = vunpack.c.l.b16 %v2804
          %v2844 = vunpack.c.l.b16 %v2805
          %v2845 = vpack.c.b16 %v2830, %v2829
          %v2846 = vpack.c.b16 %v2832, %v2831
          %v2847 = vpack.c.b16 %v2834, %v2833
          %v2848 = vpack.c.b16 %v2836, %v2835
          %v2849 = vpack.c.b16 %v2838, %v2837
          %v2850 = vpack.c.b16 %v2840, %v2839
          %v2851 = vpack.c.b16 %v2842, %v2841
          %v2852 = vpack.c.b16 %v2844, %v2843
          %2861 = vmatprep.subr.bf16.mxu0 0
          %2862 = vmatpush1.bf16.msra.mxu0 %v2852
          %2863 = vmatprep.subr.bf16.mxu0 0
          %2864 = vmatpush1.bf16.msra.mxu0 %v2851
          %2865 = vmatprep.subr.bf16.mxu0 0
          %2866 = vmatpush1.bf16.msra.mxu0 %v2850
          %2867 = vmatprep.subr.bf16.mxu0 0
          %2868 = vmatpush1.bf16.msra.mxu0 %v2849
          %2869 = vmatprep.subr.bf16.mxu0 0
          %2870 = vmatpush1.bf16.msra.mxu0 %v2848
          %2871 = vmatprep.subr.bf16.mxu0 0
          %2872 = vmatpush1.bf16.msra.mxu0 %v2847
          %2873 = vmatprep.subr.bf16.mxu0 0
          %2874 = vmatpush1.bf16.msra.mxu0 %v2846
          %2875 = vmatprep.subr.bf16.mxu0 0
          %2876 = vmatpush1.bf16.msra.mxu0 %v2845
          %2877 = vmatprep.subr.bf16.mxu0 0
          %2878 = vmatpush2.bf16.msra.mxu0 0
          %2879 = vmatprep.subr.bf16.mxu0 0
          %2880 = vmatpush2.bf16.msra.mxu0 0
          %2881 = vmatprep.subr.bf16.mxu0 0
          %2882 = vmatpush2.bf16.msra.mxu0 0
          %2883 = vmatprep.subr.bf16.mxu0 0
          %2884 = vmatpush2.bf16.msra.mxu0 0
          %2885 = vmatprep.subr.bf16.mxu0 0
          %2886 = vmatpush2.bf16.msra.mxu0 0
          %2887 = vmatprep.subr.bf16.mxu0 0
          %2888 = vmatpush2.bf16.msra.mxu0 0
          %2889 = vmatprep.subr.bf16.mxu0 0
          %2890 = vmatpush2.bf16.msra.mxu0 0
          %2891 = vmatprep.subr.bf16.mxu0 0
          %2892 = vmatpush2.bf16.msra.mxu0 0
          %2893 = vmatprep.mubr.bf16.mxu0 0
          %2894 = vmatmul.mubr.bf16.gmra.mxu0 %v2789
          %v2895 = vpop.f32.mrf.mxu0
          %v2896 = vadd.f32 %v2811, %v2895
          %v2897 = vpop.f32.mrf.mxu0
          %v2898 = vpop.f32.mrf.mxu0
          %v2899 = vpop.f32.mrf.mxu0
          %2900 = vdwg.mxu0
          %v2901 = vadd.f32 %v2665, %v2896
          %v2902 = vpack.c.bf16 %v2901, %v2901
          %v2903 = vld [vmem:[%s17] sm:$0xf]
          %v2904 = vld [vmem:[%s17 + $0x4] sm:$0xf]
          %v2905 = vld [vmem:[%s17 + $0x8] sm:$0xf]
          %v2906 = vld [vmem:[%s17 + $0xc] sm:$0xf]
          %v2907 = vld [vmem:[%s763] sm:$0xff]
          %v2908 = vpack.c.bf16 %v2907, %v2907
          %v2909 = vld [vmem:[%s18] sm:$0xf]
          %v2910 = vld [vmem:[%s18 + $0x4] sm:$0xf]
          %v2911 = vld [vmem:[%s18 + $0x8] sm:$0xf]
          %v2912 = vld [vmem:[%s18 + $0xc] sm:$0xf]
          %v2917 = vunpack.c.l.b16 %v2909
          %v2918 = vunpack.c.l.b16 %v2910
          %v2919 = vunpack.c.l.b16 %v2911
          %v2920 = vunpack.c.l.b16 %v2912
          %v2921 = vpack.c.b16 %v2918, %v2917
          %v2922 = vpack.c.b16 %v2920, %v2919
          %v2926 = vsel %vm819, %v2908, 0
          %2928 = vmatprep.subr.bf16.mxu0 0
          %2929 = vmatpush1.bf16.msra.mxu0 0
          %2930 = vmatprep.subr.bf16.mxu0 0
          %2931 = vmatpush1.bf16.msra.mxu0 0
          %2932 = vmatprep.subr.bf16.mxu0 0
          %2933 = vmatpush1.bf16.msra.mxu0 0
          %2934 = vmatprep.subr.bf16.mxu0 0
          %2935 = vmatpush1.bf16.msra.mxu0 0
          %2936 = vmatprep.subr.bf16.mxu0 0
          %2937 = vmatpush1.bf16.msra.mxu0 0
          %2938 = vmatprep.subr.bf16.mxu0 0
          %2939 = vmatpush1.bf16.msra.mxu0 0
          %2940 = vmatprep.subr.bf16.mxu0 0
          %2941 = vmatpush1.bf16.msra.mxu0 %v2922
          %2942 = vmatprep.subr.bf16.mxu0 0
          %2943 = vmatpush1.bf16.msra.mxu0 %v2921
          %2944 = vmatprep.subr.bf16.mxu0 0
          %2945 = vmatpush2.bf16.msra.mxu0 0
          %2946 = vmatprep.subr.bf16.mxu0 0
          %2947 = vmatpush2.bf16.msra.mxu0 0
          %2948 = vmatprep.subr.bf16.mxu0 0
          %2949 = vmatpush2.bf16.msra.mxu0 0
          %2950 = vmatprep.subr.bf16.mxu0 0
          %2951 = vmatpush2.bf16.msra.mxu0 0
          %2952 = vmatprep.subr.bf16.mxu0 0
          %2953 = vmatpush2.bf16.msra.mxu0 0
          %2954 = vmatprep.subr.bf16.mxu0 0
          %2955 = vmatpush2.bf16.msra.mxu0 0
          %2956 = vmatprep.subr.bf16.mxu0 0
          %2957 = vmatpush2.bf16.msra.mxu0 0
          %2958 = vmatprep.subr.bf16.mxu0 0
          %2959 = vmatpush2.bf16.msra.mxu0 0
          %2960 = vmatprep.mubr.bf16.mxu0 0
          %2961 = vmatmul.mubr.bf16.gmra.mxu0 %v2926
          %v2962 = vpop.f32.mrf.mxu0
          %v2963 = vadd.f32 0.0, %v2962
          %v2964 = vpop.f32.mrf.mxu0
          %v2965 = vpop.f32.mrf.mxu0
          %v2966 = vpop.f32.mrf.mxu0
          %2967 = vdwg.mxu0
          %v2972 = vunpack.c.l.b16 %v2903
          %v2973 = vunpack.c.l.b16 %v2904
          %v2974 = vunpack.c.l.b16 %v2905
          %v2975 = vunpack.c.l.b16 %v2906
          %v2976 = vpack.c.b16 %v2973, %v2972
          %v2977 = vpack.c.b16 %v2975, %v2974
          %v2981 = vsel %vm819, %v2902, 0
          %2983 = vmatprep.subr.bf16.mxu0 0
          %2984 = vmatpush1.bf16.msra.mxu0 0
          %2985 = vmatprep.subr.bf16.mxu0 0
          %2986 = vmatpush1.bf16.msra.mxu0 0
          %2987 = vmatprep.subr.bf16.mxu0 0
          %2988 = vmatpush1.bf16.msra.mxu0 0
          %2989 = vmatprep.subr.bf16.mxu0 0
          %2990 = vmatpush1.bf16.msra.mxu0 0
          %2991 = vmatprep.subr.bf16.mxu0 0
          %2992 = vmatpush1.bf16.msra.mxu0 0
          %2993 = vmatprep.subr.bf16.mxu0 0
          %2994 = vmatpush1.bf16.msra.mxu0 0
          %2995 = vmatprep.subr.bf16.mxu0 0
          %2996 = vmatpush1.bf16.msra.mxu0 %v2977
          %2997 = vmatprep.subr.bf16.mxu0 0
          %2998 = vmatpush1.bf16.msra.mxu0 %v2976
          %2999 = vmatprep.subr.bf16.mxu0 0
          %3000 = vmatpush2.bf16.msra.mxu0 0
          %3001 = vmatprep.subr.bf16.mxu0 0
          %3002 = vmatpush2.bf16.msra.mxu0 0
          %3003 = vmatprep.subr.bf16.mxu0 0
          %3004 = vmatpush2.bf16.msra.mxu0 0
          %3005 = vmatprep.subr.bf16.mxu0 0
          %3006 = vmatpush2.bf16.msra.mxu0 0
          %3007 = vmatprep.subr.bf16.mxu0 0
          %3008 = vmatpush2.bf16.msra.mxu0 0
          %3009 = vmatprep.subr.bf16.mxu0 0
          %3010 = vmatpush2.bf16.msra.mxu0 0
          %3011 = vmatprep.subr.bf16.mxu0 0
          %3012 = vmatpush2.bf16.msra.mxu0 0
          %3013 = vmatprep.subr.bf16.mxu0 0
          %3014 = vmatpush2.bf16.msra.mxu0 0
          %3015 = vmatprep.mubr.bf16.mxu0 0
          %3016 = vmatmul.mubr.bf16.gmra.mxu0 %v2981
          %v3017 = vpop.f32.mrf.mxu0
          %v3018 = vadd.f32 %v2963, %v3017
          %v3019 = vpop.f32.mrf.mxu0
          %v3020 = vpop.f32.mrf.mxu0
          %v3021 = vpop.f32.mrf.mxu0
          %3022 = vdwg.mxu0
          %v3023 = vld [vmem:[%s19] sm:$0x1]
          %v3025 = vlaneseq
          %v3026 = vshrl.u32 %v3025, 7
          %v3027 = vsub.s32 0, %v3026
          %v3028 = vrot.slane %v3023, %v3027
          %v3030 = vadd.f32 %v3018, %v3028
          %3031 = vst [vmem:[%s767] sm:$0xff] %v3030
        $region149: #{attentive_classifier.1} parent=136 // pred_fallthru
          _
        %p3032 = scmp.lt.s32.totalorder %s35, 1
        %s3033 = scalar_select %p3032, %s35, 1
        %s3034 = smul.addr %s3033, 8
        %s3035 = scalar_lea.vmem %s20, %s3034
        // Predicated region
        $region150: #{attentive_classifier.1} parent=136 // pred_check
          %p3036 = pneg %p493
        $region151: #{attentive_classifier.1} parent=136 // pred_check_branch
          %3038 = sbr.rel (%p3036) target = $region153
        $region152: #{attentive_classifier.1} parent=136 // pred_region
          _
        $region153: #{attentive_classifier.1} parent=136 // pred_fallthru
          _
      $region137: #{attentive_classifier.1} parent=5 // pred_fallthru
        _
      %p3039 = scmp.le.s32.totalorder 2, %s26
      // Predicated region
      $region154: #{attentive_classifier.1} parent=5 // pred_check
        %p3040 = pneg %p3039
      $region155: #{attentive_classifier.1} parent=5 // pred_check_branch
        %3042 = sbr.rel (%p3040) target = $region157
      $region156: #{attentive_classifier.1} parent=5 // pred_region
        %s3043 = ssub.s32 %s26, 2
        // Predicated region
        $region158: #{attentive_classifier.1} parent=156 // pred_check
          %p3044 = pneg %p499
        $region159: #{attentive_classifier.1} parent=156 // pred_check_branch
          %3046 = sbr.rel (%p3044) target = $region161
        $region160: #{attentive_classifier.1} parent=156 // pred_region
          %p3047 = scmp.lt.s32.totalorder %s37, 1
          %s3048 = scalar_select %p3047, %s37, 1
          %s3049 = smul.addr %s3048, 8
          %s3050 = scalar_lea.vmem %s20, %s3049
        $region161: #{attentive_classifier.1} parent=156 // pred_fallthru
          _
      $region157: #{attentive_classifier.1} parent=5 // pred_fallthru
        _
    $region6: #{attentive_classifier.1} parent=1 // loop_footer
      %s30 = sadd.s32 1, %s26
    $region7: #{attentive_classifier.1} parent=1 // loop_footer_branch
      %25 = sbr.rel target = $region3
    $region8: #{attentive_classifier.1} parent=1 // loop_exit
      _

</llo_original>
